<compile_context>
chip_gen: v6e
topology: v6e:2x2x1
jax: 0.10.0
libtpu: 0.0.40
codegen_flags: <defaults>
</compile_context>

<pallas_src>
import functools

import jax
import jax.numpy as jnp
from jax import lax
from jax.experimental import pallas as pl
from jax.experimental.pallas import tpu as pltpu

EPS = 1e-5
LANE = 128
VMEM_LIMIT = 64 * 1024 * 1024
ROW_TILE_CAP = 512  # flattened output rows per tail-kernel grid step


# ------------------------------ small helpers ------------------------------ #
def _round_up(x, m):
    return (x + m - 1) // m * m


def _pad_axis(a, axis, new_size):
    if a.shape[axis] == new_size:
        return a
    pad = [(0, 0)] * a.ndim
    pad[axis] = (0, new_size - a.shape[axis])
    return jnp.pad(a, pad)


def _fold_bn(bn):
    scale = bn["gamma"] / jnp.sqrt(bn["var"] + EPS)
    bias = bn["beta"] - bn["mean"] * scale
    return scale, bias


def _pad_scale_bias(scale, bias, cp):
    s = jnp.concatenate([scale, jnp.ones((cp - scale.shape[0],), scale.dtype)])
    b = jnp.concatenate([bias, jnp.zeros((cp - bias.shape[0],), bias.dtype)])
    return (s.reshape(1, cp).astype(jnp.float32),
            b.reshape(1, cp).astype(jnp.float32))


def _pick_m_tile(m, cap=512):
    """Largest multiple-of-8 divisor of m that is <= cap (avoids padding m)."""
    if m % 8 == 0:
        t = min(cap, m)
        t -= t % 8
        while t >= 8:
            if m % t == 0:
                return t, m
            t -= 8
    tm = max(8, min(cap, _round_up(m, 8)) // 8 * 8)
    return tm, _round_up(m, tm)


# --------------------- kernel 1: conv1 (1x1) + bn1 + relu ------------------- #
def _conv1x1_bn_relu_kernel(x_ref, w_ref, s_ref, b_ref, o_ref):
    acc = jnp.dot(x_ref[...], w_ref[...], preferred_element_type=jnp.float32)
    o_ref[...] = jnp.maximum(acc * s_ref[...] + b_ref[...], 0.0).astype(o_ref.dtype)


def conv1x1_bn_relu(x_flat, w, scale, bias):
    """x_flat: (M, K) bf16, w: (K, N) bf16, scale/bias: (1, N) f32 -> (M, N) bf16."""
    M, K = x_flat.shape
    N = w.shape[1]
    tm, Mp = _pick_m_tile(M)
    if Mp != M:
        x_flat = _pad_axis(x_flat, 0, Mp)
    tn = 256 if N % 256 == 0 else 128
    out = pl.pallas_call(
        _conv1x1_bn_relu_kernel,
        out_shape=jax.ShapeDtypeStruct((Mp, N), jnp.bfloat16),
        grid=(Mp // tm, N // tn),
        in_specs=[
            pl.BlockSpec((tm, K), lambda i, j: (i, 0)),
            pl.BlockSpec((K, tn), lambda i, j: (0, j)),
            pl.BlockSpec((1, tn), lambda i, j: (0, j)),
            pl.BlockSpec((1, tn), lambda i, j: (0, j)),
        ],
        out_specs=pl.BlockSpec((tm, tn), lambda i, j: (i, j)),
        compiler_params=pltpu.CompilerParams(
            dimension_semantics=("parallel", "parallel"),
            vmem_limit_bytes=VMEM_LIMIT),
    )(x_flat, w, scale, bias)
    return out[:M] if Mp != M else out


# ----- kernel 2: fused conv2(3x3,s)+bn2+relu + conv3+bn3 + residual + relu -- #
def _make_fused_tail_kernel(stride, cq, lt, hp, has_down):
    s = stride

    def kernel(*refs):
        if has_down:
            (y1_ref, w2_ref, s2_ref, b2_ref, w3_ref, s3_ref, b3_ref,
             xs_ref, wd_ref, sd_ref, bd_ref, o_ref) = refs
        else:
            (y1_ref, w2_ref, s2_ref, b2_ref, w3_ref, s3_ref, b3_ref,
             xs_ref, o_ref) = refs

        # conv2 as a 9-tap accumulation; each tap is a static 2-D slice of the
        # halo'd, stride-deinterleaved row tile.
        acc = None
        for kh in range(3):
            for kw in range(3):
                phase = (kh % s) * s + (kw % s)
                start = phase * hp + (kh // s) * cq + (kw // s)
                win = y1_ref[0, start:start + lt, :]              # (lt, Cp) bf16
                d = jnp.dot(win, w2_ref[kh, kw],
                            preferred_element_type=jnp.float32)
                acc = d if acc is None else acc + d
        y2 = jnp.maximum(acc * s2_ref[...] + b2_ref[...], 0.0).astype(jnp.bfloat16)

        # conv3 (1x1) + bn3
        out = jnp.dot(y2, w3_ref[...], preferred_element_type=jnp.float32)
        out = out * s3_ref[...] + b3_ref[...]

        # identity / downsample branch (bf16 input, f32 epilogue)
        if has_down:
            idn = jnp.dot(xs_ref[0], wd_ref[...],
                          preferred_element_type=jnp.float32)
            idn = idn * sd_ref[...] + bd_ref[...]
        else:
            idn = xs_ref[0].astype(jnp.float32)

        # residual add + final ReLU in f32, then cast to bf16 output
        o_ref[0] = jnp.maximum(out + idn, 0.0).astype(o_ref.dtype)

    return kernel


def fused_tail(y1t, w2, s2, b2, w3, s3, b3, xs, down, *,
               stride, cq, lt, hp, n_tiles):
    B = y1t.shape[0]
    Cp = w2.shape[2]
    Cout_p = w3.shape[1]
    Cin_p = xs.shape[-1]
    ss = stride * stride
    has_down = down is not None

    in_specs = [
        pl.BlockSpec((1, ss * hp, Cp), lambda b, t: (b, t, 0)),
        pl.BlockSpec((3, 3, Cp, Cp), lambda b, t: (0, 0, 0, 0)),
        pl.BlockSpec((1, Cp), lambda b, t: (0, 0)),
        pl.BlockSpec((1, Cp), lambda b, t: (0, 0)),
        pl.BlockSpec((Cp, Cout_p), lambda b, t: (0, 0)),
        pl.BlockSpec((1, Cout_p), lambda b, t: (0, 0)),
        pl.BlockSpec((1, Cout_p), lambda b, t: (0, 0)),
        pl.BlockSpec((1, lt, Cin_p), lambda b, t: (b, t, 0)),
    ]
    args = [y1t, w2, s2, b2, w3, s3, b3, xs]
    if has_down:
        wd, sd, bd = down
        in_specs += [
            pl.BlockSpec((Cin_p, Cout_p), lambda b, t: (0, 0)),
            pl.BlockSpec((1, Cout_p), lambda b, t: (0, 0)),
            pl.BlockSpec((1, Cout_p), lambda b, t: (0, 0)),
        ]
        args += [wd, sd, bd]

    return pl.pallas_call(
        _make_fused_tail_kernel(stride, cq, lt, hp, has_down),
        out_shape=jax.ShapeDtypeStruct((B, n_tiles * lt, Cout_p), jnp.bfloat16),
        grid=(B, n_tiles),
        in_specs=in_specs,
        out_specs=pl.BlockSpec((1, lt, Cout_p), lambda b, t: (b, t, 0)),
        compiler_params=pltpu.CompilerParams(
            dimension_semantics=("parallel", "parallel"),
            vmem_limit_bytes=VMEM_LIMIT),
    )(*args)


# ------------------------------ forward (glue) ------------------------------ #
def bottleneck_forward(x_nchw, params, stride):
    x = jnp.transpose(x_nchw, (0, 2, 3, 1))  # NHWC, f32
    B, H, W, Cin = x.shape
    planes = params["conv1_w"].shape[0]
    cout = planes * 4
    s = stride
    ho = (H - 1) // s + 1
    wo = (W - 1) // s + 1

    Cin_p = _round_up(Cin, LANE)
    Cp = _round_up(planes, LANE)
    Cout_p = _round_up(cout, LANE)

    # channel-padded bf16 NHWC input (relayout needed anyway for NCHW -> NHWC)
    xp = _pad_axis(x, 3, Cin_p).astype(jnp.bfloat16)

    # ---- conv1 (1x1) + bn1 + relu : lane-dense bf16 matmul kernel ----
    s1, b1 = _fold_bn(params["bn1"])
    s1p, b1p = _pad_scale_bias(s1, b1, Cp)
    w1 = jnp.transpose(params["conv1_w"][:, :, 0, 0], (1, 0))
    w1p = (jnp.zeros((Cin_p, Cp), jnp.float32)
           .at[:Cin, :planes].set(w1).astype(jnp.bfloat16))
    y1 = conv1x1_bn_relu(xp.reshape(-1, Cin_p), w1p, s1p, b1p)
    y1 = y1.reshape(B, H, W, Cp)

    # ---- spatial pad + stride-deinterleave (replaces 9x im2col) ----
    ext = -(-2 // s)                           # ceil(2/s)
    rq = ho + ext
    cq = wo + ext
    y1p = jnp.pad(y1, ((0, 0), (1, s * rq - H - 1), (1, s * cq - W - 1), (0, 0)))
    planes_arr = (y1p.reshape(B, rq, s, cq, s, Cp)
                     .transpose(0, 2, 4, 1, 3, 5)
                     .reshape(B, s * s, rq * cq, Cp))          # (B, s*s, P, Cp) bf16

    # ---- row tiling of the flattened output with a duplicated halo ----
    rows_full = ho * cq                                       # incl. junk cols
    lt = min(ROW_TILE_CAP, _round_up(rows_full, 8))
    n_tiles = -(-rows_full // lt)
    l_pad = n_tiles * lt
    halo = (2 // s) * cq + (2 // s)                           # max tap offset
    hp = _round_up(lt + halo, 8)                              # halo'd tile rows
    p_pad = (n_tiles - 1) * lt + hp
    if p_pad > rq * cq:
        planes_arr = _pad_axis(planes_arr, 2, p_pad)
    y1t = jnp.stack([planes_arr[:, :, t * lt:t * lt + hp, :]
                     for t in range(n_tiles)], axis=1)        # (B, nT, s*s, hp, Cp)
    y1t = y1t.reshape(B, n_tiles * s * s * hp, Cp)

    # ---- weights / folded BN for the fused tail kernel ----
    s2, b2 = _fold_bn(params["bn2"])
    s2p, b2p = _pad_scale_bias(s2, b2, Cp)
    w2 = jnp.transpose(params["conv2_w"], (2, 3, 1, 0))       # (3,3,in,out)
    w2p = (jnp.zeros((3, 3, Cp, Cp), jnp.float32)
           .at[:, :, :planes, :planes].set(w2).astype(jnp.bfloat16))

    s3, b3 = _fold_bn(params["bn3"])
    s3p, b3p = _pad_scale_bias(s3, b3, Cout_p)
    w3 = jnp.transpose(params["conv3_w"][:, :, 0, 0], (1, 0))
    w3p = (jnp.zeros((Cp, Cout_p), jnp.float32)
           .at[:planes, :cout].set(w3).astype(jnp.bfloat16))

    # identity input at strided output positions, matching the flattened
    # (row-major, cq-wide) output layout.  bf16 to halve HBM traffic.
    xs_sp = xp[:, ::s, ::s, :]                                # (B, ho, wo, Cin_p)
    xs = jnp.pad(xs_sp, ((0, 0), (0, 0), (0, cq - wo), (0, 0)))
    xs = _pad_axis(xs.reshape(B, rows_full, Cin_p), 1, l_pad)

    has_down = (stride != 1) or (Cin != cout)
    if has_down:
        sd, bd = _fold_bn(params["down_bn"])
        sdp, bdp = _pad_scale_bias(sd, bd, Cout_p)
        wd = jnp.transpose(params["down_w"][:, :, 0, 0], (1, 0))
        wdp = (jnp.zeros((Cin_p, Cout_p), jnp.float32)
               .at[:Cin, :cout].set(wd).astype(jnp.bfloat16))
        down = (wdp, sdp, bdp)
    else:
        down = None

    out = fused_tail(y1t, w2p, s2p, b2p, w3p, s3p, b3p, xs, down,
                     stride=s, cq=cq, lt=lt, hp=hp, n_tiles=n_tiles)
    # (B, l_pad, Cout_p) bf16 -> NCHW f32
    out = out[:, :rows_full, :].reshape(B, ho, cq, Cout_p)[:, :, :wo, :cout]
    return jnp.transpose(out, (0, 3, 1, 2)).astype(x_nchw.dtype)


# --------------------------- reference (pure JAX) --------------------------- #
def _conv_ref(x_nhwc, w_oihw, stride, pad):
    w_hwio = jnp.transpose(w_oihw, (2, 3, 1, 0))
    return lax.conv_general_dilated(
        x_nhwc, w_hwio, window_strides=(stride, stride),
        padding=[(pad, pad), (pad, pad)],
        dimension_numbers=("NHWC", "HWIO", "NHWC"),
        precision=lax.Precision.HIGHEST,
    )


def _bn_ref(x, bn):
    sc, b = _fold_bn(bn)
    return x * sc + b


def bottleneck_ref(x_nchw, params, stride):
    x = jnp.transpose(x_nchw, (0, 2, 3, 1))
    out = jnp.maximum(_bn_ref(_conv_ref(x, params["conv1_w"], 1, 0), params["bn1"]), 0.0)
    out = jnp.maximum(_bn_ref(_conv_ref(out, params["conv2_w"], stride, 1), params["bn2"]), 0.0)
    out = _bn_ref(_conv_ref(out, params["conv3_w"], 1, 0), params["bn3"])
    planes4 = params["conv3_w"].shape[0]
    if stride != 1 or x.shape[-1] != planes4:
        identity = _bn_ref(_conv_ref(x, params["down_w"], stride, 0), params["down_bn"])
    else:
        identity = x
    out = jnp.maximum(out + identity, 0.0)
    return jnp.transpose(out, (0, 3, 1, 2))


# --------------------------------- params ----------------------------------- #
def _make_bn(key, c):
    k1, k2, k3, k4 = jax.random.split(key, 4)
    return {
        "gamma": 0.5 + jax.random.uniform(k1, (c,), jnp.float32),
        "beta": 0.1 * jax.random.normal(k2, (c,), jnp.float32),
        "mean": 0.1 * jax.random.normal(k3, (c,), jnp.float32),
        "var": 0.5 + jax.random.uniform(k4, (c,), jnp.float32),
    }


def make_params(key, inplanes, planes, stride):
    cout = planes * 4
    keys = jax.random.split(key, 10)
    params = {
        "conv1_w": 0.1 * jax.random.normal(keys[0], (planes, inplanes, 1, 1), jnp.float32),
        "bn1": _make_bn(keys[1], planes),
        "conv2_w": 0.1 * jax.random.normal(keys[2], (planes, planes, 3, 3), jnp.float32),
        "bn2": _make_bn(keys[3], planes),
        "conv3_w": 0.1 * jax.random.normal(keys[4], (cout, planes, 1, 1), jnp.float32),
        "bn3": _make_bn(keys[5], cout),
    }
    if stride != 1 or inplanes != cout:
        params["down_w"] = 0.1 * jax.random.normal(keys[6], (cout, inplanes, 1, 1), jnp.float32)
        params["down_bn"] = _make_bn(keys[7], cout)
    return params


# ---------------------------------- main ------------------------------------ #
if __name__ == "__main__":
    key = jax.random.PRNGKey(0)
    kx, kp = jax.random.split(key)

    batch, inplanes, planes, spatial, stride = 2, 16, 8, 16, 2
    x = jax.random.normal(kx, (batch, inplanes, spatial, spatial), jnp.float32)  # NCHW
    params = make_params(kp, inplanes, planes, stride)

    fwd = jax.jit(functools.partial(bottleneck_forward, stride=stride))
    ref_fn = jax.jit(functools.partial(bottleneck_ref, stride=stride))

    out = jax.block_until_ready(fwd(x, params))
    ref = jax.block_until_ready(ref_fn(x, params))

    assert out.shape == (batch, planes * 4, spatial // stride, spatial // stride), out.shape
    max_err = float(jnp.max(jnp.abs(out - ref)))
    assert jnp.allclose(out, ref, atol=4e-2, rtol=4e-2), max_err  # bf16 MXU operands + bf16 tail I/O
    print("KERNEL_OK")
</pallas_src>

<mosaic_0001>
module attributes {stable_mosaic.version = 11 : i64} {
  func.func @_conv1x1_bn_relu_kernel(%arg0: i32, %arg1: i32, %arg2: memref<512x128xbf16, #tpu.memory_space<vmem>>, %arg3: memref<128x128xbf16, #tpu.memory_space<vmem>>, %arg4: memref<1x128xf32, #tpu.memory_space<vmem>>, %arg5: memref<1x128xf32, #tpu.memory_space<vmem>>, %arg6: memref<512x128xbf16, #tpu.memory_space<vmem>>) attributes {dimension_semantics = [#tpu.dimension_semantics<parallel>, #tpu.dimension_semantics<parallel>], iteration_bounds = array<i64: 1, 1>, scalar_prefetch = 0 : i64, scratch_operands = 0 : i64, tpu.core_type = #tpu.core_type<tc>, window_params = [{transform_indices = @transform_0, window_bounds = array<i64: 512, 128>}, {transform_indices = @transform_1, window_bounds = array<i64: 128, 128>}, {transform_indices = @transform_2, window_bounds = array<i64: 1, 128>}, {transform_indices = @transform_3, window_bounds = array<i64: 1, 128>}, {transform_indices = @transform_4, window_bounds = array<i64: 512, 128>}]} {
    %c0 = arith.constant 0 : index
    %c0_0 = arith.constant 0 : index
    %0 = vector.load %arg2[%c0, %c0_0] : memref<512x128xbf16, #tpu.memory_space<vmem>>, vector<512x128xbf16>
    %c0_1 = arith.constant 0 : index
    %c0_2 = arith.constant 0 : index
    %1 = vector.load %arg3[%c0_1, %c0_2] : memref<128x128xbf16, #tpu.memory_space<vmem>>, vector<128x128xbf16>
    %cst = arith.constant dense<0.000000e+00> : vector<512x128xf32>
    %2 = tpu.matmul %0, %1, %cst {dimension_numbers = #tpu.dot_dimension_numbers<[1], [0], [0], [1], [0, 0, 1, 1], [], []>} : vector<512x128xbf16>, vector<128x128xbf16>, vector<512x128xf32> -> vector<512x128xf32>
    %c0_3 = arith.constant 0 : index
    %c0_4 = arith.constant 0 : index
    %3 = vector.load %arg4[%c0_3, %c0_4] : memref<1x128xf32, #tpu.memory_space<vmem>>, vector<1x128xf32>
    %4 = vector.broadcast %3 : vector<1x128xf32> to vector<512x128xf32>
    %5 = arith.mulf %2, %4 : vector<512x128xf32>
    %c0_5 = arith.constant 0 : index
    %c0_6 = arith.constant 0 : index
    %6 = vector.load %arg5[%c0_5, %c0_6] : memref<1x128xf32, #tpu.memory_space<vmem>>, vector<1x128xf32>
    %7 = vector.broadcast %6 : vector<1x128xf32> to vector<512x128xf32>
    %8 = arith.addf %5, %7 : vector<512x128xf32>
    %cst_7 = arith.constant 0.000000e+00 : f32
    %9 = vector.broadcast %cst_7 : f32 to vector<512x128xf32>
    %10 = arith.maximumf %8, %9 : vector<512x128xf32>
    %11 = arith.truncf %10 : vector<512x128xf32> to vector<512x128xbf16>
    %c0_8 = arith.constant 0 : index
    %c0_9 = arith.constant 0 : index
    %12 = vector.load %arg6[%c0_8, %c0_9] : memref<512x128xbf16, #tpu.memory_space<vmem>>, vector<512x128xbf16>
    tpu.vector_store %arg6[%c0_8, %c0_9], %11 {strides = array<i32>} : memref<512x128xbf16, #tpu.memory_space<vmem>>, vector<512x128xbf16>,
    return
  }
  func.func @transform_0(%arg0: i32, %arg1: i32) -> (i32, i32) {
    %c0_i32 = arith.constant 0 : i32
    %c0_i32_0 = arith.constant 0 : i32
    return %arg0, %c0_i32 : i32, i32
  }
  func.func @transform_1(%arg0: i32, %arg1: i32) -> (i32, i32) {
    %c0_i32 = arith.constant 0 : i32
    %c0_i32_0 = arith.constant 0 : i32
    return %c0_i32, %arg1 : i32, i32
  }
  func.func @transform_2(%arg0: i32, %arg1: i32) -> (i32, i32) {
    %c0_i32 = arith.constant 0 : i32
    %c0_i32_0 = arith.constant 0 : i32
    return %c0_i32, %arg1 : i32, i32
  }
  func.func @transform_3(%arg0: i32, %arg1: i32) -> (i32, i32) {
    %c0_i32 = arith.constant 0 : i32
    %c0_i32_0 = arith.constant 0 : i32
    return %c0_i32, %arg1 : i32, i32
  }
  func.func @transform_4(%arg0: i32, %arg1: i32) -> (i32, i32) {
    %c0_i32 = arith.constant 0 : i32
    return %arg0, %arg1 : i32, i32
  }
}

module attributes {stable_mosaic.version = 11 : i64} {
  func.func @kernel(%arg0: i32, %arg1: i32, %arg2: memref<1x352x128xbf16, #tpu.memory_space<vmem>>, %arg3: memref<3x3x128x128xbf16, #tpu.memory_space<vmem>>, %arg4: memref<1x128xf32, #tpu.memory_space<vmem>>, %arg5: memref<1x128xf32, #tpu.memory_space<vmem>>, %arg6: memref<128x128xbf16, #tpu.memory_space<vmem>>, %arg7: memref<1x128xf32, #tpu.memory_space<vmem>>, %arg8: memref<1x128xf32, #tpu.memory_space<vmem>>, %arg9: memref<1x72x128xbf16, #tpu.memory_space<vmem>>, %arg10: memref<128x128xbf16, #tpu.memory_space<vmem>>, %arg11: memref<1x128xf32, #tpu.memory_space<vmem>>, %arg12: memref<1x128xf32, #tpu.memory_space<vmem>>, %arg13: memref<1x72x128xbf16, #tpu.memory_space<vmem>>) attributes {dimension_semantics = [#tpu.dimension_semantics<parallel>, #tpu.dimension_semantics<parallel>], iteration_bounds = array<i64: 2, 1>, scalar_prefetch = 0 : i64, scratch_operands = 0 : i64, tpu.core_type = #tpu.core_type<tc>, window_params = [{transform_indices = @transform_0, window_bounds = array<i64: 1, 352, 128>}, {pipeline_mode = #tpu.pipeline_mode<synchronous>, transform_indices = @transform_1, window_bounds = array<i64: 3, 3, 128, 128>}, {pipeline_mode = #tpu.pipeline_mode<synchronous>, transform_indices = @transform_2, window_bounds = array<i64: 1, 128>}, {pipeline_mode = #tpu.pipeline_mode<synchronous>, transform_indices = @transform_3, window_bounds = array<i64: 1, 128>}, {pipeline_mode = #tpu.pipeline_mode<synchronous>, transform_indices = @transform_4, window_bounds = array<i64: 128, 128>}, {pipeline_mode = #tpu.pipeline_mode<synchronous>, transform_indices = @transform_5, window_bounds = array<i64: 1, 128>}, {pipeline_mode = #tpu.pipeline_mode<synchronous>, transform_indices = @transform_6, window_bounds = array<i64: 1, 128>}, {transform_indices = @transform_7, window_bounds = array<i64: 1, 72, 128>}, {pipeline_mode = #tpu.pipeline_mode<synchronous>, transform_indices = @transform_8, window_bounds = array<i64: 128, 128>}, {pipeline_mode = #tpu.pipeline_mode<synchronous>, transform_indices = @transform_9, window_bounds = array<i64: 1, 128>}, {pipeline_mode = #tpu.pipeline_mode<synchronous>, transform_indices = @transform_10, window_bounds = array<i64: 1, 128>}, {transform_indices = @transform_11, window_bounds = array<i64: 1, 72, 128>}]} {
    %c0 = arith.constant 0 : index
    %c0_0 = arith.constant 0 : index
    %c0_1 = arith.constant 0 : index
    %0 = vector.load %arg2[%c0, %c0_0, %c0_1] : memref<1x352x128xbf16, #tpu.memory_space<vmem>>, vector<1x72x128xbf16>
    %1 = vector.shape_cast %0 : vector<1x72x128xbf16> to vector<72x128xbf16>
    %c0_2 = arith.constant 0 : index
    %c0_3 = arith.constant 0 : index
    %c0_4 = arith.constant 0 : index
    %c0_5 = arith.constant 0 : index
    %2 = vector.load %arg3[%c0_2, %c0_3, %c0_4, %c0_5] : memref<3x3x128x128xbf16, #tpu.memory_space<vmem>>, vector<1x1x128x128xbf16>
    %3 = vector.shape_cast %2 : vector<1x1x128x128xbf16> to vector<128x128xbf16>
    %cst = arith.constant dense<0.000000e+00> : vector<72x128xf32>
    %4 = tpu.matmul %1, %3, %cst {dimension_numbers = #tpu.dot_dimension_numbers<[1], [0], [0], [1], [0, 0, 1, 1], [], []>} : vector<72x128xbf16>, vector<128x128xbf16>, vector<72x128xf32> -> vector<72x128xf32>
    %c0_6 = arith.constant 0 : index
    %c88 = arith.constant 88 : index
    %c0_7 = arith.constant 0 : index
    %5 = vector.load %arg2[%c0_6, %c88, %c0_7] : memref<1x352x128xbf16, #tpu.memory_space<vmem>>, vector<1x72x128xbf16>
    %6 = vector.shape_cast %5 : vector<1x72x128xbf16> to vector<72x128xbf16>
    %c0_8 = arith.constant 0 : index
    %c1 = arith.constant 1 : index
    %c0_9 = arith.constant 0 : index
    %c0_10 = arith.constant 0 : index
    %7 = vector.load %arg3[%c0_8, %c1, %c0_9, %c0_10] : memref<3x3x128x128xbf16, #tpu.memory_space<vmem>>, vector<1x1x128x128xbf16>
    %8 = vector.shape_cast %7 : vector<1x1x128x128xbf16> to vector<128x128xbf16>
    %cst_11 = arith.constant dense<0.000000e+00> : vector<72x128xf32>
    %9 = tpu.matmul %6, %8, %cst_11 {dimension_numbers = #tpu.dot_dimension_numbers<[1], [0], [0], [1], [0, 0, 1, 1], [], []>} : vector<72x128xbf16>, vector<128x128xbf16>, vector<72x128xf32> -> vector<72x128xf32>
    %10 = arith.addf %4, %9 : vector<72x128xf32>
    %c0_12 = arith.constant 0 : index
    %c1_13 = arith.constant 1 : index
    %c0_14 = arith.constant 0 : index
    %11 = vector.load %arg2[%c0_12, %c1_13, %c0_14] : memref<1x352x128xbf16, #tpu.memory_space<vmem>>, vector<1x72x128xbf16>
    %12 = vector.shape_cast %11 : vector<1x72x128xbf16> to vector<72x128xbf16>
    %c0_15 = arith.constant 0 : index
    %c2 = arith.constant 2 : index
    %c0_16 = arith.constant 0 : index
    %c0_17 = arith.constant 0 : index
    %13 = vector.load %arg3[%c0_15, %c2, %c0_16, %c0_17] : memref<3x3x128x128xbf16, #tpu.memory_space<vmem>>, vector<1x1x128x128xbf16>
    %14 = vector.shape_cast %13 : vector<1x1x128x128xbf16> to vector<128x128xbf16>
    %cst_18 = arith.constant dense<0.000000e+00> : vector<72x128xf32>
    %15 = tpu.matmul %12, %14, %cst_18 {dimension_numbers = #tpu.dot_dimension_numbers<[1], [0], [0], [1], [0, 0, 1, 1], [], []>} : vector<72x128xbf16>, vector<128x128xbf16>, vector<72x128xf32> -> vector<72x128xf32>
    %16 = arith.addf %10, %15 : vector<72x128xf32>
    %c0_19 = arith.constant 0 : index
    %c176 = arith.constant 176 : index
    %c0_20 = arith.constant 0 : index
    %17 = vector.load %arg2[%c0_19, %c176, %c0_20] : memref<1x352x128xbf16, #tpu.memory_space<vmem>>, vector<1x72x128xbf16>
    %18 = vector.shape_cast %17 : vector<1x72x128xbf16> to vector<72x128xbf16>
    %c1_21 = arith.constant 1 : index
    %c0_22 = arith.constant 0 : index
    %c0_23 = arith.constant 0 : index
    %c0_24 = arith.constant 0 : index
    %19 = vector.load %arg3[%c1_21, %c0_22, %c0_23, %c0_24] : memref<3x3x128x128xbf16, #tpu.memory_space<vmem>>, vector<1x1x128x128xbf16>
    %20 = vector.shape_cast %19 : vector<1x1x128x128xbf16> to vector<128x128xbf16>
    %cst_25 = arith.constant dense<0.000000e+00> : vector<72x128xf32>
    %21 = tpu.matmul %18, %20, %cst_25 {dimension_numbers = #tpu.dot_dimension_numbers<[1], [0], [0], [1], [0, 0, 1, 1], [], []>} : vector<72x128xbf16>, vector<128x128xbf16>, vector<72x128xf32> -> vector<72x128xf32>
    %22 = arith.addf %16, %21 : vector<72x128xf32>
    %c0_26 = arith.constant 0 : index
    %c264 = arith.constant 264 : index
    %c0_27 = arith.constant 0 : index
    %23 = vector.load %arg2[%c0_26, %c264, %c0_27] : memref<1x352x128xbf16, #tpu.memory_space<vmem>>, vector<1x72x128xbf16>
    %24 = vector.shape_cast %23 : vector<1x72x128xbf16> to vector<72x128xbf16>
    %c1_28 = arith.constant 1 : index
    %c1_29 = arith.constant 1 : index
    %c0_30 = arith.constant 0 : index
    %c0_31 = arith.constant 0 : index
    %25 = vector.load %arg3[%c1_28, %c1_29, %c0_30, %c0_31] : memref<3x3x128x128xbf16, #tpu.memory_space<vmem>>, vector<1x1x128x128xbf16>
    %26 = vector.shape_cast %25 : vector<1x1x128x128xbf16> to vector<128x128xbf16>
    %cst_32 = arith.constant dense<0.000000e+00> : vector<72x128xf32>
    %27 = tpu.matmul %24, %26, %cst_32 {dimension_numbers = #tpu.dot_dimension_numbers<[1], [0], [0], [1], [0, 0, 1, 1], [], []>} : vector<72x128xbf16>, vector<128x128xbf16>, vector<72x128xf32> -> vector<72x128xf32>
    %28 = arith.addf %22, %27 : vector<72x128xf32>
    %c0_33 = arith.constant 0 : index
    %c177 = arith.constant 177 : index
    %c0_34 = arith.constant 0 : index
    %29 = vector.load %arg2[%c0_33, %c177, %c0_34] : memref<1x352x128xbf16, #tpu.memory_space<vmem>>, vector<1x72x128xbf16>
    %30 = vector.shape_cast %29 : vector<1x72x128xbf16> to vector<72x128xbf16>
    %c1_35 = arith.constant 1 : index
    %c2_36 = arith.constant 2 : index
    %c0_37 = arith.constant 0 : index
    %c0_38 = arith.constant 0 : index
    %31 = vector.load %arg3[%c1_35, %c2_36, %c0_37, %c0_38] : memref<3x3x128x128xbf16, #tpu.memory_space<vmem>>, vector<1x1x128x128xbf16>
    %32 = vector.shape_cast %31 : vector<1x1x128x128xbf16> to vector<128x128xbf16>
    %cst_39 = arith.constant dense<0.000000e+00> : vector<72x128xf32>
    %33 = tpu.matmul %30, %32, %cst_39 {dimension_numbers = #tpu.dot_dimension_numbers<[1], [0], [0], [1], [0, 0, 1, 1], [], []>} : vector<72x128xbf16>, vector<128x128xbf16>, vector<72x128xf32> -> vector<72x128xf32>
    %34 = arith.addf %28, %33 : vector<72x128xf32>
    %c0_40 = arith.constant 0 : index
    %c9 = arith.constant 9 : index
    %c0_41 = arith.constant 0 : index
    %35 = vector.load %arg2[%c0_40, %c9, %c0_41] : memref<1x352x128xbf16, #tpu.memory_space<vmem>>, vector<1x72x128xbf16>
    %36 = vector.shape_cast %35 : vector<1x72x128xbf16> to vector<72x128xbf16>
    %c2_42 = arith.constant 2 : index
    %c0_43 = arith.constant 0 : index
    %c0_44 = arith.constant 0 : index
    %c0_45 = arith.constant 0 : index
    %37 = vector.load %arg3[%c2_42, %c0_43, %c0_44, %c0_45] : memref<3x3x128x128xbf16, #tpu.memory_space<vmem>>, vector<1x1x128x128xbf16>
    %38 = vector.shape_cast %37 : vector<1x1x128x128xbf16> to vector<128x128xbf16>
    %cst_46 = arith.constant dense<0.000000e+00> : vector<72x128xf32>
    %39 = tpu.matmul %36, %38, %cst_46 {dimension_numbers = #tpu.dot_dimension_numbers<[1], [0], [0], [1], [0, 0, 1, 1], [], []>} : vector<72x128xbf16>, vector<128x128xbf16>, vector<72x128xf32> -> vector<72x128xf32>
    %40 = arith.addf %34, %39 : vector<72x128xf32>
    %c0_47 = arith.constant 0 : index
    %c97 = arith.constant 97 : index
    %c0_48 = arith.constant 0 : index
    %41 = vector.load %arg2[%c0_47, %c97, %c0_48] : memref<1x352x128xbf16, #tpu.memory_space<vmem>>, vector<1x72x128xbf16>
    %42 = vector.shape_cast %41 : vector<1x72x128xbf16> to vector<72x128xbf16>
    %c2_49 = arith.constant 2 : index
    %c1_50 = arith.constant 1 : index
    %c0_51 = arith.constant 0 : index
    %c0_52 = arith.constant 0 : index
    %43 = vector.load %arg3[%c2_49, %c1_50, %c0_51, %c0_52] : memref<3x3x128x128xbf16, #tpu.memory_space<vmem>>, vector<1x1x128x128xbf16>
    %44 = vector.shape_cast %43 : vector<1x1x128x128xbf16> to vector<128x128xbf16>
    %cst_53 = arith.constant dense<0.000000e+00> : vector<72x128xf32>
    %45 = tpu.matmul %42, %44, %cst_53 {dimension_numbers = #tpu.dot_dimension_numbers<[1], [0], [0], [1], [0, 0, 1, 1], [], []>} : vector<72x128xbf16>, vector<128x128xbf16>, vector<72x128xf32> -> vector<72x128xf32>
    %46 = arith.addf %40, %45 : vector<72x128xf32>
    %c0_54 = arith.constant 0 : index
    %c10 = arith.constant 10 : index
    %c0_55 = arith.constant 0 : index
    %47 = vector.load %arg2[%c0_54, %c10, %c0_55] : memref<1x352x128xbf16, #tpu.memory_space<vmem>>, vector<1x72x128xbf16>
    %48 = vector.shape_cast %47 : vector<1x72x128xbf16> to vector<72x128xbf16>
    %c2_56 = arith.constant 2 : index
    %c2_57 = arith.constant 2 : index
    %c0_58 = arith.constant 0 : index
    %c0_59 = arith.constant 0 : index
    %49 = vector.load %arg3[%c2_56, %c2_57, %c0_58, %c0_59] : memref<3x3x128x128xbf16, #tpu.memory_space<vmem>>, vector<1x1x128x128xbf16>
    %50 = vector.shape_cast %49 : vector<1x1x128x128xbf16> to vector<128x128xbf16>
    %cst_60 = arith.constant dense<0.000000e+00> : vector<72x128xf32>
    %51 = tpu.matmul %48, %50, %cst_60 {dimension_numbers = #tpu.dot_dimension_numbers<[1], [0], [0], [1], [0, 0, 1, 1], [], []>} : vector<72x128xbf16>, vector<128x128xbf16>, vector<72x128xf32> -> vector<72x128xf32>
    %52 = arith.addf %46, %51 : vector<72x128xf32>
    %c0_61 = arith.constant 0 : index
    %c0_62 = arith.constant 0 : index
    %53 = vector.load %arg4[%c0_61, %c0_62] : memref<1x128xf32, #tpu.memory_space<vmem>>, vector<1x128xf32>
    %54 = vector.broadcast %53 : vector<1x128xf32> to vector<72x128xf32>
    %55 = arith.mulf %52, %54 : vector<72x128xf32>
    %c0_63 = arith.constant 0 : index
    %c0_64 = arith.constant 0 : index
    %56 = vector.load %arg5[%c0_63, %c0_64] : memref<1x128xf32, #tpu.memory_space<vmem>>, vector<1x128xf32>
    %57 = vector.broadcast %56 : vector<1x128xf32> to vector<72x128xf32>
    %58 = arith.addf %55, %57 : vector<72x128xf32>
    %cst_65 = arith.constant 0.000000e+00 : f32
    %59 = vector.broadcast %cst_65 : f32 to vector<72x128xf32>
    %60 = arith.maximumf %58, %59 : vector<72x128xf32>
    %61 = arith.truncf %60 : vector<72x128xf32> to vector<72x128xbf16>
    %c0_66 = arith.constant 0 : index
    %c0_67 = arith.constant 0 : index
    %62 = vector.load %arg6[%c0_66, %c0_67] : memref<128x128xbf16, #tpu.memory_space<vmem>>, vector<128x128xbf16>
    %cst_68 = arith.constant dense<0.000000e+00> : vector<72x128xf32>
    %63 = tpu.matmul %61, %62, %cst_68 {dimension_numbers = #tpu.dot_dimension_numbers<[1], [0], [0], [1], [0, 0, 1, 1], [], []>} : vector<72x128xbf16>, vector<128x128xbf16>, vector<72x128xf32> -> vector<72x128xf32>
    %c0_69 = arith.constant 0 : index
    %c0_70 = arith.constant 0 : index
    %64 = vector.load %arg7[%c0_69, %c0_70] : memref<1x128xf32, #tpu.memory_space<vmem>>, vector<1x128xf32>
    %65 = vector.broadcast %64 : vector<1x128xf32> to vector<72x128xf32>
    %66 = arith.mulf %63, %65 : vector<72x128xf32>
    %c0_71 = arith.constant 0 : index
    %c0_72 = arith.constant 0 : index
    %67 = vector.load %arg8[%c0_71, %c0_72] : memref<1x128xf32, #tpu.memory_space<vmem>>, vector<1x128xf32>
    %68 = vector.broadcast %67 : vector<1x128xf32> to vector<72x128xf32>
    %69 = arith.addf %66, %68 : vector<72x128xf32>
    %c0_73 = arith.constant 0 : index
    %c0_74 = arith.constant 0 : index
    %c0_75 = arith.constant 0 : index
    %70 = vector.load %arg9[%c0_73, %c0_74, %c0_75] : memref<1x72x128xbf16, #tpu.memory_space<vmem>>, vector<1x72x128xbf16>
    %71 = vector.shape_cast %70 : vector<1x72x128xbf16> to vector<72x128xbf16>
    %c0_76 = arith.constant 0 : index
    %c0_77 = arith.constant 0 : index
    %72 = vector.load %arg10[%c0_76, %c0_77] : memref<128x128xbf16, #tpu.memory_space<vmem>>, vector<128x128xbf16>
    %cst_78 = arith.constant dense<0.000000e+00> : vector<72x128xf32>
    %73 = tpu.matmul %71, %72, %cst_78 {dimension_numbers = #tpu.dot_dimension_numbers<[1], [0], [0], [1], [0, 0, 1, 1], [], []>} : vector<72x128xbf16>, vector<128x128xbf16>, vector<72x128xf32> -> vector<72x128xf32>
    %c0_79 = arith.constant 0 : index
    %c0_80 = arith.constant 0 : index
    %74 = vector.load %arg11[%c0_79, %c0_80] : memref<1x128xf32, #tpu.memory_space<vmem>>, vector<1x128xf32>
    %75 = vector.broadcast %74 : vector<1x128xf32> to vector<72x128xf32>
    %76 = arith.mulf %73, %75 : vector<72x128xf32>
    %c0_81 = arith.constant 0 : index
    %c0_82 = arith.constant 0 : index
    %77 = vector.load %arg12[%c0_81, %c0_82] : memref<1x128xf32, #tpu.memory_space<vmem>>, vector<1x128xf32>
    %78 = vector.broadcast %77 : vector<1x128xf32> to vector<72x128xf32>
    %79 = arith.addf %76, %78 : vector<72x128xf32>
    %80 = arith.addf %69, %79 : vector<72x128xf32>
    %cst_83 = arith.constant 0.000000e+00 : f32
    %81 = vector.broadcast %cst_83 : f32 to vector<72x128xf32>
    %82 = arith.maximumf %80, %81 : vector<72x128xf32>
    %83 = arith.truncf %82 : vector<72x128xf32> to vector<72x128xbf16>
    %c0_84 = arith.constant 0 : index
    %c0_85 = arith.constant 0 : index
    %c0_86 = arith.constant 0 : index
    %84 = vector.load %arg13[%c0_84, %c0_85, %c0_86] : memref<1x72x128xbf16, #tpu.memory_space<vmem>>, vector<1x72x128xbf16>
    %85 = vector.shape_cast %84 : vector<1x72x128xbf16> to vector<72x128xbf16>
    %86 = vector.shape_cast %83 : vector<72x128xbf16> to vector<1x72x128xbf16>
    tpu.vector_store %arg13[%c0_84, %c0_85, %c0_86], %86 {strides = array<i32>} : memref<1x72x128xbf16, #tpu.memory_space<vmem>>, vector<1x72x128xbf16>,
    return
  }
  func.func @transform_0(%arg0: i32, %arg1: i32) -> (i32, i32, i32) {
    %c0_i32 = arith.constant 0 : i32
    %c0_i32_0 = arith.constant 0 : i32
    return %arg0, %arg1, %c0_i32 : i32, i32, i32
  }
  func.func @transform_1(%arg0: i32, %arg1: i32) -> (i32, i32, i32, i32) {
    %c0_i32 = arith.constant 0 : i32
    %c0_i32_0 = arith.constant 0 : i32
    %c0_i32_1 = arith.constant 0 : i32
    %c0_i32_2 = arith.constant 0 : i32
    %c0_i32_3 = arith.constant 0 : i32
    return %c0_i32, %c0_i32_0, %c0_i32_1, %c0_i32_2 : i32, i32, i32, i32
  }
  func.func @transform_2(%arg0: i32, %arg1: i32) -> (i32, i32) {
    %c0_i32 = arith.constant 0 : i32
    %c0_i32_0 = arith.constant 0 : i32
    %c0_i32_1 = arith.constant 0 : i32
    return %c0_i32, %c0_i32_0 : i32, i32
  }
  func.func @transform_3(%arg0: i32, %arg1: i32) -> (i32, i32) {
    %c0_i32 = arith.constant 0 : i32
    %c0_i32_0 = arith.constant 0 : i32
    %c0_i32_1 = arith.constant 0 : i32
    return %c0_i32, %c0_i32_0 : i32, i32
  }
  func.func @transform_4(%arg0: i32, %arg1: i32) -> (i32, i32) {
    %c0_i32 = arith.constant 0 : i32
    %c0_i32_0 = arith.constant 0 : i32
    %c0_i32_1 = arith.constant 0 : i32
    return %c0_i32, %c0_i32_0 : i32, i32
  }
  func.func @transform_5(%arg0: i32, %arg1: i32) -> (i32, i32) {
    %c0_i32 = arith.constant 0 : i32
    %c0_i32_0 = arith.constant 0 : i32
    %c0_i32_1 = arith.constant 0 : i32
    return %c0_i32, %c0_i32_0 : i32, i32
  }
  func.func @transform_6(%arg0: i32, %arg1: i32) -> (i32, i32) {
    %c0_i32 = arith.constant 0 : i32
    %c0_i32_0 = arith.constant 0 : i32
    %c0_i32_1 = arith.constant 0 : i32
    return %c0_i32, %c0_i32_0 : i32, i32
  }
  func.func @transform_7(%arg0: i32, %arg1: i32) -> (i32, i32, i32) {
    %c0_i32 = arith.constant 0 : i32
    %c0_i32_0 = arith.constant 0 : i32
    return %arg0, %arg1, %c0_i32 : i32, i32, i32
  }
  func.func @transform_8(%arg0: i32, %arg1: i32) -> (i32, i32) {
    %c0_i32 = arith.constant 0 : i32
    %c0_i32_0 = arith.constant 0 : i32
    %c0_i32_1 = arith.constant 0 : i32
    return %c0_i32, %c0_i32_0 : i32, i32
  }
  func.func @transform_9(%arg0: i32, %arg1: i32) -> (i32, i32) {
    %c0_i32 = arith.constant 0 : i32
    %c0_i32_0 = arith.constant 0 : i32
    %c0_i32_1 = arith.constant 0 : i32
    return %c0_i32, %c0_i32_0 : i32, i32
  }
  func.func @transform_10(%arg0: i32, %arg1: i32) -> (i32, i32) {
    %c0_i32 = arith.constant 0 : i32
    %c0_i32_0 = arith.constant 0 : i32
    %c0_i32_1 = arith.constant 0 : i32
    return %c0_i32, %c0_i32_0 : i32, i32
  }
  func.func @transform_11(%arg0: i32, %arg1: i32) -> (i32, i32, i32) {
    %c0_i32 = arith.constant 0 : i32
    %c0_i32_0 = arith.constant 0 : i32
    return %arg0, %arg1, %c0_i32 : i32, i32, i32
  }
}

</mosaic_0001>

<llo_original>
// kernel: bottleneck_forward.2
$region0: #{bottleneck_forward.2}
  #allocation0 [shape = 'u32[]', space=smem, size = 0x4, offset = 0x4, fixed_abs, tag = 'smem constant byte address 0x4 - core index']
  #allocation1 [shape = 'u32[144,128]{1,0:T(1,128)}', space=vmem, size = 0x12000, scoped, tag = 'internal scratch']
  %s0 = inlined_call_operand.vmem [shape: bf16[512,128], index: 0, kind: input, shape index: {}]
  %s1 = inlined_call_operand.vmem [shape: bf16[128,128], index: 1, kind: input, shape index: {}]
  %s2 = inlined_call_operand.vmem [shape: f32[1,128], index: 2, kind: input, shape index: {}]
  %s3 = inlined_call_operand.vmem [shape: f32[1,128], index: 3, kind: input, shape index: {}]
  %s4 = inlined_call_operand.vmem [shape: bf16[512,128], index: 4, kind: output, shape index: {}]
  %s5 = sld [smem:[#allocation0]]
  $region26: #{bottleneck_forward.2} parent=0
    _
  %s7 = ssub.s32 1, %s5
  %s8 = scalar_select 0, %s7, %s5
  // Predicated region
  $region2: #{bottleneck_forward.2} parent=0 // pred_check
    _
  $region3: #{bottleneck_forward.2} parent=0 // pred_check_branch
    %10 = sbr.rel (0) target = $region5
  $region4: #{bottleneck_forward.2} parent=0 // pred_region
    _
  $region5: #{bottleneck_forward.2} parent=0 // pred_fallthru
    _
  // Predicated region
  $region6: #{bottleneck_forward.2} parent=0 // pred_check
    _
  $region7: #{bottleneck_forward.2} parent=0 // pred_check_branch
    %12 = sbr.rel (0) target = $region9
  $region8: #{bottleneck_forward.2} parent=0 // pred_region
    _
  $region9: #{bottleneck_forward.2} parent=0 // pred_fallthru
    _
  // Predicated region
  $region10: #{bottleneck_forward.2} parent=0 // pred_check
    _
  $region11: #{bottleneck_forward.2} parent=0 // pred_check_branch
    %14 = sbr.rel (0) target = $region13
  $region12: #{bottleneck_forward.2} parent=0 // pred_region
    _
  $region13: #{bottleneck_forward.2} parent=0 // pred_fallthru
    _
  // Predicated region
  $region14: #{bottleneck_forward.2} parent=0 // pred_check
    _
  $region15: #{bottleneck_forward.2} parent=0 // pred_check_branch
    %16 = sbr.rel (0) target = $region17
  $region16: #{bottleneck_forward.2} parent=0 // pred_region
    _
  $region17: #{bottleneck_forward.2} parent=0 // pred_fallthru
    _
  %v18 = vld [vmem:[%s0] sm:$0xf]
  %v19 = vld [vmem:[%s0 + $0x4] sm:$0xf]
  %v20 = vld [vmem:[%s0 + $0x8] sm:$0xf]
  %v21 = vld [vmem:[%s0 + $0xc] sm:$0xf]
  %v22 = vld [vmem:[%s0 + $0x10] sm:$0xf]
  %v23 = vld [vmem:[%s0 + $0x14] sm:$0xf]
  %v24 = vld [vmem:[%s0 + $0x18] sm:$0xf]
  %v25 = vld [vmem:[%s0 + $0x1c] sm:$0xf]
  %v26 = vld [vmem:[%s0 + $0x20] sm:$0xf]
  %v27 = vld [vmem:[%s0 + $0x24] sm:$0xf]
  %v28 = vld [vmem:[%s0 + $0x28] sm:$0xf]
  %v29 = vld [vmem:[%s0 + $0x2c] sm:$0xf]
  %v30 = vld [vmem:[%s0 + $0x30] sm:$0xf]
  %v31 = vld [vmem:[%s0 + $0x34] sm:$0xf]
  %v32 = vld [vmem:[%s0 + $0x38] sm:$0xf]
  %v33 = vld [vmem:[%s0 + $0x3c] sm:$0xf]
  %v34 = vld [vmem:[%s0 + $0x40] sm:$0xf]
  %v35 = vld [vmem:[%s0 + $0x44] sm:$0xf]
  %v36 = vld [vmem:[%s0 + $0x48] sm:$0xf]
  %v37 = vld [vmem:[%s0 + $0x4c] sm:$0xf]
  %v38 = vld [vmem:[%s0 + $0x50] sm:$0xf]
  %v39 = vld [vmem:[%s0 + $0x54] sm:$0xf]
  %v40 = vld [vmem:[%s0 + $0x58] sm:$0xf]
  %v41 = vld [vmem:[%s0 + $0x5c] sm:$0xf]
  %v42 = vld [vmem:[%s0 + $0x60] sm:$0xf]
  %v43 = vld [vmem:[%s0 + $0x64] sm:$0xf]
  %v44 = vld [vmem:[%s0 + $0x68] sm:$0xf]
  %v45 = vld [vmem:[%s0 + $0x6c] sm:$0xf]
  %v46 = vld [vmem:[%s0 + $0x70] sm:$0xf]
  %v47 = vld [vmem:[%s0 + $0x74] sm:$0xf]
  %v48 = vld [vmem:[%s0 + $0x78] sm:$0xf]
  %v49 = vld [vmem:[%s0 + $0x7c] sm:$0xf]
  %v50 = vld [vmem:[%s0 + $0x80] sm:$0xf]
  %v51 = vld [vmem:[%s0 + $0x84] sm:$0xf]
  %v52 = vld [vmem:[%s0 + $0x88] sm:$0xf]
  %v53 = vld [vmem:[%s0 + $0x8c] sm:$0xf]
  %v54 = vld [vmem:[%s0 + $0x90] sm:$0xf]
  %v55 = vld [vmem:[%s0 + $0x94] sm:$0xf]
  %v56 = vld [vmem:[%s0 + $0x98] sm:$0xf]
  %v57 = vld [vmem:[%s0 + $0x9c] sm:$0xf]
  %v58 = vld [vmem:[%s0 + $0xa0] sm:$0xf]
  %v59 = vld [vmem:[%s0 + $0xa4] sm:$0xf]
  %v60 = vld [vmem:[%s0 + $0xa8] sm:$0xf]
  %v61 = vld [vmem:[%s0 + $0xac] sm:$0xf]
  %v62 = vld [vmem:[%s0 + $0xb0] sm:$0xf]
  %v63 = vld [vmem:[%s0 + $0xb4] sm:$0xf]
  %v64 = vld [vmem:[%s0 + $0xb8] sm:$0xf]
  %v65 = vld [vmem:[%s0 + $0xbc] sm:$0xf]
  %v66 = vld [vmem:[%s0 + $0xc0] sm:$0xf]
  %v67 = vld [vmem:[%s0 + $0xc4] sm:$0xf]
  %v68 = vld [vmem:[%s0 + $0xc8] sm:$0xf]
  %v69 = vld [vmem:[%s0 + $0xcc] sm:$0xf]
  %v70 = vld [vmem:[%s0 + $0xd0] sm:$0xf]
  %v71 = vld [vmem:[%s0 + $0xd4] sm:$0xf]
  %v72 = vld [vmem:[%s0 + $0xd8] sm:$0xf]
  %v73 = vld [vmem:[%s0 + $0xdc] sm:$0xf]
  %v74 = vld [vmem:[%s0 + $0xe0] sm:$0xf]
  %v75 = vld [vmem:[%s0 + $0xe4] sm:$0xf]
  %v76 = vld [vmem:[%s0 + $0xe8] sm:$0xf]
  %v77 = vld [vmem:[%s0 + $0xec] sm:$0xf]
  %v78 = vld [vmem:[%s0 + $0xf0] sm:$0xf]
  %v79 = vld [vmem:[%s0 + $0xf4] sm:$0xf]
  %v80 = vld [vmem:[%s0 + $0xf8] sm:$0xf]
  %v81 = vld [vmem:[%s0 + $0xfc] sm:$0xf]
  %v82 = vld [vmem:[%s1] sm:$0xf]
  %v83 = vld [vmem:[%s1 + $0x4] sm:$0xf]
  %v84 = vld [vmem:[%s1 + $0x8] sm:$0xf]
  %v85 = vld [vmem:[%s1 + $0xc] sm:$0xf]
  %v86 = vld [vmem:[%s1 + $0x10] sm:$0xf]
  %v87 = vld [vmem:[%s1 + $0x14] sm:$0xf]
  %v88 = vld [vmem:[%s1 + $0x18] sm:$0xf]
  %v89 = vld [vmem:[%s1 + $0x1c] sm:$0xf]
  %v90 = vld [vmem:[%s1 + $0x20] sm:$0xf]
  %v91 = vld [vmem:[%s1 + $0x24] sm:$0xf]
  %v92 = vld [vmem:[%s1 + $0x28] sm:$0xf]
  %v93 = vld [vmem:[%s1 + $0x2c] sm:$0xf]
  %v94 = vld [vmem:[%s1 + $0x30] sm:$0xf]
  %v95 = vld [vmem:[%s1 + $0x34] sm:$0xf]
  %v96 = vld [vmem:[%s1 + $0x38] sm:$0xf]
  %v97 = vld [vmem:[%s1 + $0x3c] sm:$0xf]
  %v162 = vunpack.c.l.b16 %v18
  %v163 = vunpack.c.l.b16 %v19
  %v164 = vunpack.c.l.b16 %v20
  %v165 = vunpack.c.l.b16 %v21
  %v166 = vunpack.c.l.b16 %v22
  %v167 = vunpack.c.l.b16 %v23
  %v168 = vunpack.c.l.b16 %v24
  %v169 = vunpack.c.l.b16 %v25
  %v170 = vunpack.c.l.b16 %v26
  %v171 = vunpack.c.l.b16 %v27
  %v172 = vunpack.c.l.b16 %v28
  %v173 = vunpack.c.l.b16 %v29
  %v174 = vunpack.c.l.b16 %v30
  %v175 = vunpack.c.l.b16 %v31
  %v176 = vunpack.c.l.b16 %v32
  %v177 = vunpack.c.l.b16 %v33
  %v178 = vunpack.c.l.b16 %v34
  %v179 = vunpack.c.l.b16 %v35
  %v180 = vunpack.c.l.b16 %v36
  %v181 = vunpack.c.l.b16 %v37
  %v182 = vunpack.c.l.b16 %v38
  %v183 = vunpack.c.l.b16 %v39
  %v184 = vunpack.c.l.b16 %v40
  %v185 = vunpack.c.l.b16 %v41
  %v186 = vunpack.c.l.b16 %v42
  %v187 = vunpack.c.l.b16 %v43
  %v188 = vunpack.c.l.b16 %v44
  %v189 = vunpack.c.l.b16 %v45
  %v190 = vunpack.c.l.b16 %v46
  %v191 = vunpack.c.l.b16 %v47
  %v192 = vunpack.c.l.b16 %v48
  %v193 = vunpack.c.l.b16 %v49
  %v194 = vunpack.c.l.b16 %v50
  %v195 = vunpack.c.l.b16 %v51
  %v196 = vunpack.c.l.b16 %v52
  %v197 = vunpack.c.l.b16 %v53
  %v198 = vunpack.c.l.b16 %v54
  %v199 = vunpack.c.l.b16 %v55
  %v200 = vunpack.c.l.b16 %v56
  %v201 = vunpack.c.l.b16 %v57
  %v202 = vunpack.c.l.b16 %v58
  %v203 = vunpack.c.l.b16 %v59
  %v204 = vunpack.c.l.b16 %v60
  %v205 = vunpack.c.l.b16 %v61
  %v206 = vunpack.c.l.b16 %v62
  %v207 = vunpack.c.l.b16 %v63
  %v208 = vunpack.c.l.b16 %v64
  %v209 = vunpack.c.l.b16 %v65
  %v210 = vunpack.c.l.b16 %v66
  %v211 = vunpack.c.l.b16 %v67
  %v212 = vunpack.c.l.b16 %v68
  %v213 = vunpack.c.l.b16 %v69
  %v214 = vunpack.c.l.b16 %v70
  %v215 = vunpack.c.l.b16 %v71
  %v216 = vunpack.c.l.b16 %v72
  %v217 = vunpack.c.l.b16 %v73
  %v218 = vunpack.c.l.b16 %v74
  %v219 = vunpack.c.l.b16 %v75
  %v220 = vunpack.c.l.b16 %v76
  %v221 = vunpack.c.l.b16 %v77
  %v222 = vunpack.c.l.b16 %v78
  %v223 = vunpack.c.l.b16 %v79
  %v224 = vunpack.c.l.b16 %v80
  %v225 = vunpack.c.l.b16 %v81
  %v226 = vpack.c.b16 %v163, %v162
  %v227 = vpack.c.b16 %v165, %v164
  %v228 = vpack.c.b16 %v167, %v166
  %v229 = vpack.c.b16 %v169, %v168
  %v230 = vpack.c.b16 %v171, %v170
  %v231 = vpack.c.b16 %v173, %v172
  %v232 = vpack.c.b16 %v175, %v174
  %v233 = vpack.c.b16 %v177, %v176
  %v234 = vpack.c.b16 %v179, %v178
  %v235 = vpack.c.b16 %v181, %v180
  %v236 = vpack.c.b16 %v183, %v182
  %v237 = vpack.c.b16 %v185, %v184
  %v238 = vpack.c.b16 %v187, %v186
  %v239 = vpack.c.b16 %v189, %v188
  %v240 = vpack.c.b16 %v191, %v190
  %v241 = vpack.c.b16 %v193, %v192
  %v242 = vpack.c.b16 %v195, %v194
  %v243 = vpack.c.b16 %v197, %v196
  %v244 = vpack.c.b16 %v199, %v198
  %v245 = vpack.c.b16 %v201, %v200
  %v246 = vpack.c.b16 %v203, %v202
  %v247 = vpack.c.b16 %v205, %v204
  %v248 = vpack.c.b16 %v207, %v206
  %v249 = vpack.c.b16 %v209, %v208
  %v250 = vpack.c.b16 %v211, %v210
  %v251 = vpack.c.b16 %v213, %v212
  %v252 = vpack.c.b16 %v215, %v214
  %v253 = vpack.c.b16 %v217, %v216
  %v254 = vpack.c.b16 %v219, %v218
  %v255 = vpack.c.b16 %v221, %v220
  %v256 = vpack.c.b16 %v223, %v222
  %v257 = vpack.c.b16 %v225, %v224
  %v306 = vunpack.c.l.b16 %v82
  %v307 = vunpack.c.l.b16 %v83
  %v308 = vunpack.c.l.b16 %v84
  %v309 = vunpack.c.l.b16 %v85
  %v310 = vunpack.c.l.b16 %v86
  %v311 = vunpack.c.l.b16 %v87
  %v312 = vunpack.c.l.b16 %v88
  %v313 = vunpack.c.l.b16 %v89
  %v314 = vunpack.c.l.b16 %v90
  %v315 = vunpack.c.l.b16 %v91
  %v316 = vunpack.c.l.b16 %v92
  %v317 = vunpack.c.l.b16 %v93
  %v318 = vunpack.c.l.b16 %v94
  %v319 = vunpack.c.l.b16 %v95
  %v320 = vunpack.c.l.b16 %v96
  %v321 = vunpack.c.l.b16 %v97
  %v322 = vpack.c.b16 %v307, %v306
  %v323 = vpack.c.b16 %v309, %v308
  %v324 = vpack.c.b16 %v311, %v310
  %v325 = vpack.c.b16 %v313, %v312
  %v326 = vpack.c.b16 %v315, %v314
  %v327 = vpack.c.b16 %v317, %v316
  %v328 = vpack.c.b16 %v319, %v318
  %v329 = vpack.c.b16 %v321, %v320
  %338 = vmatprep.subr.bf16.mxu0 0
  %339 = vmatpush1.bf16.msra.mxu0 %v329
  %340 = vmatprep.subr.bf16.mxu0 0
  %341 = vmatpush1.bf16.msra.mxu0 %v328
  %342 = vmatprep.subr.bf16.mxu0 0
  %343 = vmatpush1.bf16.msra.mxu0 %v327
  %344 = vmatprep.subr.bf16.mxu0 0
  %345 = vmatpush1.bf16.msra.mxu0 %v326
  %346 = vmatprep.subr.bf16.mxu0 0
  %347 = vmatpush1.bf16.msra.mxu0 %v325
  %348 = vmatprep.subr.bf16.mxu0 0
  %349 = vmatpush1.bf16.msra.mxu0 %v324
  %350 = vmatprep.subr.bf16.mxu0 0
  %351 = vmatpush1.bf16.msra.mxu0 %v323
  %352 = vmatprep.subr.bf16.mxu0 0
  %353 = vmatpush1.bf16.msra.mxu0 %v322
  %354 = vmatprep.subr.bf16.mxu0 0
  %355 = vmatpush2.bf16.msra.mxu0 0
  %356 = vmatprep.subr.bf16.mxu0 0
  %357 = vmatpush2.bf16.msra.mxu0 0
  %358 = vmatprep.subr.bf16.mxu0 0
  %359 = vmatpush2.bf16.msra.mxu0 0
  %360 = vmatprep.subr.bf16.mxu0 0
  %361 = vmatpush2.bf16.msra.mxu0 0
  %362 = vmatprep.subr.bf16.mxu0 0
  %363 = vmatpush2.bf16.msra.mxu0 0
  %364 = vmatprep.subr.bf16.mxu0 0
  %365 = vmatpush2.bf16.msra.mxu0 0
  %366 = vmatprep.subr.bf16.mxu0 0
  %367 = vmatpush2.bf16.msra.mxu0 0
  %368 = vmatprep.subr.bf16.mxu0 0
  %369 = vmatpush2.bf16.msra.mxu0 0
  %370 = vmatprep.mubr.bf16.mxu0 0
  %371 = vmatmul.mubr.bf16.gmra.mxu0 %v226
  %v372 = vpop.f32.mrf.mxu0
  %v373 = vadd.f32 0.0, %v372
  %v374 = vpop.f32.mrf.mxu0
  %v375 = vpop.f32.mrf.mxu0
  %v376 = vadd.f32 0.0, %v375
  %v377 = vpop.f32.mrf.mxu0
  %378 = vmatprep.mubr.bf16.mxu0 0
  %379 = vmatmul.mubr.bf16.gmra.mxu0 %v227
  %v380 = vpop.f32.mrf.mxu0
  %v381 = vadd.f32 0.0, %v380
  %v382 = vpop.f32.mrf.mxu0
  %v383 = vpop.f32.mrf.mxu0
  %v384 = vadd.f32 0.0, %v383
  %v385 = vpop.f32.mrf.mxu0
  %386 = vmatprep.mubr.bf16.mxu0 0
  %387 = vmatmul.mubr.bf16.gmra.mxu0 %v228
  %v388 = vpop.f32.mrf.mxu0
  %v389 = vadd.f32 0.0, %v388
  %v390 = vpop.f32.mrf.mxu0
  %v391 = vpop.f32.mrf.mxu0
  %v392 = vadd.f32 0.0, %v391
  %v393 = vpop.f32.mrf.mxu0
  %394 = vmatprep.mubr.bf16.mxu0 0
  %395 = vmatmul.mubr.bf16.gmra.mxu0 %v229
  %v396 = vpop.f32.mrf.mxu0
  %v397 = vadd.f32 0.0, %v396
  %v398 = vpop.f32.mrf.mxu0
  %v399 = vpop.f32.mrf.mxu0
  %v400 = vadd.f32 0.0, %v399
  %v401 = vpop.f32.mrf.mxu0
  %402 = vmatprep.mubr.bf16.mxu0 0
  %403 = vmatmul.mubr.bf16.gmra.mxu0 %v230
  %v404 = vpop.f32.mrf.mxu0
  %v405 = vadd.f32 0.0, %v404
  %v406 = vpop.f32.mrf.mxu0
  %v407 = vpop.f32.mrf.mxu0
  %v408 = vadd.f32 0.0, %v407
  %v409 = vpop.f32.mrf.mxu0
  %410 = vmatprep.mubr.bf16.mxu0 0
  %411 = vmatmul.mubr.bf16.gmra.mxu0 %v231
  %v412 = vpop.f32.mrf.mxu0
  %v413 = vadd.f32 0.0, %v412
  %v414 = vpop.f32.mrf.mxu0
  %v415 = vpop.f32.mrf.mxu0
  %v416 = vadd.f32 0.0, %v415
  %v417 = vpop.f32.mrf.mxu0
  %418 = vmatprep.mubr.bf16.mxu0 0
  %419 = vmatmul.mubr.bf16.gmra.mxu0 %v232
  %v420 = vpop.f32.mrf.mxu0
  %v421 = vadd.f32 0.0, %v420
  %v422 = vpop.f32.mrf.mxu0
  %v423 = vpop.f32.mrf.mxu0
  %v424 = vadd.f32 0.0, %v423
  %v425 = vpop.f32.mrf.mxu0
  %426 = vmatprep.mubr.bf16.mxu0 0
  %427 = vmatmul.mubr.bf16.gmra.mxu0 %v233
  %v428 = vpop.f32.mrf.mxu0
  %v429 = vadd.f32 0.0, %v428
  %v430 = vpop.f32.mrf.mxu0
  %v431 = vpop.f32.mrf.mxu0
  %v432 = vadd.f32 0.0, %v431
  %v433 = vpop.f32.mrf.mxu0
  %434 = vmatprep.mubr.bf16.mxu0 0
  %435 = vmatmul.mubr.bf16.gmra.mxu0 %v234
  %v436 = vpop.f32.mrf.mxu0
  %v437 = vadd.f32 0.0, %v436
  %v438 = vpop.f32.mrf.mxu0
  %v439 = vpop.f32.mrf.mxu0
  %v440 = vadd.f32 0.0, %v439
  %v441 = vpop.f32.mrf.mxu0
  %442 = vmatprep.mubr.bf16.mxu0 0
  %443 = vmatmul.mubr.bf16.gmra.mxu0 %v235
  %v444 = vpop.f32.mrf.mxu0
  %v445 = vadd.f32 0.0, %v444
  %v446 = vpop.f32.mrf.mxu0
  %v447 = vpop.f32.mrf.mxu0
  %v448 = vadd.f32 0.0, %v447
  %v449 = vpop.f32.mrf.mxu0
  %450 = vmatprep.mubr.bf16.mxu0 0
  %451 = vmatmul.mubr.bf16.gmra.mxu0 %v236
  %v452 = vpop.f32.mrf.mxu0
  %v453 = vadd.f32 0.0, %v452
  %v454 = vpop.f32.mrf.mxu0
  %v455 = vpop.f32.mrf.mxu0
  %v456 = vadd.f32 0.0, %v455
  %v457 = vpop.f32.mrf.mxu0
  %458 = vmatprep.mubr.bf16.mxu0 0
  %459 = vmatmul.mubr.bf16.gmra.mxu0 %v237
  %v460 = vpop.f32.mrf.mxu0
  %v461 = vadd.f32 0.0, %v460
  %v462 = vpop.f32.mrf.mxu0
  %v463 = vpop.f32.mrf.mxu0
  %v464 = vadd.f32 0.0, %v463
  %v465 = vpop.f32.mrf.mxu0
  %466 = vmatprep.mubr.bf16.mxu0 0
  %467 = vmatmul.mubr.bf16.gmra.mxu0 %v238
  %v468 = vpop.f32.mrf.mxu0
  %v469 = vadd.f32 0.0, %v468
  %v470 = vpop.f32.mrf.mxu0
  %v471 = vpop.f32.mrf.mxu0
  %v472 = vadd.f32 0.0, %v471
  %v473 = vpop.f32.mrf.mxu0
  %474 = vmatprep.mubr.bf16.mxu0 0
  %475 = vmatmul.mubr.bf16.gmra.mxu0 %v239
  %v476 = vpop.f32.mrf.mxu0
  %v477 = vadd.f32 0.0, %v476
  %v478 = vpop.f32.mrf.mxu0
  %v479 = vpop.f32.mrf.mxu0
  %v480 = vadd.f32 0.0, %v479
  %v481 = vpop.f32.mrf.mxu0
  %482 = vmatprep.mubr.bf16.mxu0 0
  %483 = vmatmul.mubr.bf16.gmra.mxu0 %v240
  %v484 = vpop.f32.mrf.mxu0
  %v485 = vadd.f32 0.0, %v484
  %v486 = vpop.f32.mrf.mxu0
  %v487 = vpop.f32.mrf.mxu0
  %v488 = vadd.f32 0.0, %v487
  %v489 = vpop.f32.mrf.mxu0
  %490 = vmatprep.mubr.bf16.mxu0 0
  %491 = vmatmul.mubr.bf16.gmra.mxu0 %v241
  %v492 = vpop.f32.mrf.mxu0
  %v493 = vadd.f32 0.0, %v492
  %v494 = vpop.f32.mrf.mxu0
  %v495 = vpop.f32.mrf.mxu0
  %v496 = vadd.f32 0.0, %v495
  %v497 = vpop.f32.mrf.mxu0
  %498 = vmatprep.mubr.bf16.mxu0 0
  %499 = vmatmul.mubr.bf16.gmra.mxu0 %v242
  %v500 = vpop.f32.mrf.mxu0
  %v501 = vadd.f32 0.0, %v500
  %v502 = vpop.f32.mrf.mxu0
  %v503 = vpop.f32.mrf.mxu0
  %v504 = vadd.f32 0.0, %v503
  %v505 = vpop.f32.mrf.mxu0
  %506 = vmatprep.mubr.bf16.mxu0 0
  %507 = vmatmul.mubr.bf16.gmra.mxu0 %v243
  %v508 = vpop.f32.mrf.mxu0
  %v509 = vadd.f32 0.0, %v508
  %v510 = vpop.f32.mrf.mxu0
  %v511 = vpop.f32.mrf.mxu0
  %v512 = vadd.f32 0.0, %v511
  %v513 = vpop.f32.mrf.mxu0
  %514 = vmatprep.mubr.bf16.mxu0 0
  %515 = vmatmul.mubr.bf16.gmra.mxu0 %v244
  %v516 = vpop.f32.mrf.mxu0
  %v517 = vadd.f32 0.0, %v516
  %v518 = vpop.f32.mrf.mxu0
  %v519 = vpop.f32.mrf.mxu0
  %v520 = vadd.f32 0.0, %v519
  %v521 = vpop.f32.mrf.mxu0
  %522 = vmatprep.mubr.bf16.mxu0 0
  %523 = vmatmul.mubr.bf16.gmra.mxu0 %v245
  %v524 = vpop.f32.mrf.mxu0
  %v525 = vadd.f32 0.0, %v524
  %v526 = vpop.f32.mrf.mxu0
  %v527 = vpop.f32.mrf.mxu0
  %v528 = vadd.f32 0.0, %v527
  %v529 = vpop.f32.mrf.mxu0
  %530 = vmatprep.mubr.bf16.mxu0 0
  %531 = vmatmul.mubr.bf16.gmra.mxu0 %v246
  %v532 = vpop.f32.mrf.mxu0
  %v533 = vadd.f32 0.0, %v532
  %v534 = vpop.f32.mrf.mxu0
  %v535 = vpop.f32.mrf.mxu0
  %v536 = vadd.f32 0.0, %v535
  %v537 = vpop.f32.mrf.mxu0
  %538 = vmatprep.mubr.bf16.mxu0 0
  %539 = vmatmul.mubr.bf16.gmra.mxu0 %v247
  %v540 = vpop.f32.mrf.mxu0
  %v541 = vadd.f32 0.0, %v540
  %v542 = vpop.f32.mrf.mxu0
  %v543 = vpop.f32.mrf.mxu0
  %v544 = vadd.f32 0.0, %v543
  %v545 = vpop.f32.mrf.mxu0
  %546 = vmatprep.mubr.bf16.mxu0 0
  %547 = vmatmul.mubr.bf16.gmra.mxu0 %v248
  %v548 = vpop.f32.mrf.mxu0
  %v549 = vadd.f32 0.0, %v548
  %v550 = vpop.f32.mrf.mxu0
  %v551 = vpop.f32.mrf.mxu0
  %v552 = vadd.f32 0.0, %v551
  %v553 = vpop.f32.mrf.mxu0
  %554 = vmatprep.mubr.bf16.mxu0 0
  %555 = vmatmul.mubr.bf16.gmra.mxu0 %v249
  %v556 = vpop.f32.mrf.mxu0
  %v557 = vadd.f32 0.0, %v556
  %v558 = vpop.f32.mrf.mxu0
  %v559 = vpop.f32.mrf.mxu0
  %v560 = vadd.f32 0.0, %v559
  %v561 = vpop.f32.mrf.mxu0
  %562 = vmatprep.mubr.bf16.mxu0 0
  %563 = vmatmul.mubr.bf16.gmra.mxu0 %v250
  %v564 = vpop.f32.mrf.mxu0
  %v565 = vadd.f32 0.0, %v564
  %v566 = vpop.f32.mrf.mxu0
  %v567 = vpop.f32.mrf.mxu0
  %v568 = vadd.f32 0.0, %v567
  %v569 = vpop.f32.mrf.mxu0
  %570 = vmatprep.mubr.bf16.mxu0 0
  %571 = vmatmul.mubr.bf16.gmra.mxu0 %v251
  %v572 = vpop.f32.mrf.mxu0
  %v573 = vadd.f32 0.0, %v572
  %v574 = vpop.f32.mrf.mxu0
  %v575 = vpop.f32.mrf.mxu0
  %v576 = vadd.f32 0.0, %v575
  %v577 = vpop.f32.mrf.mxu0
  %578 = vmatprep.mubr.bf16.mxu0 0
  %579 = vmatmul.mubr.bf16.gmra.mxu0 %v252
  %v580 = vpop.f32.mrf.mxu0
  %v581 = vadd.f32 0.0, %v580
  %v582 = vpop.f32.mrf.mxu0
  %v583 = vpop.f32.mrf.mxu0
  %v584 = vadd.f32 0.0, %v583
  %v585 = vpop.f32.mrf.mxu0
  %586 = vmatprep.mubr.bf16.mxu0 0
  %587 = vmatmul.mubr.bf16.gmra.mxu0 %v253
  %v588 = vpop.f32.mrf.mxu0
  %v589 = vadd.f32 0.0, %v588
  %v590 = vpop.f32.mrf.mxu0
  %v591 = vpop.f32.mrf.mxu0
  %v592 = vadd.f32 0.0, %v591
  %v593 = vpop.f32.mrf.mxu0
  %594 = vmatprep.mubr.bf16.mxu0 0
  %595 = vmatmul.mubr.bf16.gmra.mxu0 %v254
  %v596 = vpop.f32.mrf.mxu0
  %v597 = vadd.f32 0.0, %v596
  %v598 = vpop.f32.mrf.mxu0
  %v599 = vpop.f32.mrf.mxu0
  %v600 = vadd.f32 0.0, %v599
  %v601 = vpop.f32.mrf.mxu0
  %602 = vmatprep.mubr.bf16.mxu0 0
  %603 = vmatmul.mubr.bf16.gmra.mxu0 %v255
  %v604 = vpop.f32.mrf.mxu0
  %v605 = vadd.f32 0.0, %v604
  %v606 = vpop.f32.mrf.mxu0
  %v607 = vpop.f32.mrf.mxu0
  %v608 = vadd.f32 0.0, %v607
  %v609 = vpop.f32.mrf.mxu0
  %610 = vmatprep.mubr.bf16.mxu0 0
  %611 = vmatmul.mubr.bf16.gmra.mxu0 %v256
  %v612 = vpop.f32.mrf.mxu0
  %v613 = vadd.f32 0.0, %v612
  %v614 = vpop.f32.mrf.mxu0
  %v615 = vpop.f32.mrf.mxu0
  %v616 = vadd.f32 0.0, %v615
  %v617 = vpop.f32.mrf.mxu0
  %618 = vmatprep.mubr.bf16.mxu0 0
  %619 = vmatmul.mubr.bf16.gmra.mxu0 %v257
  %v620 = vpop.f32.mrf.mxu0
  %v621 = vadd.f32 0.0, %v620
  %v622 = vpop.f32.mrf.mxu0
  %v623 = vpop.f32.mrf.mxu0
  %v624 = vadd.f32 0.0, %v623
  %v625 = vpop.f32.mrf.mxu0
  %626 = vdwg.mxu0
  %v627 = vld [vmem:[%s2] sm:$0x1]
  %v629 = vlaneseq
  %v630 = vshrl.u32 %v629, 7
  %v631 = vsub.s32 0, %v630
  %v632 = vrot.slane %v627, %v631
  %v634 = vmul.f32 %v373, %v632
  %v635 = vmul.f32 %v376, %v632
  %v636 = vmul.f32 %v381, %v632
  %v637 = vmul.f32 %v384, %v632
  %v638 = vmul.f32 %v389, %v632
  %v639 = vmul.f32 %v392, %v632
  %v640 = vmul.f32 %v397, %v632
  %v641 = vmul.f32 %v400, %v632
  %v642 = vmul.f32 %v405, %v632
  %v643 = vmul.f32 %v408, %v632
  %v644 = vmul.f32 %v413, %v632
  %v645 = vmul.f32 %v416, %v632
  %v646 = vmul.f32 %v421, %v632
  %v647 = vmul.f32 %v424, %v632
  %v648 = vmul.f32 %v429, %v632
  %v649 = vmul.f32 %v432, %v632
  %v650 = vmul.f32 %v437, %v632
  %v651 = vmul.f32 %v440, %v632
  %v652 = vmul.f32 %v445, %v632
  %v653 = vmul.f32 %v448, %v632
  %v654 = vmul.f32 %v453, %v632
  %v655 = vmul.f32 %v456, %v632
  %v656 = vmul.f32 %v461, %v632
  %v657 = vmul.f32 %v464, %v632
  %v658 = vmul.f32 %v469, %v632
  %v659 = vmul.f32 %v472, %v632
  %v660 = vmul.f32 %v477, %v632
  %v661 = vmul.f32 %v480, %v632
  %v662 = vmul.f32 %v485, %v632
  %v663 = vmul.f32 %v488, %v632
  %v664 = vmul.f32 %v493, %v632
  %v665 = vmul.f32 %v496, %v632
  %v666 = vmul.f32 %v501, %v632
  %v667 = vmul.f32 %v504, %v632
  %v668 = vmul.f32 %v509, %v632
  %v669 = vmul.f32 %v512, %v632
  %v670 = vmul.f32 %v517, %v632
  %v671 = vmul.f32 %v520, %v632
  %v672 = vmul.f32 %v525, %v632
  %v673 = vmul.f32 %v528, %v632
  %v674 = vmul.f32 %v533, %v632
  %v675 = vmul.f32 %v536, %v632
  %v676 = vmul.f32 %v541, %v632
  %v677 = vmul.f32 %v544, %v632
  %v678 = vmul.f32 %v549, %v632
  %v679 = vmul.f32 %v552, %v632
  %v680 = vmul.f32 %v557, %v632
  %v681 = vmul.f32 %v560, %v632
  %v682 = vmul.f32 %v565, %v632
  %v683 = vmul.f32 %v568, %v632
  %v684 = vmul.f32 %v573, %v632
  %v685 = vmul.f32 %v576, %v632
  %v686 = vmul.f32 %v581, %v632
  %v687 = vmul.f32 %v584, %v632
  %v688 = vmul.f32 %v589, %v632
  %v689 = vmul.f32 %v592, %v632
  %v690 = vmul.f32 %v597, %v632
  %v691 = vmul.f32 %v600, %v632
  %v692 = vmul.f32 %v605, %v632
  %v693 = vmul.f32 %v608, %v632
  %v694 = vmul.f32 %v613, %v632
  %v695 = vmul.f32 %v616, %v632
  %v696 = vmul.f32 %v621, %v632
  %v697 = vmul.f32 %v624, %v632
  %v698 = vld [vmem:[%s3] sm:$0x1]
  %v700 = vlaneseq
  %v701 = vshrl.u32 %v700, 7
  %v702 = vsub.s32 0, %v701
  %v703 = vrot.slane %v698, %v702
  %v705 = vadd.f32 %v634, %v703
  %v706 = vadd.f32 %v635, %v703
  %v707 = vadd.f32 %v636, %v703
  %v708 = vadd.f32 %v637, %v703
  %v709 = vadd.f32 %v638, %v703
  %v710 = vadd.f32 %v639, %v703
  %v711 = vadd.f32 %v640, %v703
  %v712 = vadd.f32 %v641, %v703
  %v713 = vadd.f32 %v642, %v703
  %v714 = vadd.f32 %v643, %v703
  %v715 = vadd.f32 %v644, %v703
  %v716 = vadd.f32 %v645, %v703
  %v717 = vadd.f32 %v646, %v703
  %v718 = vadd.f32 %v647, %v703
  %v719 = vadd.f32 %v648, %v703
  %v720 = vadd.f32 %v649, %v703
  %v721 = vadd.f32 %v650, %v703
  %v722 = vadd.f32 %v651, %v703
  %v723 = vadd.f32 %v652, %v703
  %v724 = vadd.f32 %v653, %v703
  %v725 = vadd.f32 %v654, %v703
  %v726 = vadd.f32 %v655, %v703
  %v727 = vadd.f32 %v656, %v703
  %v728 = vadd.f32 %v657, %v703
  %v729 = vadd.f32 %v658, %v703
  %v730 = vadd.f32 %v659, %v703
  %v731 = vadd.f32 %v660, %v703
  %v732 = vadd.f32 %v661, %v703
  %v733 = vadd.f32 %v662, %v703
  %v734 = vadd.f32 %v663, %v703
  %v735 = vadd.f32 %v664, %v703
  %v736 = vadd.f32 %v665, %v703
  %v737 = vadd.f32 %v666, %v703
  %v738 = vadd.f32 %v667, %v703
  %v739 = vadd.f32 %v668, %v703
  %v740 = vadd.f32 %v669, %v703
  %v741 = vadd.f32 %v670, %v703
  %v742 = vadd.f32 %v671, %v703
  %v743 = vadd.f32 %v672, %v703
  %v744 = vadd.f32 %v673, %v703
  %v745 = vadd.f32 %v674, %v703
  %v746 = vadd.f32 %v675, %v703
  %v747 = vadd.f32 %v676, %v703
  %v748 = vadd.f32 %v677, %v703
  %v749 = vadd.f32 %v678, %v703
  %v750 = vadd.f32 %v679, %v703
  %v751 = vadd.f32 %v680, %v703
  %v752 = vadd.f32 %v681, %v703
  %v753 = vadd.f32 %v682, %v703
  %v754 = vadd.f32 %v683, %v703
  %v755 = vadd.f32 %v684, %v703
  %v756 = vadd.f32 %v685, %v703
  %v757 = vadd.f32 %v686, %v703
  %v758 = vadd.f32 %v687, %v703
  %v759 = vadd.f32 %v688, %v703
  %v760 = vadd.f32 %v689, %v703
  %v761 = vadd.f32 %v690, %v703
  %v762 = vadd.f32 %v691, %v703
  %v763 = vadd.f32 %v692, %v703
  %v764 = vadd.f32 %v693, %v703
  %v765 = vadd.f32 %v694, %v703
  %v766 = vadd.f32 %v695, %v703
  %v767 = vadd.f32 %v696, %v703
  %v768 = vadd.f32 %v697, %v703
  %v769 = vmax.f32 %v705, 0.0
  %v770 = vmax.f32 %v706, 0.0
  %v771 = vmax.f32 %v707, 0.0
  %v772 = vmax.f32 %v708, 0.0
  %v773 = vmax.f32 %v709, 0.0
  %v774 = vmax.f32 %v710, 0.0
  %v775 = vmax.f32 %v711, 0.0
  %v776 = vmax.f32 %v712, 0.0
  %v777 = vmax.f32 %v713, 0.0
  %v778 = vmax.f32 %v714, 0.0
  %v779 = vmax.f32 %v715, 0.0
  %v780 = vmax.f32 %v716, 0.0
  %v781 = vmax.f32 %v717, 0.0
  %v782 = vmax.f32 %v718, 0.0
  %v783 = vmax.f32 %v719, 0.0
  %v784 = vmax.f32 %v720, 0.0
  %v785 = vmax.f32 %v721, 0.0
  %v786 = vmax.f32 %v722, 0.0
  %v787 = vmax.f32 %v723, 0.0
  %v788 = vmax.f32 %v724, 0.0
  %v789 = vmax.f32 %v725, 0.0
  %v790 = vmax.f32 %v726, 0.0
  %v791 = vmax.f32 %v727, 0.0
  %v792 = vmax.f32 %v728, 0.0
  %v793 = vmax.f32 %v729, 0.0
  %v794 = vmax.f32 %v730, 0.0
  %v795 = vmax.f32 %v731, 0.0
  %v796 = vmax.f32 %v732, 0.0
  %v797 = vmax.f32 %v733, 0.0
  %v798 = vmax.f32 %v734, 0.0
  %v799 = vmax.f32 %v735, 0.0
  %v800 = vmax.f32 %v736, 0.0
  %v801 = vmax.f32 %v737, 0.0
  %v802 = vmax.f32 %v738, 0.0
  %v803 = vmax.f32 %v739, 0.0
  %v804 = vmax.f32 %v740, 0.0
  %v805 = vmax.f32 %v741, 0.0
  %v806 = vmax.f32 %v742, 0.0
  %v807 = vmax.f32 %v743, 0.0
  %v808 = vmax.f32 %v744, 0.0
  %v809 = vmax.f32 %v745, 0.0
  %v810 = vmax.f32 %v746, 0.0
  %v811 = vmax.f32 %v747, 0.0
  %v812 = vmax.f32 %v748, 0.0
  %v813 = vmax.f32 %v749, 0.0
  %v814 = vmax.f32 %v750, 0.0
  %v815 = vmax.f32 %v751, 0.0
  %v816 = vmax.f32 %v752, 0.0
  %v817 = vmax.f32 %v753, 0.0
  %v818 = vmax.f32 %v754, 0.0
  %v819 = vmax.f32 %v755, 0.0
  %v820 = vmax.f32 %v756, 0.0
  %v821 = vmax.f32 %v757, 0.0
  %v822 = vmax.f32 %v758, 0.0
  %v823 = vmax.f32 %v759, 0.0
  %v824 = vmax.f32 %v760, 0.0
  %v825 = vmax.f32 %v761, 0.0
  %v826 = vmax.f32 %v762, 0.0
  %v827 = vmax.f32 %v763, 0.0
  %v828 = vmax.f32 %v764, 0.0
  %v829 = vmax.f32 %v765, 0.0
  %v830 = vmax.f32 %v766, 0.0
  %v831 = vmax.f32 %v767, 0.0
  %v832 = vmax.f32 %v768, 0.0
  %v833 = vpack.c.bf16 %v770, %v769
  %v834 = vpack.c.bf16 %v772, %v771
  %v835 = vpack.c.bf16 %v774, %v773
  %v836 = vpack.c.bf16 %v776, %v775
  %v837 = vpack.c.bf16 %v778, %v777
  %v838 = vpack.c.bf16 %v780, %v779
  %v839 = vpack.c.bf16 %v782, %v781
  %v840 = vpack.c.bf16 %v784, %v783
  %v841 = vpack.c.bf16 %v786, %v785
  %v842 = vpack.c.bf16 %v788, %v787
  %v843 = vpack.c.bf16 %v790, %v789
  %v844 = vpack.c.bf16 %v792, %v791
  %v845 = vpack.c.bf16 %v794, %v793
  %v846 = vpack.c.bf16 %v796, %v795
  %v847 = vpack.c.bf16 %v798, %v797
  %v848 = vpack.c.bf16 %v800, %v799
  %v849 = vpack.c.bf16 %v802, %v801
  %v850 = vpack.c.bf16 %v804, %v803
  %v851 = vpack.c.bf16 %v806, %v805
  %v852 = vpack.c.bf16 %v808, %v807
  %v853 = vpack.c.bf16 %v810, %v809
  %v854 = vpack.c.bf16 %v812, %v811
  %v855 = vpack.c.bf16 %v814, %v813
  %v856 = vpack.c.bf16 %v816, %v815
  %v857 = vpack.c.bf16 %v818, %v817
  %v858 = vpack.c.bf16 %v820, %v819
  %v859 = vpack.c.bf16 %v822, %v821
  %v860 = vpack.c.bf16 %v824, %v823
  %v861 = vpack.c.bf16 %v826, %v825
  %v862 = vpack.c.bf16 %v828, %v827
  %v863 = vpack.c.bf16 %v830, %v829
  %v864 = vpack.c.bf16 %v832, %v831
  %v897 = vunpack.c.l.b16 %v833
  %v898 = vunpack.c.h.b16 %v833
  %v899 = vunpack.c.l.b16 %v834
  %v900 = vunpack.c.h.b16 %v834
  %v901 = vunpack.c.l.b16 %v835
  %v902 = vunpack.c.h.b16 %v835
  %v903 = vunpack.c.l.b16 %v836
  %v904 = vunpack.c.h.b16 %v836
  %v905 = vunpack.c.l.b16 %v837
  %v906 = vunpack.c.h.b16 %v837
  %v907 = vunpack.c.l.b16 %v838
  %v908 = vunpack.c.h.b16 %v838
  %v909 = vunpack.c.l.b16 %v839
  %v910 = vunpack.c.h.b16 %v839
  %v911 = vunpack.c.l.b16 %v840
  %v912 = vunpack.c.h.b16 %v840
  %v913 = vunpack.c.l.b16 %v841
  %v914 = vunpack.c.h.b16 %v841
  %v915 = vunpack.c.l.b16 %v842
  %v916 = vunpack.c.h.b16 %v842
  %v917 = vunpack.c.l.b16 %v843
  %v918 = vunpack.c.h.b16 %v843
  %v919 = vunpack.c.l.b16 %v844
  %v920 = vunpack.c.h.b16 %v844
  %v921 = vunpack.c.l.b16 %v845
  %v922 = vunpack.c.h.b16 %v845
  %v923 = vunpack.c.l.b16 %v846
  %v924 = vunpack.c.h.b16 %v846
  %v925 = vunpack.c.l.b16 %v847
  %v926 = vunpack.c.h.b16 %v847
  %v927 = vunpack.c.l.b16 %v848
  %v928 = vunpack.c.h.b16 %v848
  %v929 = vunpack.c.l.b16 %v849
  %v930 = vunpack.c.h.b16 %v849
  %v931 = vunpack.c.l.b16 %v850
  %v932 = vunpack.c.h.b16 %v850
  %v933 = vunpack.c.l.b16 %v851
  %v934 = vunpack.c.h.b16 %v851
  %v935 = vunpack.c.l.b16 %v852
  %v936 = vunpack.c.h.b16 %v852
  %v937 = vunpack.c.l.b16 %v853
  %v938 = vunpack.c.h.b16 %v853
  %v939 = vunpack.c.l.b16 %v854
  %v940 = vunpack.c.h.b16 %v854
  %v941 = vunpack.c.l.b16 %v855
  %v942 = vunpack.c.h.b16 %v855
  %v943 = vunpack.c.l.b16 %v856
  %v944 = vunpack.c.h.b16 %v856
  %v945 = vunpack.c.l.b16 %v857
  %v946 = vunpack.c.h.b16 %v857
  %v947 = vunpack.c.l.b16 %v858
  %v948 = vunpack.c.h.b16 %v858
  %v949 = vunpack.c.l.b16 %v859
  %v950 = vunpack.c.h.b16 %v859
  %v951 = vunpack.c.l.b16 %v860
  %v952 = vunpack.c.h.b16 %v860
  %v953 = vunpack.c.l.b16 %v861
  %v954 = vunpack.c.h.b16 %v861
  %v955 = vunpack.c.l.b16 %v862
  %v956 = vunpack.c.h.b16 %v862
  %v957 = vunpack.c.l.b16 %v863
  %v958 = vunpack.c.h.b16 %v863
  %v959 = vunpack.c.l.b16 %v864
  %v960 = vunpack.c.h.b16 %v864
  %v961 = vpack.c.b16 %v897, %v897
  %v962 = vpack.c.b16 %v898, %v898
  %v963 = vpack.c.b16 %v899, %v899
  %v964 = vpack.c.b16 %v900, %v900
  %v965 = vpack.c.b16 %v901, %v901
  %v966 = vpack.c.b16 %v902, %v902
  %v967 = vpack.c.b16 %v903, %v903
  %v968 = vpack.c.b16 %v904, %v904
  %v969 = vpack.c.b16 %v905, %v905
  %v970 = vpack.c.b16 %v906, %v906
  %v971 = vpack.c.b16 %v907, %v907
  %v972 = vpack.c.b16 %v908, %v908
  %v973 = vpack.c.b16 %v909, %v909
  %v974 = vpack.c.b16 %v910, %v910
  %v975 = vpack.c.b16 %v911, %v911
  %v976 = vpack.c.b16 %v912, %v912
  %v977 = vpack.c.b16 %v913, %v913
  %v978 = vpack.c.b16 %v914, %v914
  %v979 = vpack.c.b16 %v915, %v915
  %v980 = vpack.c.b16 %v916, %v916
  %v981 = vpack.c.b16 %v917, %v917
  %v982 = vpack.c.b16 %v918, %v918
  %v983 = vpack.c.b16 %v919, %v919
  %v984 = vpack.c.b16 %v920, %v920
  %v985 = vpack.c.b16 %v921, %v921
  %v986 = vpack.c.b16 %v922, %v922
  %v987 = vpack.c.b16 %v923, %v923
  %v988 = vpack.c.b16 %v924, %v924
  %v989 = vpack.c.b16 %v925, %v925
  %v990 = vpack.c.b16 %v926, %v926
  %v991 = vpack.c.b16 %v927, %v927
  %v992 = vpack.c.b16 %v928, %v928
  %v993 = vpack.c.b16 %v929, %v929
  %v994 = vpack.c.b16 %v930, %v930
  %v995 = vpack.c.b16 %v931, %v931
  %v996 = vpack.c.b16 %v932, %v932
  %v997 = vpack.c.b16 %v933, %v933
  %v998 = vpack.c.b16 %v934, %v934
  %v999 = vpack.c.b16 %v935, %v935
  %v1000 = vpack.c.b16 %v936, %v936
  %v1001 = vpack.c.b16 %v937, %v937
  %v1002 = vpack.c.b16 %v938, %v938
  %v1003 = vpack.c.b16 %v939, %v939
  %v1004 = vpack.c.b16 %v940, %v940
  %v1005 = vpack.c.b16 %v941, %v941
  %v1006 = vpack.c.b16 %v942, %v942
  %v1007 = vpack.c.b16 %v943, %v943
  %v1008 = vpack.c.b16 %v944, %v944
  %v1009 = vpack.c.b16 %v945, %v945
  %v1010 = vpack.c.b16 %v946, %v946
  %v1011 = vpack.c.b16 %v947, %v947
  %v1012 = vpack.c.b16 %v948, %v948
  %v1013 = vpack.c.b16 %v949, %v949
  %v1014 = vpack.c.b16 %v950, %v950
  %v1015 = vpack.c.b16 %v951, %v951
  %v1016 = vpack.c.b16 %v952, %v952
  %v1017 = vpack.c.b16 %v953, %v953
  %v1018 = vpack.c.b16 %v954, %v954
  %v1019 = vpack.c.b16 %v955, %v955
  %v1020 = vpack.c.b16 %v956, %v956
  %v1021 = vpack.c.b16 %v957, %v957
  %v1022 = vpack.c.b16 %v958, %v958
  %v1023 = vpack.c.b16 %v959, %v959
  %v1024 = vpack.c.b16 %v960, %v960
  %1089 = vst [vmem:[%s4] sm:$0xf] %v961
  %1090 = vst [vmem:[%s4 + $0x4] sm:$0xf] %v962
  %1091 = vst [vmem:[%s4 + $0x8] sm:$0xf] %v963
  %1092 = vst [vmem:[%s4 + $0xc] sm:$0xf] %v964
  %1093 = vst [vmem:[%s4 + $0x10] sm:$0xf] %v965
  %1094 = vst [vmem:[%s4 + $0x14] sm:$0xf] %v966
  %1095 = vst [vmem:[%s4 + $0x18] sm:$0xf] %v967
  %1096 = vst [vmem:[%s4 + $0x1c] sm:$0xf] %v968
  %1097 = vst [vmem:[%s4 + $0x20] sm:$0xf] %v969
  %1098 = vst [vmem:[%s4 + $0x24] sm:$0xf] %v970
  %1099 = vst [vmem:[%s4 + $0x28] sm:$0xf] %v971
  %1100 = vst [vmem:[%s4 + $0x2c] sm:$0xf] %v972
  %1101 = vst [vmem:[%s4 + $0x30] sm:$0xf] %v973
  %1102 = vst [vmem:[%s4 + $0x34] sm:$0xf] %v974
  %1103 = vst [vmem:[%s4 + $0x38] sm:$0xf] %v975
  %1104 = vst [vmem:[%s4 + $0x3c] sm:$0xf] %v976
  %1105 = vst [vmem:[%s4 + $0x40] sm:$0xf] %v977
  %1106 = vst [vmem:[%s4 + $0x44] sm:$0xf] %v978
  %1107 = vst [vmem:[%s4 + $0x48] sm:$0xf] %v979
  %1108 = vst [vmem:[%s4 + $0x4c] sm:$0xf] %v980
  %1109 = vst [vmem:[%s4 + $0x50] sm:$0xf] %v981
  %1110 = vst [vmem:[%s4 + $0x54] sm:$0xf] %v982
  %1111 = vst [vmem:[%s4 + $0x58] sm:$0xf] %v983
  %1112 = vst [vmem:[%s4 + $0x5c] sm:$0xf] %v984
  %1113 = vst [vmem:[%s4 + $0x60] sm:$0xf] %v985
  %1114 = vst [vmem:[%s4 + $0x64] sm:$0xf] %v986
  %1115 = vst [vmem:[%s4 + $0x68] sm:$0xf] %v987
  %1116 = vst [vmem:[%s4 + $0x6c] sm:$0xf] %v988
  %1117 = vst [vmem:[%s4 + $0x70] sm:$0xf] %v989
  %1118 = vst [vmem:[%s4 + $0x74] sm:$0xf] %v990
  %1119 = vst [vmem:[%s4 + $0x78] sm:$0xf] %v991
  %1120 = vst [vmem:[%s4 + $0x7c] sm:$0xf] %v992
  %1121 = vst [vmem:[%s4 + $0x80] sm:$0xf] %v993
  %1122 = vst [vmem:[%s4 + $0x84] sm:$0xf] %v994
  %1123 = vst [vmem:[%s4 + $0x88] sm:$0xf] %v995
  %1124 = vst [vmem:[%s4 + $0x8c] sm:$0xf] %v996
  %1125 = vst [vmem:[%s4 + $0x90] sm:$0xf] %v997
  %1126 = vst [vmem:[%s4 + $0x94] sm:$0xf] %v998
  %1127 = vst [vmem:[%s4 + $0x98] sm:$0xf] %v999
  %1128 = vst [vmem:[%s4 + $0x9c] sm:$0xf] %v1000
  %1129 = vst [vmem:[%s4 + $0xa0] sm:$0xf] %v1001
  %1130 = vst [vmem:[%s4 + $0xa4] sm:$0xf] %v1002
  %1131 = vst [vmem:[%s4 + $0xa8] sm:$0xf] %v1003
  %1132 = vst [vmem:[%s4 + $0xac] sm:$0xf] %v1004
  %1133 = vst [vmem:[%s4 + $0xb0] sm:$0xf] %v1005
  %1134 = vst [vmem:[%s4 + $0xb4] sm:$0xf] %v1006
  %1135 = vst [vmem:[%s4 + $0xb8] sm:$0xf] %v1007
  %1136 = vst [vmem:[%s4 + $0xbc] sm:$0xf] %v1008
  %1137 = vst [vmem:[%s4 + $0xc0] sm:$0xf] %v1009
  %1138 = vst [vmem:[%s4 + $0xc4] sm:$0xf] %v1010
  %1139 = vst [vmem:[%s4 + $0xc8] sm:$0xf] %v1011
  %1140 = vst [vmem:[%s4 + $0xcc] sm:$0xf] %v1012
  %1141 = vst [vmem:[%s4 + $0xd0] sm:$0xf] %v1013
  %1142 = vst [vmem:[%s4 + $0xd4] sm:$0xf] %v1014
  %1143 = vst [vmem:[%s4 + $0xd8] sm:$0xf] %v1015
  %1144 = vst [vmem:[%s4 + $0xdc] sm:$0xf] %v1016
  %1145 = vst [vmem:[%s4 + $0xe0] sm:$0xf] %v1017
  %1146 = vst [vmem:[%s4 + $0xe4] sm:$0xf] %v1018
  %1147 = vst [vmem:[%s4 + $0xe8] sm:$0xf] %v1019
  %1148 = vst [vmem:[%s4 + $0xec] sm:$0xf] %v1020
  %1149 = vst [vmem:[%s4 + $0xf0] sm:$0xf] %v1021
  %1150 = vst [vmem:[%s4 + $0xf4] sm:$0xf] %v1022
  %1151 = vst [vmem:[%s4 + $0xf8] sm:$0xf] %v1023
  %1152 = vst [vmem:[%s4 + $0xfc] sm:$0xf] %v1024
  // Predicated region
  $region18: #{bottleneck_forward.2} parent=0 // pred_check
    _
  $region19: #{bottleneck_forward.2} parent=0 // pred_check_branch
    %1154 = sbr.rel (0) target = $region21
  $region20: #{bottleneck_forward.2} parent=0 // pred_region
    _
  $region21: #{bottleneck_forward.2} parent=0 // pred_fallthru
    _
  // Predicated region
  $region22: #{bottleneck_forward.2} parent=0 // pred_check
    _
  $region23: #{bottleneck_forward.2} parent=0 // pred_check_branch
    %1156 = sbr.rel (0) target = $region25
  $region24: #{bottleneck_forward.2} parent=0 // pred_region
    _
  $region25: #{bottleneck_forward.2} parent=0 // pred_fallthru
    _

// kernel: bottleneck_forward.3
$region0: #{bottleneck_forward.3}
  #allocation0 [shape = 'u32[]', space=smem, size = 0x4, offset = 0x4, fixed_abs, tag = 'smem constant byte address 0x4 - core index']
  #allocation1 [shape = 'u32[144,128]{1,0:T(1,128)}', space=vmem, size = 0x12000, scoped, tag = 'internal scratch']
  %s0 = inlined_call_operand.vmem [shape: bf16[2,352,128], index: 0, kind: input, shape index: {}]
  %s1 = inlined_call_operand.vmem [shape: bf16[3,3,128,128], index: 1, kind: input, shape index: {}]
  %s2 = inlined_call_operand.vmem [shape: f32[1,128], index: 2, kind: input, shape index: {}]
  %s3 = inlined_call_operand.vmem [shape: f32[1,128], index: 3, kind: input, shape index: {}]
  %s4 = inlined_call_operand.vmem [shape: bf16[128,128], index: 4, kind: input, shape index: {}]
  %s5 = inlined_call_operand.vmem [shape: f32[1,128], index: 5, kind: input, shape index: {}]
  %s6 = inlined_call_operand.vmem [shape: f32[1,128], index: 6, kind: input, shape index: {}]
  %s7 = inlined_call_operand.vmem [shape: bf16[2,72,128], index: 7, kind: input, shape index: {}]
  %s8 = inlined_call_operand.vmem [shape: bf16[128,128], index: 8, kind: input, shape index: {}]
  %s9 = inlined_call_operand.vmem [shape: f32[1,128], index: 9, kind: input, shape index: {}]
  %s10 = inlined_call_operand.vmem [shape: f32[1,128], index: 10, kind: input, shape index: {}]
  %s11 = inlined_call_operand.vmem [shape: bf16[2,72,128], index: 11, kind: output, shape index: {}]
  %s12 = sld [smem:[#allocation0]]
  $region77: #{bottleneck_forward.3} parent=0
    _
  %s14 = ssub.s32 1, %s12
  %s15 = scalar_select 0, %s14, %s12
  loop: start=0, step=1, limit=4
  $region2: #{bottleneck_forward.3} parent=0 // loop_pre_header
    _
  $region3: #{bottleneck_forward.3} parent=0 // loop_header
    %s17 = sphi 0, %s21
    %p18 = scmp.ge.s32.totalorder %s17, 4
    %s24 = sphi 0, %s36
    %s25 = sphi 0, %s32
    %s26 = sphi 0, %s24
    %s27 = sphi 0, %s25
    %s28 = sphi 0, %s26
    %s29 = sphi 0, %s27
    %s41 = sphi 0, %s43
    %s44 = sphi 0, %s41
    %s45 = sphi 0, %s44
    %s61 = sphi 0, %s45
    %s65 = sphi 0, %s65
    %s67 = sphi 0, %s65
    %s68 = sphi 0, %s67
    %s82 = sphi 0, %s68
    %s86 = sphi 0, %s86
    %s88 = sphi 0, %s86
    %s89 = sphi 0, %s88
    %s103 = sphi 0, %s89
    %s107 = sphi 0, %s107
    %s109 = sphi 0, %s107
    %s110 = sphi 0, %s109
    %s124 = sphi 0, %s110
    %s128 = sphi 0, %s128
    %s130 = sphi 0, %s128
    %s131 = sphi 0, %s130
    %s145 = sphi 0, %s131
    %s149 = sphi 0, %s149
    %s151 = sphi 0, %s149
    %s152 = sphi 0, %s151
    %s166 = sphi 0, %s152
    %s170 = sphi 0, %s170
    %s172 = sphi 0, %s170
    %s173 = sphi 0, %s172
    %s187 = sphi 0, %s173
    %s195 = sphi 0, %s197
    %s198 = sphi 0, %s195
    %s199 = sphi 0, %s198
    %s215 = sphi 0, %s199
    %s219 = sphi 0, %s219
    %s221 = sphi 0, %s219
    %s222 = sphi 0, %s221
    %s236 = sphi 0, %s222
    %s240 = sphi 0, %s240
    %s242 = sphi 0, %s240
    %s243 = sphi 0, %s242
    %s257 = sphi 0, %s243
    %s261 = sphi 0, %s261
    %s263 = sphi 0, %s261
    %s264 = sphi 0, %s263
    %s278 = sphi 0, %s264
    %s286 = sphi 0, %s288
    %s289 = sphi 0, %s286
    %s290 = sphi 0, %s289
    %s306 = sphi 0, %s290
  $region4: #{bottleneck_forward.3} parent=0 // loop_header_branch
    %20 = sbr.rel (%p18) target = $region8
  $region5: #{bottleneck_forward.3} parent=0 // loop_body
    %s22 = ssub.s32 %s17, 1
    %s23 = ssub.s32 %s17, 2
    %s30 = sadd.s32 1, %s25
    %p31 = scmp.ge.s32.totalorder %s30, 1
    %s32 = scalar_select %p31, 0, %s30
    %s33 = sadd.s32 1, %s24
    %s34 = scalar_select %p31, %s33, %s24
    %p35 = scmp.ge.s32.totalorder %s34, 2
    %s36 = scalar_select %p35, 0, %s34
    %s37 = ssub.s32 %s24, %s36
    %s38 = ssub.s32 %s25, %s32
    %s39 = sor.u32 %s37, %s38
    %p40 = scmp.eq.s32.totalorder %s39, 0
    %s42 = sadd.s32 %s41, 1
    %s43 = scalar_select %p40, %s41, %s42
    %p46 = pneg %p40
    %p47 = scmp.eq.s32.totalorder %s17, 1
    %p48 = por %p46, %p47
    %p49 = scmp.ne.s32.totalorder %s41, %s44
    %p50 = scmp.eq.s32.totalorder %s17, 0
    %p51 = por %p49, %p50
    %p52 = scmp.ne.s32.totalorder %s41, %s44
    %p53 = scmp.eq.s32.totalorder %s22, 1
    %p54 = por %p52, %p53
    %p55 = scmp.ne.s32.totalorder %s44, %s45
    %p56 = scmp.eq.s32.totalorder %s22, 0
    %p57 = por %p55, %p56
    %p58 = scmp.ne.s32.totalorder %s44, %s45
    %p59 = scmp.eq.s32.totalorder %s23, 1
    %p60 = por %p58, %p59
    %p62 = scmp.ne.s32.totalorder %s45, %s61
    %p63 = scmp.eq.s32.totalorder %s23, 0
    %p64 = por %p62, %p63
    %s66 = sadd.s32 %s65, 1
    %p69 = scmp.eq.s32.totalorder %s17, 1
    %p70 = scmp.ne.s32.totalorder %s65, %s67
    %p71 = scmp.eq.s32.totalorder %s17, 0
    %p72 = por %p70, %p71
    %p73 = scmp.ne.s32.totalorder %s65, %s67
    %p74 = scmp.eq.s32.totalorder %s22, 1
    %p75 = por %p73, %p74
    %p76 = scmp.ne.s32.totalorder %s67, %s68
    %p77 = scmp.eq.s32.totalorder %s22, 0
    %p78 = por %p76, %p77
    %p79 = scmp.ne.s32.totalorder %s67, %s68
    %p80 = scmp.eq.s32.totalorder %s23, 1
    %p81 = por %p79, %p80
    %p83 = scmp.ne.s32.totalorder %s68, %s82
    %p84 = scmp.eq.s32.totalorder %s23, 0
    %p85 = por %p83, %p84
    %s87 = sadd.s32 %s86, 1
    %p90 = scmp.eq.s32.totalorder %s17, 1
    %p91 = scmp.ne.s32.totalorder %s86, %s88
    %p92 = scmp.eq.s32.totalorder %s17, 0
    %p93 = por %p91, %p92
    %p94 = scmp.ne.s32.totalorder %s86, %s88
    %p95 = scmp.eq.s32.totalorder %s22, 1
    %p96 = por %p94, %p95
    %p97 = scmp.ne.s32.totalorder %s88, %s89
    %p98 = scmp.eq.s32.totalorder %s22, 0
    %p99 = por %p97, %p98
    %p100 = scmp.ne.s32.totalorder %s88, %s89
    %p101 = scmp.eq.s32.totalorder %s23, 1
    %p102 = por %p100, %p101
    %p104 = scmp.ne.s32.totalorder %s89, %s103
    %p105 = scmp.eq.s32.totalorder %s23, 0
    %p106 = por %p104, %p105
    %s108 = sadd.s32 %s107, 1
    %p111 = scmp.eq.s32.totalorder %s17, 1
    %p112 = scmp.ne.s32.totalorder %s107, %s109
    %p113 = scmp.eq.s32.totalorder %s17, 0
    %p114 = por %p112, %p113
    %p115 = scmp.ne.s32.totalorder %s107, %s109
    %p116 = scmp.eq.s32.totalorder %s22, 1
    %p117 = por %p115, %p116
    %p118 = scmp.ne.s32.totalorder %s109, %s110
    %p119 = scmp.eq.s32.totalorder %s22, 0
    %p120 = por %p118, %p119
    %p121 = scmp.ne.s32.totalorder %s109, %s110
    %p122 = scmp.eq.s32.totalorder %s23, 1
    %p123 = por %p121, %p122
    %p125 = scmp.ne.s32.totalorder %s110, %s124
    %p126 = scmp.eq.s32.totalorder %s23, 0
    %p127 = por %p125, %p126
    %s129 = sadd.s32 %s128, 1
    %p132 = scmp.eq.s32.totalorder %s17, 1
    %p133 = scmp.ne.s32.totalorder %s128, %s130
    %p134 = scmp.eq.s32.totalorder %s17, 0
    %p135 = por %p133, %p134
    %p136 = scmp.ne.s32.totalorder %s128, %s130
    %p137 = scmp.eq.s32.totalorder %s22, 1
    %p138 = por %p136, %p137
    %p139 = scmp.ne.s32.totalorder %s130, %s131
    %p140 = scmp.eq.s32.totalorder %s22, 0
    %p141 = por %p139, %p140
    %p142 = scmp.ne.s32.totalorder %s130, %s131
    %p143 = scmp.eq.s32.totalorder %s23, 1
    %p144 = por %p142, %p143
    %p146 = scmp.ne.s32.totalorder %s131, %s145
    %p147 = scmp.eq.s32.totalorder %s23, 0
    %p148 = por %p146, %p147
    %s150 = sadd.s32 %s149, 1
    %p153 = scmp.eq.s32.totalorder %s17, 1
    %p154 = scmp.ne.s32.totalorder %s149, %s151
    %p155 = scmp.eq.s32.totalorder %s17, 0
    %p156 = por %p154, %p155
    %p157 = scmp.ne.s32.totalorder %s149, %s151
    %p158 = scmp.eq.s32.totalorder %s22, 1
    %p159 = por %p157, %p158
    %p160 = scmp.ne.s32.totalorder %s151, %s152
    %p161 = scmp.eq.s32.totalorder %s22, 0
    %p162 = por %p160, %p161
    %p163 = scmp.ne.s32.totalorder %s151, %s152
    %p164 = scmp.eq.s32.totalorder %s23, 1
    %p165 = por %p163, %p164
    %p167 = scmp.ne.s32.totalorder %s152, %s166
    %p168 = scmp.eq.s32.totalorder %s23, 0
    %p169 = por %p167, %p168
    %s171 = sadd.s32 %s170, 1
    %p174 = scmp.eq.s32.totalorder %s17, 1
    %p175 = scmp.ne.s32.totalorder %s170, %s172
    %p176 = scmp.eq.s32.totalorder %s17, 0
    %p177 = por %p175, %p176
    %p178 = scmp.ne.s32.totalorder %s170, %s172
    %p179 = scmp.eq.s32.totalorder %s22, 1
    %p180 = por %p178, %p179
    %p181 = scmp.ne.s32.totalorder %s172, %s173
    %p182 = scmp.eq.s32.totalorder %s22, 0
    %p183 = por %p181, %p182
    %p184 = scmp.ne.s32.totalorder %s172, %s173
    %p185 = scmp.eq.s32.totalorder %s23, 1
    %p186 = por %p184, %p185
    %p188 = scmp.ne.s32.totalorder %s173, %s187
    %p189 = scmp.eq.s32.totalorder %s23, 0
    %p190 = por %p188, %p189
    %s191 = ssub.s32 %s24, %s36
    %s192 = ssub.s32 %s25, %s32
    %s193 = sor.u32 %s191, %s192
    %p194 = scmp.eq.s32.totalorder %s193, 0
    %s196 = sadd.s32 %s195, 1
    %s197 = scalar_select %p194, %s195, %s196
    %p200 = pneg %p194
    %p201 = scmp.eq.s32.totalorder %s17, 1
    %p202 = por %p200, %p201
    %p203 = scmp.ne.s32.totalorder %s195, %s198
    %p204 = scmp.eq.s32.totalorder %s17, 0
    %p205 = por %p203, %p204
    %p206 = scmp.ne.s32.totalorder %s195, %s198
    %p207 = scmp.eq.s32.totalorder %s22, 1
    %p208 = por %p206, %p207
    %p209 = scmp.ne.s32.totalorder %s198, %s199
    %p210 = scmp.eq.s32.totalorder %s22, 0
    %p211 = por %p209, %p210
    %p212 = scmp.ne.s32.totalorder %s198, %s199
    %p213 = scmp.eq.s32.totalorder %s23, 1
    %p214 = por %p212, %p213
    %p216 = scmp.ne.s32.totalorder %s199, %s215
    %p217 = scmp.eq.s32.totalorder %s23, 0
    %p218 = por %p216, %p217
    %s220 = sadd.s32 %s219, 1
    %p223 = scmp.eq.s32.totalorder %s17, 1
    %p224 = scmp.ne.s32.totalorder %s219, %s221
    %p225 = scmp.eq.s32.totalorder %s17, 0
    %p226 = por %p224, %p225
    %p227 = scmp.ne.s32.totalorder %s219, %s221
    %p228 = scmp.eq.s32.totalorder %s22, 1
    %p229 = por %p227, %p228
    %p230 = scmp.ne.s32.totalorder %s221, %s222
    %p231 = scmp.eq.s32.totalorder %s22, 0
    %p232 = por %p230, %p231
    %p233 = scmp.ne.s32.totalorder %s221, %s222
    %p234 = scmp.eq.s32.totalorder %s23, 1
    %p235 = por %p233, %p234
    %p237 = scmp.ne.s32.totalorder %s222, %s236
    %p238 = scmp.eq.s32.totalorder %s23, 0
    %p239 = por %p237, %p238
    %s241 = sadd.s32 %s240, 1
    %p244 = scmp.eq.s32.totalorder %s17, 1
    %p245 = scmp.ne.s32.totalorder %s240, %s242
    %p246 = scmp.eq.s32.totalorder %s17, 0
    %p247 = por %p245, %p246
    %p248 = scmp.ne.s32.totalorder %s240, %s242
    %p249 = scmp.eq.s32.totalorder %s22, 1
    %p250 = por %p248, %p249
    %p251 = scmp.ne.s32.totalorder %s242, %s243
    %p252 = scmp.eq.s32.totalorder %s22, 0
    %p253 = por %p251, %p252
    %p254 = scmp.ne.s32.totalorder %s242, %s243
    %p255 = scmp.eq.s32.totalorder %s23, 1
    %p256 = por %p254, %p255
    %p258 = scmp.ne.s32.totalorder %s243, %s257
    %p259 = scmp.eq.s32.totalorder %s23, 0
    %p260 = por %p258, %p259
    %s262 = sadd.s32 %s261, 1
    %p265 = scmp.eq.s32.totalorder %s17, 1
    %p266 = scmp.ne.s32.totalorder %s261, %s263
    %p267 = scmp.eq.s32.totalorder %s17, 0
    %p268 = por %p266, %p267
    %p269 = scmp.ne.s32.totalorder %s261, %s263
    %p270 = scmp.eq.s32.totalorder %s22, 1
    %p271 = por %p269, %p270
    %p272 = scmp.ne.s32.totalorder %s263, %s264
    %p273 = scmp.eq.s32.totalorder %s22, 0
    %p274 = por %p272, %p273
    %p275 = scmp.ne.s32.totalorder %s263, %s264
    %p276 = scmp.eq.s32.totalorder %s23, 1
    %p277 = por %p275, %p276
    %p279 = scmp.ne.s32.totalorder %s264, %s278
    %p280 = scmp.eq.s32.totalorder %s23, 0
    %p281 = por %p279, %p280
    %s282 = ssub.s32 %s24, %s36
    %s283 = ssub.s32 %s25, %s32
    %s284 = sor.u32 %s282, %s283
    %p285 = scmp.eq.s32.totalorder %s284, 0
    %s287 = sadd.s32 %s286, 1
    %s288 = scalar_select %p285, %s286, %s287
    %p291 = pneg %p285
    %p292 = scmp.eq.s32.totalorder %s17, 1
    %p293 = por %p291, %p292
    %p294 = scmp.ne.s32.totalorder %s286, %s289
    %p295 = scmp.eq.s32.totalorder %s17, 0
    %p296 = por %p294, %p295
    %p297 = scmp.ne.s32.totalorder %s286, %s289
    %p298 = scmp.eq.s32.totalorder %s22, 1
    %p299 = por %p297, %p298
    %p300 = scmp.ne.s32.totalorder %s289, %s290
    %p301 = scmp.eq.s32.totalorder %s22, 0
    %p302 = por %p300, %p301
    %p303 = scmp.ne.s32.totalorder %s289, %s290
    %p304 = scmp.eq.s32.totalorder %s23, 1
    %p305 = por %p303, %p304
    %p307 = scmp.ne.s32.totalorder %s290, %s306
    %p308 = scmp.eq.s32.totalorder %s23, 0
    %p309 = por %p307, %p308
    %p310 = scmp.le.s32.totalorder 1, %s17
    %p311 = scmp.lt.s32.totalorder %s17, 3
    %p312 = pnand %p310, %p311
    %p313 = pneg %p312
    // Predicated region
    $region9: #{bottleneck_forward.3} parent=5 // pred_check
      _
    $region10: #{bottleneck_forward.3} parent=5 // pred_check_branch
      %315 = sbr.rel (%p312) target = $region12
    $region11: #{bottleneck_forward.3} parent=5 // pred_region
      %s316 = ssub.s32 %s17, 1
      // Predicated region
      $region13: #{bottleneck_forward.3} parent=11 // pred_check
        %p317 = pneg %p78
      $region14: #{bottleneck_forward.3} parent=11 // pred_check_branch
        %319 = sbr.rel (%p317) target = $region16
      $region15: #{bottleneck_forward.3} parent=11 // pred_region
        _
      $region16: #{bottleneck_forward.3} parent=11 // pred_fallthru
        _
      // Predicated region
      $region17: #{bottleneck_forward.3} parent=11 // pred_check
        %p320 = pneg %p99
      $region18: #{bottleneck_forward.3} parent=11 // pred_check_branch
        %322 = sbr.rel (%p320) target = $region20
      $region19: #{bottleneck_forward.3} parent=11 // pred_region
        _
      $region20: #{bottleneck_forward.3} parent=11 // pred_fallthru
        _
      // Predicated region
      $region21: #{bottleneck_forward.3} parent=11 // pred_check
        %p323 = pneg %p120
      $region22: #{bottleneck_forward.3} parent=11 // pred_check_branch
        %325 = sbr.rel (%p323) target = $region24
      $region23: #{bottleneck_forward.3} parent=11 // pred_region
        _
      $region24: #{bottleneck_forward.3} parent=11 // pred_fallthru
        _
      // Predicated region
      $region25: #{bottleneck_forward.3} parent=11 // pred_check
        %p326 = pneg %p141
      $region26: #{bottleneck_forward.3} parent=11 // pred_check_branch
        %328 = sbr.rel (%p326) target = $region28
      $region27: #{bottleneck_forward.3} parent=11 // pred_region
        _
      $region28: #{bottleneck_forward.3} parent=11 // pred_fallthru
        _
      // Predicated region
      $region29: #{bottleneck_forward.3} parent=11 // pred_check
        %p329 = pneg %p162
      $region30: #{bottleneck_forward.3} parent=11 // pred_check_branch
        %331 = sbr.rel (%p329) target = $region32
      $region31: #{bottleneck_forward.3} parent=11 // pred_region
        _
      $region32: #{bottleneck_forward.3} parent=11 // pred_fallthru
        _
      // Predicated region
      $region33: #{bottleneck_forward.3} parent=11 // pred_check
        %p332 = pneg %p183
      $region34: #{bottleneck_forward.3} parent=11 // pred_check_branch
        %334 = sbr.rel (%p332) target = $region36
      $region35: #{bottleneck_forward.3} parent=11 // pred_region
        _
      $region36: #{bottleneck_forward.3} parent=11 // pred_fallthru
        _
      // Predicated region
      $region37: #{bottleneck_forward.3} parent=11 // pred_check
        %p335 = pneg %p232
      $region38: #{bottleneck_forward.3} parent=11 // pred_check_branch
        %337 = sbr.rel (%p335) target = $region40
      $region39: #{bottleneck_forward.3} parent=11 // pred_region
        _
      $region40: #{bottleneck_forward.3} parent=11 // pred_fallthru
        _
      // Predicated region
      $region41: #{bottleneck_forward.3} parent=11 // pred_check
        %p338 = pneg %p253
      $region42: #{bottleneck_forward.3} parent=11 // pred_check_branch
        %340 = sbr.rel (%p338) target = $region44
      $region43: #{bottleneck_forward.3} parent=11 // pred_region
        _
      $region44: #{bottleneck_forward.3} parent=11 // pred_fallthru
        _
      // Predicated region
      $region45: #{bottleneck_forward.3} parent=11 // pred_check
        %p341 = pneg %p274
      $region46: #{bottleneck_forward.3} parent=11 // pred_check_branch
        %343 = sbr.rel (%p341) target = $region48
      $region47: #{bottleneck_forward.3} parent=11 // pred_region
        _
      $region48: #{bottleneck_forward.3} parent=11 // pred_fallthru
        _
    $region12: #{bottleneck_forward.3} parent=5 // pred_fallthru
      _
    %p344 = scmp.lt.s32.totalorder %s17, 2
    // Predicated region
    $region49: #{bottleneck_forward.3} parent=5 // pred_check
      %p345 = pneg %p344
    $region50: #{bottleneck_forward.3} parent=5 // pred_check_branch
      %347 = sbr.rel (%p345) target = $region52
    $region51: #{bottleneck_forward.3} parent=5 // pred_region
      // Predicated region
      $region53: #{bottleneck_forward.3} parent=51 // pred_check
        %p348 = pneg %p51
      $region54: #{bottleneck_forward.3} parent=51 // pred_check_branch
        %350 = sbr.rel (%p348) target = $region56
      $region55: #{bottleneck_forward.3} parent=51 // pred_region
        %s351 = smul.u32 44, %s25
        %p352 = scmp.lt.s32.totalorder %s24, 1
        %s353 = scalar_select %p352, %s24, 1
        %p354 = scmp.lt.s32.totalorder %s351, 43
        %s355 = scalar_select %p354, %s351, 43
        %s356 = smul.addr %s353, 44
        %s357 = sadd.s32 %s355, %s356
        %s358 = smul.addr %s357, 4
        %s359 = scalar_lea.vmem %s0, %s358
        %s360 = smul.u32 44, %s25
      $region56: #{bottleneck_forward.3} parent=51 // pred_fallthru
        _
      // Predicated region
      $region57: #{bottleneck_forward.3} parent=51 // pred_check
        %p361 = pneg %p205
      $region58: #{bottleneck_forward.3} parent=51 // pred_check_branch
        %363 = sbr.rel (%p361) target = $region60
      $region59: #{bottleneck_forward.3} parent=51 // pred_region
        %s364 = smul.u32 9, %s25
        %p365 = scmp.lt.s32.totalorder %s24, 1
        %s366 = scalar_select %p365, %s24, 1
        %p367 = scmp.lt.s32.totalorder %s364, 8
        %s368 = scalar_select %p367, %s364, 8
        %s369 = smul.addr %s366, 9
        %s370 = sadd.s32 %s368, %s369
        %s371 = smul.addr %s370, 4
        %s372 = scalar_lea.vmem %s7, %s371
        %s373 = smul.u32 9, %s25
      $region60: #{bottleneck_forward.3} parent=51 // pred_fallthru
        _
    $region52: #{bottleneck_forward.3} parent=5 // pred_fallthru
      _
    %p374 = scmp.le.s32.totalorder 1, %s17
    %p375 = scmp.lt.s32.totalorder %s17, 3
    %p376 = pnand %p374, %p375
    %p377 = pneg %p376
    // Predicated region
    $region61: #{bottleneck_forward.3} parent=5 // pred_check
      _
    $region62: #{bottleneck_forward.3} parent=5 // pred_check_branch
      %379 = sbr.rel (%p376) target = $region64
    $region63: #{bottleneck_forward.3} parent=5 // pred_region
      %s380 = ssub.s32 %s17, 1
      %s381 = smul.u32 44, %s27
      %p382 = scmp.lt.s32.totalorder %s26, 1
      %s383 = scalar_select %p382, %s26, 1
      %p384 = scmp.lt.s32.totalorder %s381, 43
      %s385 = scalar_select %p384, %s381, 43
      %s386 = smul.addr %s383, 44
      %s387 = sadd.s32 %s385, %s386
      %s388 = smul.addr %s387, 4
      %s389 = scalar_lea.vmem %s0, %s388
      %p390 = pneg %p57
      %p391 = pneg %p54
      %p392 = pneg %p78
      %p393 = pneg %p75
      %p394 = pneg %p99
      %p395 = pneg %p96
      %p396 = pneg %p120
      %p397 = pneg %p117
      %p398 = pneg %p141
      %p399 = pneg %p138
      %p400 = pneg %p162
      %p401 = pneg %p159
      %p402 = pneg %p183
      %p403 = pneg %p180
      %s404 = smul.u32 9, %s27
      %p405 = scmp.lt.s32.totalorder %s26, 1
      %s406 = scalar_select %p405, %s26, 1
      %p407 = scmp.lt.s32.totalorder %s404, 8
      %s408 = scalar_select %p407, %s404, 8
      %s409 = smul.addr %s406, 9
      %s410 = sadd.s32 %s408, %s409
      %s411 = smul.addr %s410, 4
      %s412 = scalar_lea.vmem %s7, %s411
      %p413 = pneg %p211
      %p414 = pneg %p208
      %p415 = pneg %p232
      %p416 = pneg %p229
      %p417 = pneg %p253
      %p418 = pneg %p250
      %p419 = pneg %p274
      %p420 = pneg %p271
      %p421 = pneg %p302
      %p422 = pneg %p299
      %s423 = smul.u32 9, %s27
      %p424 = scmp.lt.s32.totalorder %s26, 1
      %s425 = scalar_select %p424, %s26, 1
      %p426 = scmp.lt.s32.totalorder %s423, 8
      %s427 = scalar_select %p426, %s423, 8
      %s428 = smul.addr %s425, 9
      %s429 = sadd.s32 %s427, %s428
      %s430 = smul.addr %s429, 4
      %s431 = scalar_lea.vmem %s11, %s430
      %s432 = smul.u32 44, %s27
      %p433 = scmp.lt.s32.totalorder %s26, 1
      %s434 = scalar_select %p433, %s26, 1
      %p435 = scmp.lt.s32.totalorder %s432, 43
      %s436 = scalar_select %p435, %s432, 43
      %s437 = smul.addr %s434, 44
      %s438 = sadd.s32 %s436, %s437
      %s439 = smul.addr %s438, 4
      %s440 = scalar_lea.vmem %s0, %s439
      %s441 = smul.u32 44, %s27
      %s442 = smul.u32 9, %s27
      %p443 = scmp.lt.s32.totalorder %s26, 1
      %s444 = scalar_select %p443, %s26, 1
      %p445 = scmp.lt.s32.totalorder %s442, 8
      %s446 = scalar_select %p445, %s442, 8
      %s447 = smul.addr %s444, 9
      %s448 = sadd.s32 %s446, %s447
      %s449 = smul.addr %s448, 4
      %s450 = scalar_lea.vmem %s7, %s449
      %s451 = smul.u32 9, %s27
      %s452 = smul.u32 9, %s27
      %p453 = scmp.lt.s32.totalorder %s26, 1
      %s454 = scalar_select %p453, %s26, 1
      %p455 = scmp.lt.s32.totalorder %s452, 8
      %s456 = scalar_select %p455, %s452, 8
      %s457 = smul.addr %s454, 9
      %s458 = sadd.s32 %s456, %s457
      %s459 = smul.addr %s458, 4
      %s460 = scalar_lea.vmem %s11, %s459
      %s461 = smul.u32 9, %s27
      %v463 = vld [vmem:[%s440] sm:$0xf]
      %v464 = vld [vmem:[%s440 + $0x4] sm:$0xf]
      %v465 = vld [vmem:[%s440 + $0x8] sm:$0xf]
      %v466 = vld [vmem:[%s440 + $0xc] sm:$0xf]
      %v467 = vld [vmem:[%s440 + $0x10] sm:$0xf]
      %v468 = vld [vmem:[%s440 + $0x14] sm:$0xf]
      %v469 = vld [vmem:[%s440 + $0x18] sm:$0xf]
      %v470 = vld [vmem:[%s440 + $0x1c] sm:$0xf]
      %v471 = vld [vmem:[%s440 + $0x20] sm:$0xf]
      %v472 = vld [vmem:[%s1] sm:$0xf]
      %v473 = vld [vmem:[%s1 + $0x4] sm:$0xf]
      %v474 = vld [vmem:[%s1 + $0x8] sm:$0xf]
      %v475 = vld [vmem:[%s1 + $0xc] sm:$0xf]
      %v476 = vld [vmem:[%s1 + $0x10] sm:$0xf]
      %v477 = vld [vmem:[%s1 + $0x14] sm:$0xf]
      %v478 = vld [vmem:[%s1 + $0x18] sm:$0xf]
      %v479 = vld [vmem:[%s1 + $0x1c] sm:$0xf]
      %v480 = vld [vmem:[%s1 + $0x20] sm:$0xf]
      %v481 = vld [vmem:[%s1 + $0x24] sm:$0xf]
      %v482 = vld [vmem:[%s1 + $0x28] sm:$0xf]
      %v483 = vld [vmem:[%s1 + $0x2c] sm:$0xf]
      %v484 = vld [vmem:[%s1 + $0x30] sm:$0xf]
      %v485 = vld [vmem:[%s1 + $0x34] sm:$0xf]
      %v486 = vld [vmem:[%s1 + $0x38] sm:$0xf]
      %v487 = vld [vmem:[%s1 + $0x3c] sm:$0xf]
      %v488 = vld [vmem:[%s440 + $0x2c] sm:$0xf]
      %v489 = vld [vmem:[%s440 + $0x30] sm:$0xf]
      %v490 = vld [vmem:[%s440 + $0x34] sm:$0xf]
      %v491 = vld [vmem:[%s440 + $0x38] sm:$0xf]
      %v492 = vld [vmem:[%s440 + $0x3c] sm:$0xf]
      %v493 = vld [vmem:[%s440 + $0x40] sm:$0xf]
      %v494 = vld [vmem:[%s440 + $0x44] sm:$0xf]
      %v495 = vld [vmem:[%s440 + $0x48] sm:$0xf]
      %v496 = vld [vmem:[%s440 + $0x4c] sm:$0xf]
      %s497 = scalar_lea.vmem %s1, 64
      %v498 = vld [vmem:[%s497] sm:$0xf]
      %v499 = vld [vmem:[%s497 + $0x4] sm:$0xf]
      %v500 = vld [vmem:[%s497 + $0x8] sm:$0xf]
      %v501 = vld [vmem:[%s497 + $0xc] sm:$0xf]
      %v502 = vld [vmem:[%s497 + $0x10] sm:$0xf]
      %v503 = vld [vmem:[%s497 + $0x14] sm:$0xf]
      %v504 = vld [vmem:[%s497 + $0x18] sm:$0xf]
      %v505 = vld [vmem:[%s497 + $0x1c] sm:$0xf]
      %v506 = vld [vmem:[%s497 + $0x20] sm:$0xf]
      %v507 = vld [vmem:[%s497 + $0x24] sm:$0xf]
      %v508 = vld [vmem:[%s497 + $0x28] sm:$0xf]
      %v509 = vld [vmem:[%s497 + $0x2c] sm:$0xf]
      %v510 = vld [vmem:[%s497 + $0x30] sm:$0xf]
      %v511 = vld [vmem:[%s497 + $0x34] sm:$0xf]
      %v512 = vld [vmem:[%s497 + $0x38] sm:$0xf]
      %v513 = vld [vmem:[%s497 + $0x3c] sm:$0xf]
      %v523 = vunpack.c.l.b16 %v488
      %v524 = vunpack.c.l.b16 %v489
      %v525 = vunpack.c.l.b16 %v490
      %v526 = vunpack.c.l.b16 %v491
      %v527 = vunpack.c.l.b16 %v492
      %v528 = vunpack.c.l.b16 %v493
      %v529 = vunpack.c.l.b16 %v494
      %v530 = vunpack.c.l.b16 %v495
      %v531 = vunpack.c.l.b16 %v496
      %v532 = vpack.c.b16 %v524, %v523
      %v533 = vpack.c.b16 %v526, %v525
      %v534 = vpack.c.b16 %v528, %v527
      %v535 = vpack.c.b16 %v530, %v529
      %v536 = vpack.c.b16 %v531, %v531
      %v558 = vunpack.c.l.b16 %v498
      %v559 = vunpack.c.l.b16 %v499
      %v560 = vunpack.c.l.b16 %v500
      %v561 = vunpack.c.l.b16 %v501
      %v562 = vunpack.c.l.b16 %v502
      %v563 = vunpack.c.l.b16 %v503
      %v564 = vunpack.c.l.b16 %v504
      %v565 = vunpack.c.l.b16 %v505
      %v566 = vunpack.c.l.b16 %v506
      %v567 = vunpack.c.l.b16 %v507
      %v568 = vunpack.c.l.b16 %v508
      %v569 = vunpack.c.l.b16 %v509
      %v570 = vunpack.c.l.b16 %v510
      %v571 = vunpack.c.l.b16 %v511
      %v572 = vunpack.c.l.b16 %v512
      %v573 = vunpack.c.l.b16 %v513
      %v574 = vpack.c.b16 %v559, %v558
      %v575 = vpack.c.b16 %v561, %v560
      %v576 = vpack.c.b16 %v563, %v562
      %v577 = vpack.c.b16 %v565, %v564
      %v578 = vpack.c.b16 %v567, %v566
      %v579 = vpack.c.b16 %v569, %v568
      %v580 = vpack.c.b16 %v571, %v570
      %v581 = vpack.c.b16 %v573, %v572
      %590 = vmatprep.subr.bf16.mxu0 0
      %591 = vmatpush1.bf16.msra.mxu0 %v581
      %592 = vmatprep.subr.bf16.mxu0 0
      %593 = vmatpush1.bf16.msra.mxu0 %v580
      %594 = vmatprep.subr.bf16.mxu0 0
      %595 = vmatpush1.bf16.msra.mxu0 %v579
      %596 = vmatprep.subr.bf16.mxu0 0
      %597 = vmatpush1.bf16.msra.mxu0 %v578
      %598 = vmatprep.subr.bf16.mxu0 0
      %599 = vmatpush1.bf16.msra.mxu0 %v577
      %600 = vmatprep.subr.bf16.mxu0 0
      %601 = vmatpush1.bf16.msra.mxu0 %v576
      %602 = vmatprep.subr.bf16.mxu0 0
      %603 = vmatpush1.bf16.msra.mxu0 %v575
      %604 = vmatprep.subr.bf16.mxu0 0
      %605 = vmatpush1.bf16.msra.mxu0 %v574
      %606 = vmatprep.subr.bf16.mxu0 0
      %607 = vmatpush2.bf16.msra.mxu0 0
      %608 = vmatprep.subr.bf16.mxu0 0
      %609 = vmatpush2.bf16.msra.mxu0 0
      %610 = vmatprep.subr.bf16.mxu0 0
      %611 = vmatpush2.bf16.msra.mxu0 0
      %612 = vmatprep.subr.bf16.mxu0 0
      %613 = vmatpush2.bf16.msra.mxu0 0
      %614 = vmatprep.subr.bf16.mxu0 0
      %615 = vmatpush2.bf16.msra.mxu0 0
      %616 = vmatprep.subr.bf16.mxu0 0
      %617 = vmatpush2.bf16.msra.mxu0 0
      %618 = vmatprep.subr.bf16.mxu0 0
      %619 = vmatpush2.bf16.msra.mxu0 0
      %620 = vmatprep.subr.bf16.mxu0 0
      %621 = vmatpush2.bf16.msra.mxu0 0
      %622 = vmatprep.mubr.bf16.mxu0 0
      %623 = vmatmul.mubr.bf16.gmra.mxu0 %v532
      %v624 = vpop.f32.mrf.mxu0
      %v625 = vadd.f32 0.0, %v624
      %v626 = vpop.f32.mrf.mxu0
      %v627 = vpop.f32.mrf.mxu0
      %v628 = vadd.f32 0.0, %v627
      %v629 = vpop.f32.mrf.mxu0
      %630 = vmatprep.mubr.bf16.mxu0 0
      %631 = vmatmul.mubr.bf16.gmra.mxu0 %v533
      %v632 = vpop.f32.mrf.mxu0
      %v633 = vadd.f32 0.0, %v632
      %v634 = vpop.f32.mrf.mxu0
      %v635 = vpop.f32.mrf.mxu0
      %v636 = vadd.f32 0.0, %v635
      %v637 = vpop.f32.mrf.mxu0
      %638 = vmatprep.mubr.bf16.mxu0 0
      %639 = vmatmul.mubr.bf16.gmra.mxu0 %v534
      %v640 = vpop.f32.mrf.mxu0
      %v641 = vadd.f32 0.0, %v640
      %v642 = vpop.f32.mrf.mxu0
      %v643 = vpop.f32.mrf.mxu0
      %v644 = vadd.f32 0.0, %v643
      %v645 = vpop.f32.mrf.mxu0
      %646 = vmatprep.mubr.bf16.mxu0 0
      %647 = vmatmul.mubr.bf16.gmra.mxu0 %v535
      %v648 = vpop.f32.mrf.mxu0
      %v649 = vadd.f32 0.0, %v648
      %v650 = vpop.f32.mrf.mxu0
      %v651 = vpop.f32.mrf.mxu0
      %v652 = vadd.f32 0.0, %v651
      %v653 = vpop.f32.mrf.mxu0
      %654 = vmatprep.mubr.bf16.mxu0 0
      %655 = vmatmul.mubr.bf16.gmra.mxu0 %v536
      %v656 = vpop.f32.mrf.mxu0
      %v657 = vadd.f32 0.0, %v656
      %v658 = vpop.f32.mrf.mxu0
      %v659 = vpop.f32.mrf.mxu0
      %v660 = vpop.f32.mrf.mxu0
      %661 = vdwg.mxu0
      %v671 = vunpack.c.l.b16 %v463
      %v672 = vunpack.c.l.b16 %v464
      %v673 = vunpack.c.l.b16 %v465
      %v674 = vunpack.c.l.b16 %v466
      %v675 = vunpack.c.l.b16 %v467
      %v676 = vunpack.c.l.b16 %v468
      %v677 = vunpack.c.l.b16 %v469
      %v678 = vunpack.c.l.b16 %v470
      %v679 = vunpack.c.l.b16 %v471
      %v680 = vpack.c.b16 %v672, %v671
      %v681 = vpack.c.b16 %v674, %v673
      %v682 = vpack.c.b16 %v676, %v675
      %v683 = vpack.c.b16 %v678, %v677
      %v684 = vpack.c.b16 %v679, %v679
      %v706 = vunpack.c.l.b16 %v472
      %v707 = vunpack.c.l.b16 %v473
      %v708 = vunpack.c.l.b16 %v474
      %v709 = vunpack.c.l.b16 %v475
      %v710 = vunpack.c.l.b16 %v476
      %v711 = vunpack.c.l.b16 %v477
      %v712 = vunpack.c.l.b16 %v478
      %v713 = vunpack.c.l.b16 %v479
      %v714 = vunpack.c.l.b16 %v480
      %v715 = vunpack.c.l.b16 %v481
      %v716 = vunpack.c.l.b16 %v482
      %v717 = vunpack.c.l.b16 %v483
      %v718 = vunpack.c.l.b16 %v484
      %v719 = vunpack.c.l.b16 %v485
      %v720 = vunpack.c.l.b16 %v486
      %v721 = vunpack.c.l.b16 %v487
      %v722 = vpack.c.b16 %v707, %v706
      %v723 = vpack.c.b16 %v709, %v708
      %v724 = vpack.c.b16 %v711, %v710
      %v725 = vpack.c.b16 %v713, %v712
      %v726 = vpack.c.b16 %v715, %v714
      %v727 = vpack.c.b16 %v717, %v716
      %v728 = vpack.c.b16 %v719, %v718
      %v729 = vpack.c.b16 %v721, %v720
      %738 = vmatprep.subr.bf16.mxu0 0
      %739 = vmatpush1.bf16.msra.mxu0 %v729
      %740 = vmatprep.subr.bf16.mxu0 0
      %741 = vmatpush1.bf16.msra.mxu0 %v728
      %742 = vmatprep.subr.bf16.mxu0 0
      %743 = vmatpush1.bf16.msra.mxu0 %v727
      %744 = vmatprep.subr.bf16.mxu0 0
      %745 = vmatpush1.bf16.msra.mxu0 %v726
      %746 = vmatprep.subr.bf16.mxu0 0
      %747 = vmatpush1.bf16.msra.mxu0 %v725
      %748 = vmatprep.subr.bf16.mxu0 0
      %749 = vmatpush1.bf16.msra.mxu0 %v724
      %750 = vmatprep.subr.bf16.mxu0 0
      %751 = vmatpush1.bf16.msra.mxu0 %v723
      %752 = vmatprep.subr.bf16.mxu0 0
      %753 = vmatpush1.bf16.msra.mxu0 %v722
      %754 = vmatprep.subr.bf16.mxu0 0
      %755 = vmatpush2.bf16.msra.mxu0 0
      %756 = vmatprep.subr.bf16.mxu0 0
      %757 = vmatpush2.bf16.msra.mxu0 0
      %758 = vmatprep.subr.bf16.mxu0 0
      %759 = vmatpush2.bf16.msra.mxu0 0
      %760 = vmatprep.subr.bf16.mxu0 0
      %761 = vmatpush2.bf16.msra.mxu0 0
      %762 = vmatprep.subr.bf16.mxu0 0
      %763 = vmatpush2.bf16.msra.mxu0 0
      %764 = vmatprep.subr.bf16.mxu0 0
      %765 = vmatpush2.bf16.msra.mxu0 0
      %766 = vmatprep.subr.bf16.mxu0 0
      %767 = vmatpush2.bf16.msra.mxu0 0
      %768 = vmatprep.subr.bf16.mxu0 0
      %769 = vmatpush2.bf16.msra.mxu0 0
      %770 = vmatprep.mubr.bf16.mxu0 0
      %771 = vmatmul.mubr.bf16.gmra.mxu0 %v680
      %v772 = vpop.f32.mrf.mxu0
      %v773 = vadd.f32 %v625, %v772
      %v774 = vpop.f32.mrf.mxu0
      %v775 = vpop.f32.mrf.mxu0
      %v776 = vadd.f32 %v628, %v775
      %v777 = vpop.f32.mrf.mxu0
      %778 = vmatprep.mubr.bf16.mxu0 0
      %779 = vmatmul.mubr.bf16.gmra.mxu0 %v681
      %v780 = vpop.f32.mrf.mxu0
      %v781 = vadd.f32 %v633, %v780
      %v782 = vpop.f32.mrf.mxu0
      %v783 = vpop.f32.mrf.mxu0
      %v784 = vadd.f32 %v636, %v783
      %v785 = vpop.f32.mrf.mxu0
      %786 = vmatprep.mubr.bf16.mxu0 0
      %787 = vmatmul.mubr.bf16.gmra.mxu0 %v682
      %v788 = vpop.f32.mrf.mxu0
      %v789 = vadd.f32 %v641, %v788
      %v790 = vpop.f32.mrf.mxu0
      %v791 = vpop.f32.mrf.mxu0
      %v792 = vadd.f32 %v644, %v791
      %v793 = vpop.f32.mrf.mxu0
      %794 = vmatprep.mubr.bf16.mxu0 0
      %795 = vmatmul.mubr.bf16.gmra.mxu0 %v683
      %v796 = vpop.f32.mrf.mxu0
      %v797 = vadd.f32 %v649, %v796
      %v798 = vpop.f32.mrf.mxu0
      %v799 = vpop.f32.mrf.mxu0
      %v800 = vadd.f32 %v652, %v799
      %v801 = vpop.f32.mrf.mxu0
      %802 = vmatprep.mubr.bf16.mxu0 0
      %803 = vmatmul.mubr.bf16.gmra.mxu0 %v684
      %v804 = vpop.f32.mrf.mxu0
      %v805 = vadd.f32 %v657, %v804
      %v806 = vpop.f32.mrf.mxu0
      %v807 = vpop.f32.mrf.mxu0
      %v808 = vpop.f32.mrf.mxu0
      %809 = vdwg.mxu0
      %v810 = vld [vmem:[%s440] sm:$0xf]
      %v811 = vld [vmem:[%s440 + $0x4] sm:$0xf]
      %v812 = vld [vmem:[%s440 + $0x8] sm:$0xf]
      %v813 = vld [vmem:[%s440 + $0xc] sm:$0xf]
      %v814 = vld [vmem:[%s440 + $0x10] sm:$0xf]
      %v815 = vld [vmem:[%s440 + $0x14] sm:$0xf]
      %v816 = vld [vmem:[%s440 + $0x18] sm:$0xf]
      %v817 = vld [vmem:[%s440 + $0x1c] sm:$0xf]
      %v818 = vld [vmem:[%s440 + $0x20] sm:$0xf]
      %v819 = vld [vmem:[%s440 + $0x24] sm:$0x1]
      %s820 = scalar_lea.vmem %s1, 128
      %v821 = vld [vmem:[%s820] sm:$0xf]
      %v822 = vld [vmem:[%s820 + $0x4] sm:$0xf]
      %v823 = vld [vmem:[%s820 + $0x8] sm:$0xf]
      %v824 = vld [vmem:[%s820 + $0xc] sm:$0xf]
      %v825 = vld [vmem:[%s820 + $0x10] sm:$0xf]
      %v826 = vld [vmem:[%s820 + $0x14] sm:$0xf]
      %v827 = vld [vmem:[%s820 + $0x18] sm:$0xf]
      %v828 = vld [vmem:[%s820 + $0x1c] sm:$0xf]
      %v829 = vld [vmem:[%s820 + $0x20] sm:$0xf]
      %v830 = vld [vmem:[%s820 + $0x24] sm:$0xf]
      %v831 = vld [vmem:[%s820 + $0x28] sm:$0xf]
      %v832 = vld [vmem:[%s820 + $0x2c] sm:$0xf]
      %v833 = vld [vmem:[%s820 + $0x30] sm:$0xf]
      %v834 = vld [vmem:[%s820 + $0x34] sm:$0xf]
      %v835 = vld [vmem:[%s820 + $0x38] sm:$0xf]
      %v836 = vld [vmem:[%s820 + $0x3c] sm:$0xf]
      %v847 = vunpack.c.l.b16 %v810
      %v848 = vunpack.c.l.b16 %v811
      %v849 = vunpack.c.l.b16 %v812
      %v850 = vunpack.c.l.b16 %v813
      %v851 = vunpack.c.l.b16 %v814
      %v852 = vunpack.c.l.b16 %v815
      %v853 = vunpack.c.l.b16 %v816
      %v854 = vunpack.c.l.b16 %v817
      %v855 = vunpack.c.l.b16 %v818
      %v856 = vunpack.c.l.b16 %v819
      %v857 = vpack.c.b16 %v848, %v847
      %v858 = vpack.c.b16 %v850, %v849
      %v859 = vpack.c.b16 %v852, %v851
      %v860 = vpack.c.b16 %v854, %v853
      %v861 = vpack.c.b16 %v856, %v855
      %vm862 = vsmask.f32 7424
      %v864 = vshrl.u32 %v857, 16
      %v866 = vshll.u32 %v857, 16
      %v868 = vrot.slane %v866, 1
      %v869 = vor.u32 %v864, %v868
      %v871 = vshll.u32 %v858, 16
      %v873 = vrot.slane %v871, 1
      %v874 = vsel %vm862, %v869, %v873
      %v875 = vshrl.u32 %v858, 16
      %v877 = vor.u32 %v875, %v873
      %v879 = vshll.u32 %v859, 16
      %v881 = vrot.slane %v879, 1
      %v882 = vsel %vm862, %v877, %v881
      %v883 = vshrl.u32 %v859, 16
      %v885 = vor.u32 %v883, %v881
      %v887 = vshll.u32 %v860, 16
      %v889 = vrot.slane %v887, 1
      %v890 = vsel %vm862, %v885, %v889
      %v891 = vshrl.u32 %v860, 16
      %v893 = vor.u32 %v891, %v889
      %v895 = vshll.u32 %v861, 16
      %v897 = vrot.slane %v895, 1
      %v898 = vsel %vm862, %v893, %v897
      %v899 = vshrl.u32 %v861, 16
      %v901 = vor.u32 %v899, %v897
      %v923 = vunpack.c.l.b16 %v821
      %v924 = vunpack.c.l.b16 %v822
      %v925 = vunpack.c.l.b16 %v823
      %v926 = vunpack.c.l.b16 %v824
      %v927 = vunpack.c.l.b16 %v825
      %v928 = vunpack.c.l.b16 %v826
      %v929 = vunpack.c.l.b16 %v827
      %v930 = vunpack.c.l.b16 %v828
      %v931 = vunpack.c.l.b16 %v829
      %v932 = vunpack.c.l.b16 %v830
      %v933 = vunpack.c.l.b16 %v831
      %v934 = vunpack.c.l.b16 %v832
      %v935 = vunpack.c.l.b16 %v833
      %v936 = vunpack.c.l.b16 %v834
      %v937 = vunpack.c.l.b16 %v835
      %v938 = vunpack.c.l.b16 %v836
      %v939 = vpack.c.b16 %v924, %v923
      %v940 = vpack.c.b16 %v926, %v925
      %v941 = vpack.c.b16 %v928, %v927
      %v942 = vpack.c.b16 %v930, %v929
      %v943 = vpack.c.b16 %v932, %v931
      %v944 = vpack.c.b16 %v934, %v933
      %v945 = vpack.c.b16 %v936, %v935
      %v946 = vpack.c.b16 %v938, %v937
      %955 = vmatprep.subr.bf16.mxu0 0
      %956 = vmatpush1.bf16.msra.mxu0 %v946
      %957 = vmatprep.subr.bf16.mxu0 0
      %958 = vmatpush1.bf16.msra.mxu0 %v945
      %959 = vmatprep.subr.bf16.mxu0 0
      %960 = vmatpush1.bf16.msra.mxu0 %v944
      %961 = vmatprep.subr.bf16.mxu0 0
      %962 = vmatpush1.bf16.msra.mxu0 %v943
      %963 = vmatprep.subr.bf16.mxu0 0
      %964 = vmatpush1.bf16.msra.mxu0 %v942
      %965 = vmatprep.subr.bf16.mxu0 0
      %966 = vmatpush1.bf16.msra.mxu0 %v941
      %967 = vmatprep.subr.bf16.mxu0 0
      %968 = vmatpush1.bf16.msra.mxu0 %v940
      %969 = vmatprep.subr.bf16.mxu0 0
      %970 = vmatpush1.bf16.msra.mxu0 %v939
      %971 = vmatprep.subr.bf16.mxu0 0
      %972 = vmatpush2.bf16.msra.mxu0 0
      %973 = vmatprep.subr.bf16.mxu0 0
      %974 = vmatpush2.bf16.msra.mxu0 0
      %975 = vmatprep.subr.bf16.mxu0 0
      %976 = vmatpush2.bf16.msra.mxu0 0
      %977 = vmatprep.subr.bf16.mxu0 0
      %978 = vmatpush2.bf16.msra.mxu0 0
      %979 = vmatprep.subr.bf16.mxu0 0
      %980 = vmatpush2.bf16.msra.mxu0 0
      %981 = vmatprep.subr.bf16.mxu0 0
      %982 = vmatpush2.bf16.msra.mxu0 0
      %983 = vmatprep.subr.bf16.mxu0 0
      %984 = vmatpush2.bf16.msra.mxu0 0
      %985 = vmatprep.subr.bf16.mxu0 0
      %986 = vmatpush2.bf16.msra.mxu0 0
      %987 = vmatprep.mubr.bf16.mxu0 0
      %988 = vmatmul.mubr.bf16.gmra.mxu0 %v874
      %v989 = vpop.f32.mrf.mxu0
      %v990 = vadd.f32 0.0, %v989
      %v991 = vpop.f32.mrf.mxu0
      %v992 = vpop.f32.mrf.mxu0
      %v993 = vadd.f32 0.0, %v992
      %v994 = vpop.f32.mrf.mxu0
      %995 = vmatprep.mubr.bf16.mxu0 0
      %996 = vmatmul.mubr.bf16.gmra.mxu0 %v882
      %v997 = vpop.f32.mrf.mxu0
      %v998 = vadd.f32 0.0, %v997
      %v999 = vpop.f32.mrf.mxu0
      %v1000 = vpop.f32.mrf.mxu0
      %v1001 = vadd.f32 0.0, %v1000
      %v1002 = vpop.f32.mrf.mxu0
      %1003 = vmatprep.mubr.bf16.mxu0 0
      %1004 = vmatmul.mubr.bf16.gmra.mxu0 %v890
      %v1005 = vpop.f32.mrf.mxu0
      %v1006 = vadd.f32 0.0, %v1005
      %v1007 = vpop.f32.mrf.mxu0
      %v1008 = vpop.f32.mrf.mxu0
      %v1009 = vadd.f32 0.0, %v1008
      %v1010 = vpop.f32.mrf.mxu0
      %1011 = vmatprep.mubr.bf16.mxu0 0
      %1012 = vmatmul.mubr.bf16.gmra.mxu0 %v898
      %v1013 = vpop.f32.mrf.mxu0
      %v1014 = vadd.f32 0.0, %v1013
      %v1015 = vpop.f32.mrf.mxu0
      %v1016 = vpop.f32.mrf.mxu0
      %v1017 = vadd.f32 0.0, %v1016
      %v1018 = vpop.f32.mrf.mxu0
      %1019 = vmatprep.mubr.bf16.mxu0 0
      %1020 = vmatmul.mubr.bf16.gmra.mxu0 %v901
      %v1021 = vpop.f32.mrf.mxu0
      %v1022 = vadd.f32 0.0, %v1021
      %v1023 = vpop.f32.mrf.mxu0
      %v1024 = vpop.f32.mrf.mxu0
      %v1025 = vpop.f32.mrf.mxu0
      %1026 = vdwg.mxu0
      %v1027 = vadd.f32 %v773, %v990
      %v1028 = vadd.f32 %v776, %v993
      %v1029 = vadd.f32 %v781, %v998
      %v1030 = vadd.f32 %v784, %v1001
      %v1031 = vadd.f32 %v789, %v1006
      %v1032 = vadd.f32 %v792, %v1009
      %v1033 = vadd.f32 %v797, %v1014
      %v1034 = vadd.f32 %v800, %v1017
      %v1035 = vadd.f32 %v805, %v1022
      %v1036 = vld [vmem:[%s440 + $0x58] sm:$0xf]
      %v1037 = vld [vmem:[%s440 + $0x5c] sm:$0xf]
      %v1038 = vld [vmem:[%s440 + $0x60] sm:$0xf]
      %v1039 = vld [vmem:[%s440 + $0x64] sm:$0xf]
      %v1040 = vld [vmem:[%s440 + $0x68] sm:$0xf]
      %v1041 = vld [vmem:[%s440 + $0x6c] sm:$0xf]
      %v1042 = vld [vmem:[%s440 + $0x70] sm:$0xf]
      %v1043 = vld [vmem:[%s440 + $0x74] sm:$0xf]
      %v1044 = vld [vmem:[%s440 + $0x78] sm:$0xf]
      %s1045 = scalar_lea.vmem %s1, 192
      %v1046 = vld [vmem:[%s1045] sm:$0xf]
      %v1047 = vld [vmem:[%s1045 + $0x4] sm:$0xf]
      %v1048 = vld [vmem:[%s1045 + $0x8] sm:$0xf]
      %v1049 = vld [vmem:[%s1045 + $0xc] sm:$0xf]
      %v1050 = vld [vmem:[%s1045 + $0x10] sm:$0xf]
      %v1051 = vld [vmem:[%s1045 + $0x14] sm:$0xf]
      %v1052 = vld [vmem:[%s1045 + $0x18] sm:$0xf]
      %v1053 = vld [vmem:[%s1045 + $0x1c] sm:$0xf]
      %v1054 = vld [vmem:[%s1045 + $0x20] sm:$0xf]
      %v1055 = vld [vmem:[%s1045 + $0x24] sm:$0xf]
      %v1056 = vld [vmem:[%s1045 + $0x28] sm:$0xf]
      %v1057 = vld [vmem:[%s1045 + $0x2c] sm:$0xf]
      %v1058 = vld [vmem:[%s1045 + $0x30] sm:$0xf]
      %v1059 = vld [vmem:[%s1045 + $0x34] sm:$0xf]
      %v1060 = vld [vmem:[%s1045 + $0x38] sm:$0xf]
      %v1061 = vld [vmem:[%s1045 + $0x3c] sm:$0xf]
      %v1071 = vunpack.c.l.b16 %v1036
      %v1072 = vunpack.c.l.b16 %v1037
      %v1073 = vunpack.c.l.b16 %v1038
      %v1074 = vunpack.c.l.b16 %v1039
      %v1075 = vunpack.c.l.b16 %v1040
      %v1076 = vunpack.c.l.b16 %v1041
      %v1077 = vunpack.c.l.b16 %v1042
      %v1078 = vunpack.c.l.b16 %v1043
      %v1079 = vunpack.c.l.b16 %v1044
      %v1080 = vpack.c.b16 %v1072, %v1071
      %v1081 = vpack.c.b16 %v1074, %v1073
      %v1082 = vpack.c.b16 %v1076, %v1075
      %v1083 = vpack.c.b16 %v1078, %v1077
      %v1084 = vpack.c.b16 %v1079, %v1079
      %v1106 = vunpack.c.l.b16 %v1046
      %v1107 = vunpack.c.l.b16 %v1047
      %v1108 = vunpack.c.l.b16 %v1048
      %v1109 = vunpack.c.l.b16 %v1049
      %v1110 = vunpack.c.l.b16 %v1050
      %v1111 = vunpack.c.l.b16 %v1051
      %v1112 = vunpack.c.l.b16 %v1052
      %v1113 = vunpack.c.l.b16 %v1053
      %v1114 = vunpack.c.l.b16 %v1054
      %v1115 = vunpack.c.l.b16 %v1055
      %v1116 = vunpack.c.l.b16 %v1056
      %v1117 = vunpack.c.l.b16 %v1057
      %v1118 = vunpack.c.l.b16 %v1058
      %v1119 = vunpack.c.l.b16 %v1059
      %v1120 = vunpack.c.l.b16 %v1060
      %v1121 = vunpack.c.l.b16 %v1061
      %v1122 = vpack.c.b16 %v1107, %v1106
      %v1123 = vpack.c.b16 %v1109, %v1108
      %v1124 = vpack.c.b16 %v1111, %v1110
      %v1125 = vpack.c.b16 %v1113, %v1112
      %v1126 = vpack.c.b16 %v1115, %v1114
      %v1127 = vpack.c.b16 %v1117, %v1116
      %v1128 = vpack.c.b16 %v1119, %v1118
      %v1129 = vpack.c.b16 %v1121, %v1120
      %1138 = vmatprep.subr.bf16.mxu0 0
      %1139 = vmatpush1.bf16.msra.mxu0 %v1129
      %1140 = vmatprep.subr.bf16.mxu0 0
      %1141 = vmatpush1.bf16.msra.mxu0 %v1128
      %1142 = vmatprep.subr.bf16.mxu0 0
      %1143 = vmatpush1.bf16.msra.mxu0 %v1127
      %1144 = vmatprep.subr.bf16.mxu0 0
      %1145 = vmatpush1.bf16.msra.mxu0 %v1126
      %1146 = vmatprep.subr.bf16.mxu0 0
      %1147 = vmatpush1.bf16.msra.mxu0 %v1125
      %1148 = vmatprep.subr.bf16.mxu0 0
      %1149 = vmatpush1.bf16.msra.mxu0 %v1124
      %1150 = vmatprep.subr.bf16.mxu0 0
      %1151 = vmatpush1.bf16.msra.mxu0 %v1123
      %1152 = vmatprep.subr.bf16.mxu0 0
      %1153 = vmatpush1.bf16.msra.mxu0 %v1122
      %1154 = vmatprep.subr.bf16.mxu0 0
      %1155 = vmatpush2.bf16.msra.mxu0 0
      %1156 = vmatprep.subr.bf16.mxu0 0
      %1157 = vmatpush2.bf16.msra.mxu0 0
      %1158 = vmatprep.subr.bf16.mxu0 0
      %1159 = vmatpush2.bf16.msra.mxu0 0
      %1160 = vmatprep.subr.bf16.mxu0 0
      %1161 = vmatpush2.bf16.msra.mxu0 0
      %1162 = vmatprep.subr.bf16.mxu0 0
      %1163 = vmatpush2.bf16.msra.mxu0 0
      %1164 = vmatprep.subr.bf16.mxu0 0
      %1165 = vmatpush2.bf16.msra.mxu0 0
      %1166 = vmatprep.subr.bf16.mxu0 0
      %1167 = vmatpush2.bf16.msra.mxu0 0
      %1168 = vmatprep.subr.bf16.mxu0 0
      %1169 = vmatpush2.bf16.msra.mxu0 0
      %1170 = vmatprep.mubr.bf16.mxu0 0
      %1171 = vmatmul.mubr.bf16.gmra.mxu0 %v1080
      %v1172 = vpop.f32.mrf.mxu0
      %v1173 = vadd.f32 0.0, %v1172
      %v1174 = vpop.f32.mrf.mxu0
      %v1175 = vpop.f32.mrf.mxu0
      %v1176 = vadd.f32 0.0, %v1175
      %v1177 = vpop.f32.mrf.mxu0
      %1178 = vmatprep.mubr.bf16.mxu0 0
      %1179 = vmatmul.mubr.bf16.gmra.mxu0 %v1081
      %v1180 = vpop.f32.mrf.mxu0
      %v1181 = vadd.f32 0.0, %v1180
      %v1182 = vpop.f32.mrf.mxu0
      %v1183 = vpop.f32.mrf.mxu0
      %v1184 = vadd.f32 0.0, %v1183
      %v1185 = vpop.f32.mrf.mxu0
      %1186 = vmatprep.mubr.bf16.mxu0 0
      %1187 = vmatmul.mubr.bf16.gmra.mxu0 %v1082
      %v1188 = vpop.f32.mrf.mxu0
      %v1189 = vadd.f32 0.0, %v1188
      %v1190 = vpop.f32.mrf.mxu0
      %v1191 = vpop.f32.mrf.mxu0
      %v1192 = vadd.f32 0.0, %v1191
      %v1193 = vpop.f32.mrf.mxu0
      %1194 = vmatprep.mubr.bf16.mxu0 0
      %1195 = vmatmul.mubr.bf16.gmra.mxu0 %v1083
      %v1196 = vpop.f32.mrf.mxu0
      %v1197 = vadd.f32 0.0, %v1196
      %v1198 = vpop.f32.mrf.mxu0
      %v1199 = vpop.f32.mrf.mxu0
      %v1200 = vadd.f32 0.0, %v1199
      %v1201 = vpop.f32.mrf.mxu0
      %1202 = vmatprep.mubr.bf16.mxu0 0
      %1203 = vmatmul.mubr.bf16.gmra.mxu0 %v1084
      %v1204 = vpop.f32.mrf.mxu0
      %v1205 = vadd.f32 0.0, %v1204
      %v1206 = vpop.f32.mrf.mxu0
      %v1207 = vpop.f32.mrf.mxu0
      %v1208 = vpop.f32.mrf.mxu0
      %1209 = vdwg.mxu0
      %v1210 = vadd.f32 %v1027, %v1173
      %v1211 = vadd.f32 %v1028, %v1176
      %v1212 = vadd.f32 %v1029, %v1181
      %v1213 = vadd.f32 %v1030, %v1184
      %v1214 = vadd.f32 %v1031, %v1189
      %v1215 = vadd.f32 %v1032, %v1192
      %v1216 = vadd.f32 %v1033, %v1197
      %v1217 = vadd.f32 %v1034, %v1200
      %v1218 = vadd.f32 %v1035, %v1205
      %v1219 = vld [vmem:[%s440 + $0x84] sm:$0xf]
      %v1220 = vld [vmem:[%s440 + $0x88] sm:$0xf]
      %v1221 = vld [vmem:[%s440 + $0x8c] sm:$0xf]
      %v1222 = vld [vmem:[%s440 + $0x90] sm:$0xf]
      %v1223 = vld [vmem:[%s440 + $0x94] sm:$0xf]
      %v1224 = vld [vmem:[%s440 + $0x98] sm:$0xf]
      %v1225 = vld [vmem:[%s440 + $0x9c] sm:$0xf]
      %v1226 = vld [vmem:[%s440 + $0xa0] sm:$0xf]
      %v1227 = vld [vmem:[%s440 + $0xa4] sm:$0xf]
      %s1228 = scalar_lea.vmem %s1, 256
      %v1229 = vld [vmem:[%s1228] sm:$0xf]
      %v1230 = vld [vmem:[%s1228 + $0x4] sm:$0xf]
      %v1231 = vld [vmem:[%s1228 + $0x8] sm:$0xf]
      %v1232 = vld [vmem:[%s1228 + $0xc] sm:$0xf]
      %v1233 = vld [vmem:[%s1228 + $0x10] sm:$0xf]
      %v1234 = vld [vmem:[%s1228 + $0x14] sm:$0xf]
      %v1235 = vld [vmem:[%s1228 + $0x18] sm:$0xf]
      %v1236 = vld [vmem:[%s1228 + $0x1c] sm:$0xf]
      %v1237 = vld [vmem:[%s1228 + $0x20] sm:$0xf]
      %v1238 = vld [vmem:[%s1228 + $0x24] sm:$0xf]
      %v1239 = vld [vmem:[%s1228 + $0x28] sm:$0xf]
      %v1240 = vld [vmem:[%s1228 + $0x2c] sm:$0xf]
      %v1241 = vld [vmem:[%s1228 + $0x30] sm:$0xf]
      %v1242 = vld [vmem:[%s1228 + $0x34] sm:$0xf]
      %v1243 = vld [vmem:[%s1228 + $0x38] sm:$0xf]
      %v1244 = vld [vmem:[%s1228 + $0x3c] sm:$0xf]
      %v1254 = vunpack.c.l.b16 %v1219
      %v1255 = vunpack.c.l.b16 %v1220
      %v1256 = vunpack.c.l.b16 %v1221
      %v1257 = vunpack.c.l.b16 %v1222
      %v1258 = vunpack.c.l.b16 %v1223
      %v1259 = vunpack.c.l.b16 %v1224
      %v1260 = vunpack.c.l.b16 %v1225
      %v1261 = vunpack.c.l.b16 %v1226
      %v1262 = vunpack.c.l.b16 %v1227
      %v1263 = vpack.c.b16 %v1255, %v1254
      %v1264 = vpack.c.b16 %v1257, %v1256
      %v1265 = vpack.c.b16 %v1259, %v1258
      %v1266 = vpack.c.b16 %v1261, %v1260
      %v1267 = vpack.c.b16 %v1262, %v1262
      %v1289 = vunpack.c.l.b16 %v1229
      %v1290 = vunpack.c.l.b16 %v1230
      %v1291 = vunpack.c.l.b16 %v1231
      %v1292 = vunpack.c.l.b16 %v1232
      %v1293 = vunpack.c.l.b16 %v1233
      %v1294 = vunpack.c.l.b16 %v1234
      %v1295 = vunpack.c.l.b16 %v1235
      %v1296 = vunpack.c.l.b16 %v1236
      %v1297 = vunpack.c.l.b16 %v1237
      %v1298 = vunpack.c.l.b16 %v1238
      %v1299 = vunpack.c.l.b16 %v1239
      %v1300 = vunpack.c.l.b16 %v1240
      %v1301 = vunpack.c.l.b16 %v1241
      %v1302 = vunpack.c.l.b16 %v1242
      %v1303 = vunpack.c.l.b16 %v1243
      %v1304 = vunpack.c.l.b16 %v1244
      %v1305 = vpack.c.b16 %v1290, %v1289
      %v1306 = vpack.c.b16 %v1292, %v1291
      %v1307 = vpack.c.b16 %v1294, %v1293
      %v1308 = vpack.c.b16 %v1296, %v1295
      %v1309 = vpack.c.b16 %v1298, %v1297
      %v1310 = vpack.c.b16 %v1300, %v1299
      %v1311 = vpack.c.b16 %v1302, %v1301
      %v1312 = vpack.c.b16 %v1304, %v1303
      %1321 = vmatprep.subr.bf16.mxu0 0
      %1322 = vmatpush1.bf16.msra.mxu0 %v1312
      %1323 = vmatprep.subr.bf16.mxu0 0
      %1324 = vmatpush1.bf16.msra.mxu0 %v1311
      %1325 = vmatprep.subr.bf16.mxu0 0
      %1326 = vmatpush1.bf16.msra.mxu0 %v1310
      %1327 = vmatprep.subr.bf16.mxu0 0
      %1328 = vmatpush1.bf16.msra.mxu0 %v1309
      %1329 = vmatprep.subr.bf16.mxu0 0
      %1330 = vmatpush1.bf16.msra.mxu0 %v1308
      %1331 = vmatprep.subr.bf16.mxu0 0
      %1332 = vmatpush1.bf16.msra.mxu0 %v1307
      %1333 = vmatprep.subr.bf16.mxu0 0
      %1334 = vmatpush1.bf16.msra.mxu0 %v1306
      %1335 = vmatprep.subr.bf16.mxu0 0
      %1336 = vmatpush1.bf16.msra.mxu0 %v1305
      %1337 = vmatprep.subr.bf16.mxu0 0
      %1338 = vmatpush2.bf16.msra.mxu0 0
      %1339 = vmatprep.subr.bf16.mxu0 0
      %1340 = vmatpush2.bf16.msra.mxu0 0
      %1341 = vmatprep.subr.bf16.mxu0 0
      %1342 = vmatpush2.bf16.msra.mxu0 0
      %1343 = vmatprep.subr.bf16.mxu0 0
      %1344 = vmatpush2.bf16.msra.mxu0 0
      %1345 = vmatprep.subr.bf16.mxu0 0
      %1346 = vmatpush2.bf16.msra.mxu0 0
      %1347 = vmatprep.subr.bf16.mxu0 0
      %1348 = vmatpush2.bf16.msra.mxu0 0
      %1349 = vmatprep.subr.bf16.mxu0 0
      %1350 = vmatpush2.bf16.msra.mxu0 0
      %1351 = vmatprep.subr.bf16.mxu0 0
      %1352 = vmatpush2.bf16.msra.mxu0 0
      %1353 = vmatprep.mubr.bf16.mxu0 0
      %1354 = vmatmul.mubr.bf16.gmra.mxu0 %v1263
      %v1355 = vpop.f32.mrf.mxu0
      %v1356 = vadd.f32 0.0, %v1355
      %v1357 = vpop.f32.mrf.mxu0
      %v1358 = vpop.f32.mrf.mxu0
      %v1359 = vadd.f32 0.0, %v1358
      %v1360 = vpop.f32.mrf.mxu0
      %1361 = vmatprep.mubr.bf16.mxu0 0
      %1362 = vmatmul.mubr.bf16.gmra.mxu0 %v1264
      %v1363 = vpop.f32.mrf.mxu0
      %v1364 = vadd.f32 0.0, %v1363
      %v1365 = vpop.f32.mrf.mxu0
      %v1366 = vpop.f32.mrf.mxu0
      %v1367 = vadd.f32 0.0, %v1366
      %v1368 = vpop.f32.mrf.mxu0
      %1369 = vmatprep.mubr.bf16.mxu0 0
      %1370 = vmatmul.mubr.bf16.gmra.mxu0 %v1265
      %v1371 = vpop.f32.mrf.mxu0
      %v1372 = vadd.f32 0.0, %v1371
      %v1373 = vpop.f32.mrf.mxu0
      %v1374 = vpop.f32.mrf.mxu0
      %v1375 = vadd.f32 0.0, %v1374
      %v1376 = vpop.f32.mrf.mxu0
      %1377 = vmatprep.mubr.bf16.mxu0 0
      %1378 = vmatmul.mubr.bf16.gmra.mxu0 %v1266
      %v1379 = vpop.f32.mrf.mxu0
      %v1380 = vadd.f32 0.0, %v1379
      %v1381 = vpop.f32.mrf.mxu0
      %v1382 = vpop.f32.mrf.mxu0
      %v1383 = vadd.f32 0.0, %v1382
      %v1384 = vpop.f32.mrf.mxu0
      %1385 = vmatprep.mubr.bf16.mxu0 0
      %1386 = vmatmul.mubr.bf16.gmra.mxu0 %v1267
      %v1387 = vpop.f32.mrf.mxu0
      %v1388 = vadd.f32 0.0, %v1387
      %v1389 = vpop.f32.mrf.mxu0
      %v1390 = vpop.f32.mrf.mxu0
      %v1391 = vpop.f32.mrf.mxu0
      %1392 = vdwg.mxu0
      %v1393 = vadd.f32 %v1210, %v1356
      %v1394 = vadd.f32 %v1211, %v1359
      %v1395 = vadd.f32 %v1212, %v1364
      %v1396 = vadd.f32 %v1213, %v1367
      %v1397 = vadd.f32 %v1214, %v1372
      %v1398 = vadd.f32 %v1215, %v1375
      %v1399 = vadd.f32 %v1216, %v1380
      %v1400 = vadd.f32 %v1217, %v1383
      %v1401 = vadd.f32 %v1218, %v1388
      %v1402 = vld [vmem:[%s440 + $0x58] sm:$0xf]
      %v1403 = vld [vmem:[%s440 + $0x5c] sm:$0xf]
      %v1404 = vld [vmem:[%s440 + $0x60] sm:$0xf]
      %v1405 = vld [vmem:[%s440 + $0x64] sm:$0xf]
      %v1406 = vld [vmem:[%s440 + $0x68] sm:$0xf]
      %v1407 = vld [vmem:[%s440 + $0x6c] sm:$0xf]
      %v1408 = vld [vmem:[%s440 + $0x70] sm:$0xf]
      %v1409 = vld [vmem:[%s440 + $0x74] sm:$0xf]
      %v1410 = vld [vmem:[%s440 + $0x78] sm:$0xf]
      %v1411 = vld [vmem:[%s440 + $0x7c] sm:$0x1]
      %s1412 = scalar_lea.vmem %s1, 320
      %v1413 = vld [vmem:[%s1412] sm:$0xf]
      %v1414 = vld [vmem:[%s1412 + $0x4] sm:$0xf]
      %v1415 = vld [vmem:[%s1412 + $0x8] sm:$0xf]
      %v1416 = vld [vmem:[%s1412 + $0xc] sm:$0xf]
      %v1417 = vld [vmem:[%s1412 + $0x10] sm:$0xf]
      %v1418 = vld [vmem:[%s1412 + $0x14] sm:$0xf]
      %v1419 = vld [vmem:[%s1412 + $0x18] sm:$0xf]
      %v1420 = vld [vmem:[%s1412 + $0x1c] sm:$0xf]
      %v1421 = vld [vmem:[%s1412 + $0x20] sm:$0xf]
      %v1422 = vld [vmem:[%s1412 + $0x24] sm:$0xf]
      %v1423 = vld [vmem:[%s1412 + $0x28] sm:$0xf]
      %v1424 = vld [vmem:[%s1412 + $0x2c] sm:$0xf]
      %v1425 = vld [vmem:[%s1412 + $0x30] sm:$0xf]
      %v1426 = vld [vmem:[%s1412 + $0x34] sm:$0xf]
      %v1427 = vld [vmem:[%s1412 + $0x38] sm:$0xf]
      %v1428 = vld [vmem:[%s1412 + $0x3c] sm:$0xf]
      %v1439 = vunpack.c.l.b16 %v1402
      %v1440 = vunpack.c.l.b16 %v1403
      %v1441 = vunpack.c.l.b16 %v1404
      %v1442 = vunpack.c.l.b16 %v1405
      %v1443 = vunpack.c.l.b16 %v1406
      %v1444 = vunpack.c.l.b16 %v1407
      %v1445 = vunpack.c.l.b16 %v1408
      %v1446 = vunpack.c.l.b16 %v1409
      %v1447 = vunpack.c.l.b16 %v1410
      %v1448 = vunpack.c.l.b16 %v1411
      %v1449 = vpack.c.b16 %v1440, %v1439
      %v1450 = vpack.c.b16 %v1442, %v1441
      %v1451 = vpack.c.b16 %v1444, %v1443
      %v1452 = vpack.c.b16 %v1446, %v1445
      %v1453 = vpack.c.b16 %v1448, %v1447
      %v1455 = vshrl.u32 %v1449, 16
      %v1457 = vshll.u32 %v1449, 16
      %v1459 = vrot.slane %v1457, 1
      %v1460 = vor.u32 %v1455, %v1459
      %v1462 = vshll.u32 %v1450, 16
      %v1464 = vrot.slane %v1462, 1
      %v1465 = vsel %vm862, %v1460, %v1464
      %v1466 = vshrl.u32 %v1450, 16
      %v1468 = vor.u32 %v1466, %v1464
      %v1470 = vshll.u32 %v1451, 16
      %v1472 = vrot.slane %v1470, 1
      %v1473 = vsel %vm862, %v1468, %v1472
      %v1474 = vshrl.u32 %v1451, 16
      %v1476 = vor.u32 %v1474, %v1472
      %v1478 = vshll.u32 %v1452, 16
      %v1480 = vrot.slane %v1478, 1
      %v1481 = vsel %vm862, %v1476, %v1480
      %v1482 = vshrl.u32 %v1452, 16
      %v1484 = vor.u32 %v1482, %v1480
      %v1486 = vshll.u32 %v1453, 16
      %v1488 = vrot.slane %v1486, 1
      %v1489 = vsel %vm862, %v1484, %v1488
      %v1490 = vshrl.u32 %v1453, 16
      %v1492 = vor.u32 %v1490, %v1488
      %v1514 = vunpack.c.l.b16 %v1413
      %v1515 = vunpack.c.l.b16 %v1414
      %v1516 = vunpack.c.l.b16 %v1415
      %v1517 = vunpack.c.l.b16 %v1416
      %v1518 = vunpack.c.l.b16 %v1417
      %v1519 = vunpack.c.l.b16 %v1418
      %v1520 = vunpack.c.l.b16 %v1419
      %v1521 = vunpack.c.l.b16 %v1420
      %v1522 = vunpack.c.l.b16 %v1421
      %v1523 = vunpack.c.l.b16 %v1422
      %v1524 = vunpack.c.l.b16 %v1423
      %v1525 = vunpack.c.l.b16 %v1424
      %v1526 = vunpack.c.l.b16 %v1425
      %v1527 = vunpack.c.l.b16 %v1426
      %v1528 = vunpack.c.l.b16 %v1427
      %v1529 = vunpack.c.l.b16 %v1428
      %v1530 = vpack.c.b16 %v1515, %v1514
      %v1531 = vpack.c.b16 %v1517, %v1516
      %v1532 = vpack.c.b16 %v1519, %v1518
      %v1533 = vpack.c.b16 %v1521, %v1520
      %v1534 = vpack.c.b16 %v1523, %v1522
      %v1535 = vpack.c.b16 %v1525, %v1524
      %v1536 = vpack.c.b16 %v1527, %v1526
      %v1537 = vpack.c.b16 %v1529, %v1528
      %1546 = vmatprep.subr.bf16.mxu0 0
      %1547 = vmatpush1.bf16.msra.mxu0 %v1537
      %1548 = vmatprep.subr.bf16.mxu0 0
      %1549 = vmatpush1.bf16.msra.mxu0 %v1536
      %1550 = vmatprep.subr.bf16.mxu0 0
      %1551 = vmatpush1.bf16.msra.mxu0 %v1535
      %1552 = vmatprep.subr.bf16.mxu0 0
      %1553 = vmatpush1.bf16.msra.mxu0 %v1534
      %1554 = vmatprep.subr.bf16.mxu0 0
      %1555 = vmatpush1.bf16.msra.mxu0 %v1533
      %1556 = vmatprep.subr.bf16.mxu0 0
      %1557 = vmatpush1.bf16.msra.mxu0 %v1532
      %1558 = vmatprep.subr.bf16.mxu0 0
      %1559 = vmatpush1.bf16.msra.mxu0 %v1531
      %1560 = vmatprep.subr.bf16.mxu0 0
      %1561 = vmatpush1.bf16.msra.mxu0 %v1530
      %1562 = vmatprep.subr.bf16.mxu0 0
      %1563 = vmatpush2.bf16.msra.mxu0 0
      %1564 = vmatprep.subr.bf16.mxu0 0
      %1565 = vmatpush2.bf16.msra.mxu0 0
      %1566 = vmatprep.subr.bf16.mxu0 0
      %1567 = vmatpush2.bf16.msra.mxu0 0
      %1568 = vmatprep.subr.bf16.mxu0 0
      %1569 = vmatpush2.bf16.msra.mxu0 0
      %1570 = vmatprep.subr.bf16.mxu0 0
      %1571 = vmatpush2.bf16.msra.mxu0 0
      %1572 = vmatprep.subr.bf16.mxu0 0
      %1573 = vmatpush2.bf16.msra.mxu0 0
      %1574 = vmatprep.subr.bf16.mxu0 0
      %1575 = vmatpush2.bf16.msra.mxu0 0
      %1576 = vmatprep.subr.bf16.mxu0 0
      %1577 = vmatpush2.bf16.msra.mxu0 0
      %1578 = vmatprep.mubr.bf16.mxu0 0
      %1579 = vmatmul.mubr.bf16.gmra.mxu0 %v1465
      %v1580 = vpop.f32.mrf.mxu0
      %v1581 = vadd.f32 0.0, %v1580
      %v1582 = vpop.f32.mrf.mxu0
      %v1583 = vpop.f32.mrf.mxu0
      %v1584 = vadd.f32 0.0, %v1583
      %v1585 = vpop.f32.mrf.mxu0
      %1586 = vmatprep.mubr.bf16.mxu0 0
      %1587 = vmatmul.mubr.bf16.gmra.mxu0 %v1473
      %v1588 = vpop.f32.mrf.mxu0
      %v1589 = vadd.f32 0.0, %v1588
      %v1590 = vpop.f32.mrf.mxu0
      %v1591 = vpop.f32.mrf.mxu0
      %v1592 = vadd.f32 0.0, %v1591
      %v1593 = vpop.f32.mrf.mxu0
      %1594 = vmatprep.mubr.bf16.mxu0 0
      %1595 = vmatmul.mubr.bf16.gmra.mxu0 %v1481
      %v1596 = vpop.f32.mrf.mxu0
      %v1597 = vadd.f32 0.0, %v1596
      %v1598 = vpop.f32.mrf.mxu0
      %v1599 = vpop.f32.mrf.mxu0
      %v1600 = vadd.f32 0.0, %v1599
      %v1601 = vpop.f32.mrf.mxu0
      %1602 = vmatprep.mubr.bf16.mxu0 0
      %1603 = vmatmul.mubr.bf16.gmra.mxu0 %v1489
      %v1604 = vpop.f32.mrf.mxu0
      %v1605 = vadd.f32 0.0, %v1604
      %v1606 = vpop.f32.mrf.mxu0
      %v1607 = vpop.f32.mrf.mxu0
      %v1608 = vadd.f32 0.0, %v1607
      %v1609 = vpop.f32.mrf.mxu0
      %1610 = vmatprep.mubr.bf16.mxu0 0
      %1611 = vmatmul.mubr.bf16.gmra.mxu0 %v1492
      %v1612 = vpop.f32.mrf.mxu0
      %v1613 = vadd.f32 0.0, %v1612
      %v1614 = vpop.f32.mrf.mxu0
      %v1615 = vpop.f32.mrf.mxu0
      %v1616 = vpop.f32.mrf.mxu0
      %1617 = vdwg.mxu0
      %v1618 = vadd.f32 %v1393, %v1581
      %v1619 = vadd.f32 %v1394, %v1584
      %v1620 = vadd.f32 %v1395, %v1589
      %v1621 = vadd.f32 %v1396, %v1592
      %v1622 = vadd.f32 %v1397, %v1597
      %v1623 = vadd.f32 %v1398, %v1600
      %v1624 = vadd.f32 %v1399, %v1605
      %v1625 = vadd.f32 %v1400, %v1608
      %v1626 = vadd.f32 %v1401, %v1613
      %v1627 = vld [vmem:[%s440 + $0x4] sm:$0xf]
      %v1628 = vld [vmem:[%s440 + $0x8] sm:$0xf]
      %v1629 = vld [vmem:[%s440 + $0xc] sm:$0xf]
      %v1630 = vld [vmem:[%s440 + $0x10] sm:$0xf]
      %v1631 = vld [vmem:[%s440 + $0x14] sm:$0xf]
      %v1632 = vld [vmem:[%s440 + $0x18] sm:$0xf]
      %v1633 = vld [vmem:[%s440 + $0x1c] sm:$0xf]
      %v1634 = vld [vmem:[%s440 + $0x20] sm:$0xf]
      %v1635 = vld [vmem:[%s440 + $0x24] sm:$0xf]
      %v1636 = vld [vmem:[%s440 + $0x28] sm:$0x1]
      %s1637 = scalar_lea.vmem %s1, 384
      %v1638 = vld [vmem:[%s1637] sm:$0xf]
      %v1639 = vld [vmem:[%s1637 + $0x4] sm:$0xf]
      %v1640 = vld [vmem:[%s1637 + $0x8] sm:$0xf]
      %v1641 = vld [vmem:[%s1637 + $0xc] sm:$0xf]
      %v1642 = vld [vmem:[%s1637 + $0x10] sm:$0xf]
      %v1643 = vld [vmem:[%s1637 + $0x14] sm:$0xf]
      %v1644 = vld [vmem:[%s1637 + $0x18] sm:$0xf]
      %v1645 = vld [vmem:[%s1637 + $0x1c] sm:$0xf]
      %v1646 = vld [vmem:[%s1637 + $0x20] sm:$0xf]
      %v1647 = vld [vmem:[%s1637 + $0x24] sm:$0xf]
      %v1648 = vld [vmem:[%s1637 + $0x28] sm:$0xf]
      %v1649 = vld [vmem:[%s1637 + $0x2c] sm:$0xf]
      %v1650 = vld [vmem:[%s1637 + $0x30] sm:$0xf]
      %v1651 = vld [vmem:[%s1637 + $0x34] sm:$0xf]
      %v1652 = vld [vmem:[%s1637 + $0x38] sm:$0xf]
      %v1653 = vld [vmem:[%s1637 + $0x3c] sm:$0xf]
      %v1664 = vunpack.c.l.b16 %v1627
      %v1665 = vunpack.c.l.b16 %v1628
      %v1666 = vunpack.c.l.b16 %v1629
      %v1667 = vunpack.c.l.b16 %v1630
      %v1668 = vunpack.c.l.b16 %v1631
      %v1669 = vunpack.c.l.b16 %v1632
      %v1670 = vunpack.c.l.b16 %v1633
      %v1671 = vunpack.c.l.b16 %v1634
      %v1672 = vunpack.c.l.b16 %v1635
      %v1673 = vunpack.c.l.b16 %v1636
      %v1674 = vpack.c.b16 %v1665, %v1664
      %v1675 = vpack.c.b16 %v1667, %v1666
      %v1676 = vpack.c.b16 %v1669, %v1668
      %v1677 = vpack.c.b16 %v1671, %v1670
      %v1678 = vpack.c.b16 %v1673, %v1672
      %v1680 = vshrl.u32 %v1674, 16
      %v1682 = vshll.u32 %v1674, 16
      %v1684 = vrot.slane %v1682, 1
      %v1685 = vor.u32 %v1680, %v1684
      %v1687 = vshll.u32 %v1675, 16
      %v1689 = vrot.slane %v1687, 1
      %v1690 = vsel %vm862, %v1685, %v1689
      %v1691 = vshrl.u32 %v1675, 16
      %v1693 = vor.u32 %v1691, %v1689
      %v1695 = vshll.u32 %v1676, 16
      %v1697 = vrot.slane %v1695, 1
      %v1698 = vsel %vm862, %v1693, %v1697
      %v1699 = vshrl.u32 %v1676, 16
      %v1701 = vor.u32 %v1699, %v1697
      %v1703 = vshll.u32 %v1677, 16
      %v1705 = vrot.slane %v1703, 1
      %v1706 = vsel %vm862, %v1701, %v1705
      %v1707 = vshrl.u32 %v1677, 16
      %v1709 = vor.u32 %v1707, %v1705
      %v1711 = vshll.u32 %v1678, 16
      %v1713 = vrot.slane %v1711, 1
      %v1714 = vsel %vm862, %v1709, %v1713
      %v1715 = vshrl.u32 %v1678, 16
      %v1717 = vor.u32 %v1715, %v1713
      %v1739 = vunpack.c.l.b16 %v1638
      %v1740 = vunpack.c.l.b16 %v1639
      %v1741 = vunpack.c.l.b16 %v1640
      %v1742 = vunpack.c.l.b16 %v1641
      %v1743 = vunpack.c.l.b16 %v1642
      %v1744 = vunpack.c.l.b16 %v1643
      %v1745 = vunpack.c.l.b16 %v1644
      %v1746 = vunpack.c.l.b16 %v1645
      %v1747 = vunpack.c.l.b16 %v1646
      %v1748 = vunpack.c.l.b16 %v1647
      %v1749 = vunpack.c.l.b16 %v1648
      %v1750 = vunpack.c.l.b16 %v1649
      %v1751 = vunpack.c.l.b16 %v1650
      %v1752 = vunpack.c.l.b16 %v1651
      %v1753 = vunpack.c.l.b16 %v1652
      %v1754 = vunpack.c.l.b16 %v1653
      %v1755 = vpack.c.b16 %v1740, %v1739
      %v1756 = vpack.c.b16 %v1742, %v1741
      %v1757 = vpack.c.b16 %v1744, %v1743
      %v1758 = vpack.c.b16 %v1746, %v1745
      %v1759 = vpack.c.b16 %v1748, %v1747
      %v1760 = vpack.c.b16 %v1750, %v1749
      %v1761 = vpack.c.b16 %v1752, %v1751
      %v1762 = vpack.c.b16 %v1754, %v1753
      %1771 = vmatprep.subr.bf16.mxu0 0
      %1772 = vmatpush1.bf16.msra.mxu0 %v1762
      %1773 = vmatprep.subr.bf16.mxu0 0
      %1774 = vmatpush1.bf16.msra.mxu0 %v1761
      %1775 = vmatprep.subr.bf16.mxu0 0
      %1776 = vmatpush1.bf16.msra.mxu0 %v1760
      %1777 = vmatprep.subr.bf16.mxu0 0
      %1778 = vmatpush1.bf16.msra.mxu0 %v1759
      %1779 = vmatprep.subr.bf16.mxu0 0
      %1780 = vmatpush1.bf16.msra.mxu0 %v1758
      %1781 = vmatprep.subr.bf16.mxu0 0
      %1782 = vmatpush1.bf16.msra.mxu0 %v1757
      %1783 = vmatprep.subr.bf16.mxu0 0
      %1784 = vmatpush1.bf16.msra.mxu0 %v1756
      %1785 = vmatprep.subr.bf16.mxu0 0
      %1786 = vmatpush1.bf16.msra.mxu0 %v1755
      %1787 = vmatprep.subr.bf16.mxu0 0
      %1788 = vmatpush2.bf16.msra.mxu0 0
      %1789 = vmatprep.subr.bf16.mxu0 0
      %1790 = vmatpush2.bf16.msra.mxu0 0
      %1791 = vmatprep.subr.bf16.mxu0 0
      %1792 = vmatpush2.bf16.msra.mxu0 0
      %1793 = vmatprep.subr.bf16.mxu0 0
      %1794 = vmatpush2.bf16.msra.mxu0 0
      %1795 = vmatprep.subr.bf16.mxu0 0
      %1796 = vmatpush2.bf16.msra.mxu0 0
      %1797 = vmatprep.subr.bf16.mxu0 0
      %1798 = vmatpush2.bf16.msra.mxu0 0
      %1799 = vmatprep.subr.bf16.mxu0 0
      %1800 = vmatpush2.bf16.msra.mxu0 0
      %1801 = vmatprep.subr.bf16.mxu0 0
      %1802 = vmatpush2.bf16.msra.mxu0 0
      %1803 = vmatprep.mubr.bf16.mxu0 0
      %1804 = vmatmul.mubr.bf16.gmra.mxu0 %v1690
      %v1805 = vpop.f32.mrf.mxu0
      %v1806 = vadd.f32 0.0, %v1805
      %v1807 = vpop.f32.mrf.mxu0
      %v1808 = vpop.f32.mrf.mxu0
      %v1809 = vadd.f32 0.0, %v1808
      %v1810 = vpop.f32.mrf.mxu0
      %1811 = vmatprep.mubr.bf16.mxu0 0
      %1812 = vmatmul.mubr.bf16.gmra.mxu0 %v1698
      %v1813 = vpop.f32.mrf.mxu0
      %v1814 = vadd.f32 0.0, %v1813
      %v1815 = vpop.f32.mrf.mxu0
      %v1816 = vpop.f32.mrf.mxu0
      %v1817 = vadd.f32 0.0, %v1816
      %v1818 = vpop.f32.mrf.mxu0
      %1819 = vmatprep.mubr.bf16.mxu0 0
      %1820 = vmatmul.mubr.bf16.gmra.mxu0 %v1706
      %v1821 = vpop.f32.mrf.mxu0
      %v1822 = vadd.f32 0.0, %v1821
      %v1823 = vpop.f32.mrf.mxu0
      %v1824 = vpop.f32.mrf.mxu0
      %v1825 = vadd.f32 0.0, %v1824
      %v1826 = vpop.f32.mrf.mxu0
      %1827 = vmatprep.mubr.bf16.mxu0 0
      %1828 = vmatmul.mubr.bf16.gmra.mxu0 %v1714
      %v1829 = vpop.f32.mrf.mxu0
      %v1830 = vadd.f32 0.0, %v1829
      %v1831 = vpop.f32.mrf.mxu0
      %v1832 = vpop.f32.mrf.mxu0
      %v1833 = vadd.f32 0.0, %v1832
      %v1834 = vpop.f32.mrf.mxu0
      %1835 = vmatprep.mubr.bf16.mxu0 0
      %1836 = vmatmul.mubr.bf16.gmra.mxu0 %v1717
      %v1837 = vpop.f32.mrf.mxu0
      %v1838 = vadd.f32 0.0, %v1837
      %v1839 = vpop.f32.mrf.mxu0
      %v1840 = vpop.f32.mrf.mxu0
      %v1841 = vpop.f32.mrf.mxu0
      %1842 = vdwg.mxu0
      %v1843 = vadd.f32 %v1618, %v1806
      %v1844 = vadd.f32 %v1619, %v1809
      %v1845 = vadd.f32 %v1620, %v1814
      %v1846 = vadd.f32 %v1621, %v1817
      %v1847 = vadd.f32 %v1622, %v1822
      %v1848 = vadd.f32 %v1623, %v1825
      %v1849 = vadd.f32 %v1624, %v1830
      %v1850 = vadd.f32 %v1625, %v1833
      %v1851 = vadd.f32 %v1626, %v1838
      %v1852 = vld [vmem:[%s440 + $0x30] sm:$0xf]
      %v1853 = vld [vmem:[%s440 + $0x34] sm:$0xf]
      %v1854 = vld [vmem:[%s440 + $0x38] sm:$0xf]
      %v1855 = vld [vmem:[%s440 + $0x3c] sm:$0xf]
      %v1856 = vld [vmem:[%s440 + $0x40] sm:$0xf]
      %v1857 = vld [vmem:[%s440 + $0x44] sm:$0xf]
      %v1858 = vld [vmem:[%s440 + $0x48] sm:$0xf]
      %v1859 = vld [vmem:[%s440 + $0x4c] sm:$0xf]
      %v1860 = vld [vmem:[%s440 + $0x50] sm:$0xf]
      %v1861 = vld [vmem:[%s440 + $0x54] sm:$0x1]
      %s1862 = scalar_lea.vmem %s1, 448
      %v1863 = vld [vmem:[%s1862] sm:$0xf]
      %v1864 = vld [vmem:[%s1862 + $0x4] sm:$0xf]
      %v1865 = vld [vmem:[%s1862 + $0x8] sm:$0xf]
      %v1866 = vld [vmem:[%s1862 + $0xc] sm:$0xf]
      %v1867 = vld [vmem:[%s1862 + $0x10] sm:$0xf]
      %v1868 = vld [vmem:[%s1862 + $0x14] sm:$0xf]
      %v1869 = vld [vmem:[%s1862 + $0x18] sm:$0xf]
      %v1870 = vld [vmem:[%s1862 + $0x1c] sm:$0xf]
      %v1871 = vld [vmem:[%s1862 + $0x20] sm:$0xf]
      %v1872 = vld [vmem:[%s1862 + $0x24] sm:$0xf]
      %v1873 = vld [vmem:[%s1862 + $0x28] sm:$0xf]
      %v1874 = vld [vmem:[%s1862 + $0x2c] sm:$0xf]
      %v1875 = vld [vmem:[%s1862 + $0x30] sm:$0xf]
      %v1876 = vld [vmem:[%s1862 + $0x34] sm:$0xf]
      %v1877 = vld [vmem:[%s1862 + $0x38] sm:$0xf]
      %v1878 = vld [vmem:[%s1862 + $0x3c] sm:$0xf]
      %v1889 = vunpack.c.l.b16 %v1852
      %v1890 = vunpack.c.l.b16 %v1853
      %v1891 = vunpack.c.l.b16 %v1854
      %v1892 = vunpack.c.l.b16 %v1855
      %v1893 = vunpack.c.l.b16 %v1856
      %v1894 = vunpack.c.l.b16 %v1857
      %v1895 = vunpack.c.l.b16 %v1858
      %v1896 = vunpack.c.l.b16 %v1859
      %v1897 = vunpack.c.l.b16 %v1860
      %v1898 = vunpack.c.l.b16 %v1861
      %v1899 = vpack.c.b16 %v1890, %v1889
      %v1900 = vpack.c.b16 %v1892, %v1891
      %v1901 = vpack.c.b16 %v1894, %v1893
      %v1902 = vpack.c.b16 %v1896, %v1895
      %v1903 = vpack.c.b16 %v1898, %v1897
      %v1905 = vshrl.u32 %v1899, 16
      %v1907 = vshll.u32 %v1899, 16
      %v1909 = vrot.slane %v1907, 1
      %v1910 = vor.u32 %v1905, %v1909
      %v1912 = vshll.u32 %v1900, 16
      %v1914 = vrot.slane %v1912, 1
      %v1915 = vsel %vm862, %v1910, %v1914
      %v1916 = vshrl.u32 %v1900, 16
      %v1918 = vor.u32 %v1916, %v1914
      %v1920 = vshll.u32 %v1901, 16
      %v1922 = vrot.slane %v1920, 1
      %v1923 = vsel %vm862, %v1918, %v1922
      %v1924 = vshrl.u32 %v1901, 16
      %v1926 = vor.u32 %v1924, %v1922
      %v1928 = vshll.u32 %v1902, 16
      %v1930 = vrot.slane %v1928, 1
      %v1931 = vsel %vm862, %v1926, %v1930
      %v1932 = vshrl.u32 %v1902, 16
      %v1934 = vor.u32 %v1932, %v1930
      %v1936 = vshll.u32 %v1903, 16
      %v1938 = vrot.slane %v1936, 1
      %v1939 = vsel %vm862, %v1934, %v1938
      %v1940 = vshrl.u32 %v1903, 16
      %v1942 = vor.u32 %v1940, %v1938
      %v1964 = vunpack.c.l.b16 %v1863
      %v1965 = vunpack.c.l.b16 %v1864
      %v1966 = vunpack.c.l.b16 %v1865
      %v1967 = vunpack.c.l.b16 %v1866
      %v1968 = vunpack.c.l.b16 %v1867
      %v1969 = vunpack.c.l.b16 %v1868
      %v1970 = vunpack.c.l.b16 %v1869
      %v1971 = vunpack.c.l.b16 %v1870
      %v1972 = vunpack.c.l.b16 %v1871
      %v1973 = vunpack.c.l.b16 %v1872
      %v1974 = vunpack.c.l.b16 %v1873
      %v1975 = vunpack.c.l.b16 %v1874
      %v1976 = vunpack.c.l.b16 %v1875
      %v1977 = vunpack.c.l.b16 %v1876
      %v1978 = vunpack.c.l.b16 %v1877
      %v1979 = vunpack.c.l.b16 %v1878
      %v1980 = vpack.c.b16 %v1965, %v1964
      %v1981 = vpack.c.b16 %v1967, %v1966
      %v1982 = vpack.c.b16 %v1969, %v1968
      %v1983 = vpack.c.b16 %v1971, %v1970
      %v1984 = vpack.c.b16 %v1973, %v1972
      %v1985 = vpack.c.b16 %v1975, %v1974
      %v1986 = vpack.c.b16 %v1977, %v1976
      %v1987 = vpack.c.b16 %v1979, %v1978
      %1996 = vmatprep.subr.bf16.mxu0 0
      %1997 = vmatpush1.bf16.msra.mxu0 %v1987
      %1998 = vmatprep.subr.bf16.mxu0 0
      %1999 = vmatpush1.bf16.msra.mxu0 %v1986
      %2000 = vmatprep.subr.bf16.mxu0 0
      %2001 = vmatpush1.bf16.msra.mxu0 %v1985
      %2002 = vmatprep.subr.bf16.mxu0 0
      %2003 = vmatpush1.bf16.msra.mxu0 %v1984
      %2004 = vmatprep.subr.bf16.mxu0 0
      %2005 = vmatpush1.bf16.msra.mxu0 %v1983
      %2006 = vmatprep.subr.bf16.mxu0 0
      %2007 = vmatpush1.bf16.msra.mxu0 %v1982
      %2008 = vmatprep.subr.bf16.mxu0 0
      %2009 = vmatpush1.bf16.msra.mxu0 %v1981
      %2010 = vmatprep.subr.bf16.mxu0 0
      %2011 = vmatpush1.bf16.msra.mxu0 %v1980
      %2012 = vmatprep.subr.bf16.mxu0 0
      %2013 = vmatpush2.bf16.msra.mxu0 0
      %2014 = vmatprep.subr.bf16.mxu0 0
      %2015 = vmatpush2.bf16.msra.mxu0 0
      %2016 = vmatprep.subr.bf16.mxu0 0
      %2017 = vmatpush2.bf16.msra.mxu0 0
      %2018 = vmatprep.subr.bf16.mxu0 0
      %2019 = vmatpush2.bf16.msra.mxu0 0
      %2020 = vmatprep.subr.bf16.mxu0 0
      %2021 = vmatpush2.bf16.msra.mxu0 0
      %2022 = vmatprep.subr.bf16.mxu0 0
      %2023 = vmatpush2.bf16.msra.mxu0 0
      %2024 = vmatprep.subr.bf16.mxu0 0
      %2025 = vmatpush2.bf16.msra.mxu0 0
      %2026 = vmatprep.subr.bf16.mxu0 0
      %2027 = vmatpush2.bf16.msra.mxu0 0
      %2028 = vmatprep.mubr.bf16.mxu0 0
      %2029 = vmatmul.mubr.bf16.gmra.mxu0 %v1915
      %v2030 = vpop.f32.mrf.mxu0
      %v2031 = vadd.f32 0.0, %v2030
      %v2032 = vpop.f32.mrf.mxu0
      %v2033 = vpop.f32.mrf.mxu0
      %v2034 = vadd.f32 0.0, %v2033
      %v2035 = vpop.f32.mrf.mxu0
      %2036 = vmatprep.mubr.bf16.mxu0 0
      %2037 = vmatmul.mubr.bf16.gmra.mxu0 %v1923
      %v2038 = vpop.f32.mrf.mxu0
      %v2039 = vadd.f32 0.0, %v2038
      %v2040 = vpop.f32.mrf.mxu0
      %v2041 = vpop.f32.mrf.mxu0
      %v2042 = vadd.f32 0.0, %v2041
      %v2043 = vpop.f32.mrf.mxu0
      %2044 = vmatprep.mubr.bf16.mxu0 0
      %2045 = vmatmul.mubr.bf16.gmra.mxu0 %v1931
      %v2046 = vpop.f32.mrf.mxu0
      %v2047 = vadd.f32 0.0, %v2046
      %v2048 = vpop.f32.mrf.mxu0
      %v2049 = vpop.f32.mrf.mxu0
      %v2050 = vadd.f32 0.0, %v2049
      %v2051 = vpop.f32.mrf.mxu0
      %2052 = vmatprep.mubr.bf16.mxu0 0
      %2053 = vmatmul.mubr.bf16.gmra.mxu0 %v1939
      %v2054 = vpop.f32.mrf.mxu0
      %v2055 = vadd.f32 0.0, %v2054
      %v2056 = vpop.f32.mrf.mxu0
      %v2057 = vpop.f32.mrf.mxu0
      %v2058 = vadd.f32 0.0, %v2057
      %v2059 = vpop.f32.mrf.mxu0
      %2060 = vmatprep.mubr.bf16.mxu0 0
      %2061 = vmatmul.mubr.bf16.gmra.mxu0 %v1942
      %v2062 = vpop.f32.mrf.mxu0
      %v2063 = vadd.f32 0.0, %v2062
      %v2064 = vpop.f32.mrf.mxu0
      %v2065 = vpop.f32.mrf.mxu0
      %v2066 = vpop.f32.mrf.mxu0
      %2067 = vdwg.mxu0
      %v2068 = vadd.f32 %v1843, %v2031
      %v2069 = vadd.f32 %v1844, %v2034
      %v2070 = vadd.f32 %v1845, %v2039
      %v2071 = vadd.f32 %v1846, %v2042
      %v2072 = vadd.f32 %v1847, %v2047
      %v2073 = vadd.f32 %v1848, %v2050
      %v2074 = vadd.f32 %v1849, %v2055
      %v2075 = vadd.f32 %v1850, %v2058
      %v2076 = vadd.f32 %v1851, %v2063
      %v2077 = vld [vmem:[%s440 + $0x4] sm:$0xe]
      %s2078 = scalar_lea.vmem %s1, 512
      %v2079 = vld [vmem:[%s2078] sm:$0xf]
      %v2080 = vld [vmem:[%s2078 + $0x4] sm:$0xf]
      %v2081 = vld [vmem:[%s2078 + $0x8] sm:$0xf]
      %v2082 = vld [vmem:[%s2078 + $0xc] sm:$0xf]
      %v2083 = vld [vmem:[%s2078 + $0x10] sm:$0xf]
      %v2084 = vld [vmem:[%s2078 + $0x14] sm:$0xf]
      %v2085 = vld [vmem:[%s2078 + $0x18] sm:$0xf]
      %v2086 = vld [vmem:[%s2078 + $0x1c] sm:$0xf]
      %v2087 = vld [vmem:[%s2078 + $0x20] sm:$0xf]
      %v2088 = vld [vmem:[%s2078 + $0x24] sm:$0xf]
      %v2089 = vld [vmem:[%s2078 + $0x28] sm:$0xf]
      %v2090 = vld [vmem:[%s2078 + $0x2c] sm:$0xf]
      %v2091 = vld [vmem:[%s2078 + $0x30] sm:$0xf]
      %v2092 = vld [vmem:[%s2078 + $0x34] sm:$0xf]
      %v2093 = vld [vmem:[%s2078 + $0x38] sm:$0xf]
      %v2094 = vld [vmem:[%s2078 + $0x3c] sm:$0xf]
      %v2096 = vunpack.c.l.b16 %v2077
      %v2097 = vpack.c.b16 %v1665, %v2096
      %vm2098 = vcmask 1046528
      %v2099 = vrot.slane %v2097, 1
      %v2100 = vrot.slane %v1675, 1
      %v2101 = vsel %vm2098, %v2099, %v2100
      %v2102 = vrot.slane %v1676, 1
      %v2103 = vsel %vm2098, %v2100, %v2102
      %v2104 = vrot.slane %v1677, 1
      %v2105 = vsel %vm2098, %v2102, %v2104
      %v2106 = vrot.slane %v1678, 1
      %v2107 = vsel %vm2098, %v2104, %v2106
      %v2129 = vunpack.c.l.b16 %v2079
      %v2130 = vunpack.c.l.b16 %v2080
      %v2131 = vunpack.c.l.b16 %v2081
      %v2132 = vunpack.c.l.b16 %v2082
      %v2133 = vunpack.c.l.b16 %v2083
      %v2134 = vunpack.c.l.b16 %v2084
      %v2135 = vunpack.c.l.b16 %v2085
      %v2136 = vunpack.c.l.b16 %v2086
      %v2137 = vunpack.c.l.b16 %v2087
      %v2138 = vunpack.c.l.b16 %v2088
      %v2139 = vunpack.c.l.b16 %v2089
      %v2140 = vunpack.c.l.b16 %v2090
      %v2141 = vunpack.c.l.b16 %v2091
      %v2142 = vunpack.c.l.b16 %v2092
      %v2143 = vunpack.c.l.b16 %v2093
      %v2144 = vunpack.c.l.b16 %v2094
      %v2145 = vpack.c.b16 %v2130, %v2129
      %v2146 = vpack.c.b16 %v2132, %v2131
      %v2147 = vpack.c.b16 %v2134, %v2133
      %v2148 = vpack.c.b16 %v2136, %v2135
      %v2149 = vpack.c.b16 %v2138, %v2137
      %v2150 = vpack.c.b16 %v2140, %v2139
      %v2151 = vpack.c.b16 %v2142, %v2141
      %v2152 = vpack.c.b16 %v2144, %v2143
      %2161 = vmatprep.subr.bf16.mxu0 0
      %2162 = vmatpush1.bf16.msra.mxu0 %v2152
      %2163 = vmatprep.subr.bf16.mxu0 0
      %2164 = vmatpush1.bf16.msra.mxu0 %v2151
      %2165 = vmatprep.subr.bf16.mxu0 0
      %2166 = vmatpush1.bf16.msra.mxu0 %v2150
      %2167 = vmatprep.subr.bf16.mxu0 0
      %2168 = vmatpush1.bf16.msra.mxu0 %v2149
      %2169 = vmatprep.subr.bf16.mxu0 0
      %2170 = vmatpush1.bf16.msra.mxu0 %v2148
      %2171 = vmatprep.subr.bf16.mxu0 0
      %2172 = vmatpush1.bf16.msra.mxu0 %v2147
      %2173 = vmatprep.subr.bf16.mxu0 0
      %2174 = vmatpush1.bf16.msra.mxu0 %v2146
      %2175 = vmatprep.subr.bf16.mxu0 0
      %2176 = vmatpush1.bf16.msra.mxu0 %v2145
      %2177 = vmatprep.subr.bf16.mxu0 0
      %2178 = vmatpush2.bf16.msra.mxu0 0
      %2179 = vmatprep.subr.bf16.mxu0 0
      %2180 = vmatpush2.bf16.msra.mxu0 0
      %2181 = vmatprep.subr.bf16.mxu0 0
      %2182 = vmatpush2.bf16.msra.mxu0 0
      %2183 = vmatprep.subr.bf16.mxu0 0
      %2184 = vmatpush2.bf16.msra.mxu0 0
      %2185 = vmatprep.subr.bf16.mxu0 0
      %2186 = vmatpush2.bf16.msra.mxu0 0
      %2187 = vmatprep.subr.bf16.mxu0 0
      %2188 = vmatpush2.bf16.msra.mxu0 0
      %2189 = vmatprep.subr.bf16.mxu0 0
      %2190 = vmatpush2.bf16.msra.mxu0 0
      %2191 = vmatprep.subr.bf16.mxu0 0
      %2192 = vmatpush2.bf16.msra.mxu0 0
      %2193 = vmatprep.mubr.bf16.mxu0 0
      %2194 = vmatmul.mubr.bf16.gmra.mxu0 %v2101
      %v2195 = vpop.f32.mrf.mxu0
      %v2196 = vadd.f32 0.0, %v2195
      %v2197 = vpop.f32.mrf.mxu0
      %v2198 = vpop.f32.mrf.mxu0
      %v2199 = vadd.f32 0.0, %v2198
      %v2200 = vpop.f32.mrf.mxu0
      %2201 = vmatprep.mubr.bf16.mxu0 0
      %2202 = vmatmul.mubr.bf16.gmra.mxu0 %v2103
      %v2203 = vpop.f32.mrf.mxu0
      %v2204 = vadd.f32 0.0, %v2203
      %v2205 = vpop.f32.mrf.mxu0
      %v2206 = vpop.f32.mrf.mxu0
      %v2207 = vadd.f32 0.0, %v2206
      %v2208 = vpop.f32.mrf.mxu0
      %2209 = vmatprep.mubr.bf16.mxu0 0
      %2210 = vmatmul.mubr.bf16.gmra.mxu0 %v2105
      %v2211 = vpop.f32.mrf.mxu0
      %v2212 = vadd.f32 0.0, %v2211
      %v2213 = vpop.f32.mrf.mxu0
      %v2214 = vpop.f32.mrf.mxu0
      %v2215 = vadd.f32 0.0, %v2214
      %v2216 = vpop.f32.mrf.mxu0
      %2217 = vmatprep.mubr.bf16.mxu0 0
      %2218 = vmatmul.mubr.bf16.gmra.mxu0 %v2107
      %v2219 = vpop.f32.mrf.mxu0
      %v2220 = vadd.f32 0.0, %v2219
      %v2221 = vpop.f32.mrf.mxu0
      %v2222 = vpop.f32.mrf.mxu0
      %v2223 = vadd.f32 0.0, %v2222
      %v2224 = vpop.f32.mrf.mxu0
      %2225 = vmatprep.mubr.bf16.mxu0 0
      %2226 = vmatmul.mubr.bf16.gmra.mxu0 %v2106
      %v2227 = vpop.f32.mrf.mxu0
      %v2228 = vadd.f32 0.0, %v2227
      %v2229 = vpop.f32.mrf.mxu0
      %v2230 = vpop.f32.mrf.mxu0
      %v2231 = vpop.f32.mrf.mxu0
      %2232 = vdwg.mxu0
      %v2233 = vadd.f32 %v2068, %v2196
      %v2234 = vadd.f32 %v2069, %v2199
      %v2235 = vadd.f32 %v2070, %v2204
      %v2236 = vadd.f32 %v2071, %v2207
      %v2237 = vadd.f32 %v2072, %v2212
      %v2238 = vadd.f32 %v2073, %v2215
      %v2239 = vadd.f32 %v2074, %v2220
      %v2240 = vadd.f32 %v2075, %v2223
      %v2241 = vadd.f32 %v2076, %v2228
      %v2242 = vld [vmem:[%s2] sm:$0x1]
      %v2244 = vlaneseq
      %v2245 = vshrl.u32 %v2244, 7
      %v2246 = vsub.s32 0, %v2245
      %v2247 = vrot.slane %v2242, %v2246
      %v2249 = vmul.f32 %v2233, %v2247
      %v2250 = vmul.f32 %v2234, %v2247
      %v2251 = vmul.f32 %v2235, %v2247
      %v2252 = vmul.f32 %v2236, %v2247
      %v2253 = vmul.f32 %v2237, %v2247
      %v2254 = vmul.f32 %v2238, %v2247
      %v2255 = vmul.f32 %v2239, %v2247
      %v2256 = vmul.f32 %v2240, %v2247
      %v2257 = vmul.f32 %v2241, %v2247
      %v2258 = vld [vmem:[%s3] sm:$0x1]
      %v2260 = vlaneseq
      %v2261 = vshrl.u32 %v2260, 7
      %v2262 = vsub.s32 0, %v2261
      %v2263 = vrot.slane %v2258, %v2262
      %v2265 = vadd.f32 %v2249, %v2263
      %v2266 = vadd.f32 %v2250, %v2263
      %v2267 = vadd.f32 %v2251, %v2263
      %v2268 = vadd.f32 %v2252, %v2263
      %v2269 = vadd.f32 %v2253, %v2263
      %v2270 = vadd.f32 %v2254, %v2263
      %v2271 = vadd.f32 %v2255, %v2263
      %v2272 = vadd.f32 %v2256, %v2263
      %v2273 = vadd.f32 %v2257, %v2263
      %v2274 = vmax.f32 %v2265, 0.0
      %v2275 = vmax.f32 %v2266, 0.0
      %v2276 = vmax.f32 %v2267, 0.0
      %v2277 = vmax.f32 %v2268, 0.0
      %v2278 = vmax.f32 %v2269, 0.0
      %v2279 = vmax.f32 %v2270, 0.0
      %v2280 = vmax.f32 %v2271, 0.0
      %v2281 = vmax.f32 %v2272, 0.0
      %v2282 = vmax.f32 %v2273, 0.0
      %v2283 = vpack.c.bf16 %v2275, %v2274
      %v2284 = vpack.c.bf16 %v2277, %v2276
      %v2285 = vpack.c.bf16 %v2279, %v2278
      %v2286 = vpack.c.bf16 %v2281, %v2280
      %v2287 = vpack.c.bf16 %v2282, %v2282
      %v2288 = vld [vmem:[%s4] sm:$0xf]
      %v2289 = vld [vmem:[%s4 + $0x4] sm:$0xf]
      %v2290 = vld [vmem:[%s4 + $0x8] sm:$0xf]
      %v2291 = vld [vmem:[%s4 + $0xc] sm:$0xf]
      %v2292 = vld [vmem:[%s4 + $0x10] sm:$0xf]
      %v2293 = vld [vmem:[%s4 + $0x14] sm:$0xf]
      %v2294 = vld [vmem:[%s4 + $0x18] sm:$0xf]
      %v2295 = vld [vmem:[%s4 + $0x1c] sm:$0xf]
      %v2296 = vld [vmem:[%s4 + $0x20] sm:$0xf]
      %v2297 = vld [vmem:[%s4 + $0x24] sm:$0xf]
      %v2298 = vld [vmem:[%s4 + $0x28] sm:$0xf]
      %v2299 = vld [vmem:[%s4 + $0x2c] sm:$0xf]
      %v2300 = vld [vmem:[%s4 + $0x30] sm:$0xf]
      %v2301 = vld [vmem:[%s4 + $0x34] sm:$0xf]
      %v2302 = vld [vmem:[%s4 + $0x38] sm:$0xf]
      %v2303 = vld [vmem:[%s4 + $0x3c] sm:$0xf]
      %v2320 = vunpack.c.l.b16 %v2288
      %v2321 = vunpack.c.l.b16 %v2289
      %v2322 = vunpack.c.l.b16 %v2290
      %v2323 = vunpack.c.l.b16 %v2291
      %v2324 = vunpack.c.l.b16 %v2292
      %v2325 = vunpack.c.l.b16 %v2293
      %v2326 = vunpack.c.l.b16 %v2294
      %v2327 = vunpack.c.l.b16 %v2295
      %v2328 = vunpack.c.l.b16 %v2296
      %v2329 = vunpack.c.l.b16 %v2297
      %v2330 = vunpack.c.l.b16 %v2298
      %v2331 = vunpack.c.l.b16 %v2299
      %v2332 = vunpack.c.l.b16 %v2300
      %v2333 = vunpack.c.l.b16 %v2301
      %v2334 = vunpack.c.l.b16 %v2302
      %v2335 = vunpack.c.l.b16 %v2303
      %v2336 = vpack.c.b16 %v2321, %v2320
      %v2337 = vpack.c.b16 %v2323, %v2322
      %v2338 = vpack.c.b16 %v2325, %v2324
      %v2339 = vpack.c.b16 %v2327, %v2326
      %v2340 = vpack.c.b16 %v2329, %v2328
      %v2341 = vpack.c.b16 %v2331, %v2330
      %v2342 = vpack.c.b16 %v2333, %v2332
      %v2343 = vpack.c.b16 %v2335, %v2334
      %2352 = vmatprep.subr.bf16.mxu0 0
      %2353 = vmatpush1.bf16.msra.mxu0 %v2343
      %2354 = vmatprep.subr.bf16.mxu0 0
      %2355 = vmatpush1.bf16.msra.mxu0 %v2342
      %2356 = vmatprep.subr.bf16.mxu0 0
      %2357 = vmatpush1.bf16.msra.mxu0 %v2341
      %2358 = vmatprep.subr.bf16.mxu0 0
      %2359 = vmatpush1.bf16.msra.mxu0 %v2340
      %2360 = vmatprep.subr.bf16.mxu0 0
      %2361 = vmatpush1.bf16.msra.mxu0 %v2339
      %2362 = vmatprep.subr.bf16.mxu0 0
      %2363 = vmatpush1.bf16.msra.mxu0 %v2338
      %2364 = vmatprep.subr.bf16.mxu0 0
      %2365 = vmatpush1.bf16.msra.mxu0 %v2337
      %2366 = vmatprep.subr.bf16.mxu0 0
      %2367 = vmatpush1.bf16.msra.mxu0 %v2336
      %2368 = vmatprep.subr.bf16.mxu0 0
      %2369 = vmatpush2.bf16.msra.mxu0 0
      %2370 = vmatprep.subr.bf16.mxu0 0
      %2371 = vmatpush2.bf16.msra.mxu0 0
      %2372 = vmatprep.subr.bf16.mxu0 0
      %2373 = vmatpush2.bf16.msra.mxu0 0
      %2374 = vmatprep.subr.bf16.mxu0 0
      %2375 = vmatpush2.bf16.msra.mxu0 0
      %2376 = vmatprep.subr.bf16.mxu0 0
      %2377 = vmatpush2.bf16.msra.mxu0 0
      %2378 = vmatprep.subr.bf16.mxu0 0
      %2379 = vmatpush2.bf16.msra.mxu0 0
      %2380 = vmatprep.subr.bf16.mxu0 0
      %2381 = vmatpush2.bf16.msra.mxu0 0
      %2382 = vmatprep.subr.bf16.mxu0 0
      %2383 = vmatpush2.bf16.msra.mxu0 0
      %2384 = vmatprep.mubr.bf16.mxu0 0
      %2385 = vmatmul.mubr.bf16.gmra.mxu0 %v2283
      %v2386 = vpop.f32.mrf.mxu0
      %v2387 = vadd.f32 0.0, %v2386
      %v2388 = vpop.f32.mrf.mxu0
      %v2389 = vpop.f32.mrf.mxu0
      %v2390 = vadd.f32 0.0, %v2389
      %v2391 = vpop.f32.mrf.mxu0
      %2392 = vmatprep.mubr.bf16.mxu0 0
      %2393 = vmatmul.mubr.bf16.gmra.mxu0 %v2284
      %v2394 = vpop.f32.mrf.mxu0
      %v2395 = vadd.f32 0.0, %v2394
      %v2396 = vpop.f32.mrf.mxu0
      %v2397 = vpop.f32.mrf.mxu0
      %v2398 = vadd.f32 0.0, %v2397
      %v2399 = vpop.f32.mrf.mxu0
      %2400 = vmatprep.mubr.bf16.mxu0 0
      %2401 = vmatmul.mubr.bf16.gmra.mxu0 %v2285
      %v2402 = vpop.f32.mrf.mxu0
      %v2403 = vadd.f32 0.0, %v2402
      %v2404 = vpop.f32.mrf.mxu0
      %v2405 = vpop.f32.mrf.mxu0
      %v2406 = vadd.f32 0.0, %v2405
      %v2407 = vpop.f32.mrf.mxu0
      %2408 = vmatprep.mubr.bf16.mxu0 0
      %2409 = vmatmul.mubr.bf16.gmra.mxu0 %v2286
      %v2410 = vpop.f32.mrf.mxu0
      %v2411 = vadd.f32 0.0, %v2410
      %v2412 = vpop.f32.mrf.mxu0
      %v2413 = vpop.f32.mrf.mxu0
      %v2414 = vadd.f32 0.0, %v2413
      %v2415 = vpop.f32.mrf.mxu0
      %2416 = vmatprep.mubr.bf16.mxu0 0
      %2417 = vmatmul.mubr.bf16.gmra.mxu0 %v2287
      %v2418 = vpop.f32.mrf.mxu0
      %v2419 = vadd.f32 0.0, %v2418
      %v2420 = vpop.f32.mrf.mxu0
      %v2421 = vpop.f32.mrf.mxu0
      %v2422 = vpop.f32.mrf.mxu0
      %2423 = vdwg.mxu0
      %v2424 = vld [vmem:[%s5] sm:$0x1]
      %v2426 = vlaneseq
      %v2427 = vshrl.u32 %v2426, 7
      %v2428 = vsub.s32 0, %v2427
      %v2429 = vrot.slane %v2424, %v2428
      %v2431 = vmul.f32 %v2387, %v2429
      %v2432 = vmul.f32 %v2390, %v2429
      %v2433 = vmul.f32 %v2395, %v2429
      %v2434 = vmul.f32 %v2398, %v2429
      %v2435 = vmul.f32 %v2403, %v2429
      %v2436 = vmul.f32 %v2406, %v2429
      %v2437 = vmul.f32 %v2411, %v2429
      %v2438 = vmul.f32 %v2414, %v2429
      %v2439 = vmul.f32 %v2419, %v2429
      %v2440 = vld [vmem:[%s6] sm:$0x1]
      %v2442 = vlaneseq
      %v2443 = vshrl.u32 %v2442, 7
      %v2444 = vsub.s32 0, %v2443
      %v2445 = vrot.slane %v2440, %v2444
      %v2447 = vadd.f32 %v2431, %v2445
      %v2448 = vadd.f32 %v2432, %v2445
      %v2449 = vadd.f32 %v2433, %v2445
      %v2450 = vadd.f32 %v2434, %v2445
      %v2451 = vadd.f32 %v2435, %v2445
      %v2452 = vadd.f32 %v2436, %v2445
      %v2453 = vadd.f32 %v2437, %v2445
      %v2454 = vadd.f32 %v2438, %v2445
      %v2455 = vadd.f32 %v2439, %v2445
      %v2456 = vld [vmem:[%s450] sm:$0xf]
      %v2457 = vld [vmem:[%s450 + $0x4] sm:$0xf]
      %v2458 = vld [vmem:[%s450 + $0x8] sm:$0xf]
      %v2459 = vld [vmem:[%s450 + $0xc] sm:$0xf]
      %v2460 = vld [vmem:[%s450 + $0x10] sm:$0xf]
      %v2461 = vld [vmem:[%s450 + $0x14] sm:$0xf]
      %v2462 = vld [vmem:[%s450 + $0x18] sm:$0xf]
      %v2463 = vld [vmem:[%s450 + $0x1c] sm:$0xf]
      %v2464 = vld [vmem:[%s450 + $0x20] sm:$0xf]
      %v2465 = vld [vmem:[%s8] sm:$0xf]
      %v2466 = vld [vmem:[%s8 + $0x4] sm:$0xf]
      %v2467 = vld [vmem:[%s8 + $0x8] sm:$0xf]
      %v2468 = vld [vmem:[%s8 + $0xc] sm:$0xf]
      %v2469 = vld [vmem:[%s8 + $0x10] sm:$0xf]
      %v2470 = vld [vmem:[%s8 + $0x14] sm:$0xf]
      %v2471 = vld [vmem:[%s8 + $0x18] sm:$0xf]
      %v2472 = vld [vmem:[%s8 + $0x1c] sm:$0xf]
      %v2473 = vld [vmem:[%s8 + $0x20] sm:$0xf]
      %v2474 = vld [vmem:[%s8 + $0x24] sm:$0xf]
      %v2475 = vld [vmem:[%s8 + $0x28] sm:$0xf]
      %v2476 = vld [vmem:[%s8 + $0x2c] sm:$0xf]
      %v2477 = vld [vmem:[%s8 + $0x30] sm:$0xf]
      %v2478 = vld [vmem:[%s8 + $0x34] sm:$0xf]
      %v2479 = vld [vmem:[%s8 + $0x38] sm:$0xf]
      %v2480 = vld [vmem:[%s8 + $0x3c] sm:$0xf]
      %v2490 = vunpack.c.l.b16 %v2456
      %v2491 = vunpack.c.l.b16 %v2457
      %v2492 = vunpack.c.l.b16 %v2458
      %v2493 = vunpack.c.l.b16 %v2459
      %v2494 = vunpack.c.l.b16 %v2460
      %v2495 = vunpack.c.l.b16 %v2461
      %v2496 = vunpack.c.l.b16 %v2462
      %v2497 = vunpack.c.l.b16 %v2463
      %v2498 = vunpack.c.l.b16 %v2464
      %v2499 = vpack.c.b16 %v2491, %v2490
      %v2500 = vpack.c.b16 %v2493, %v2492
      %v2501 = vpack.c.b16 %v2495, %v2494
      %v2502 = vpack.c.b16 %v2497, %v2496
      %v2503 = vpack.c.b16 %v2498, %v2498
      %v2525 = vunpack.c.l.b16 %v2465
      %v2526 = vunpack.c.l.b16 %v2466
      %v2527 = vunpack.c.l.b16 %v2467
      %v2528 = vunpack.c.l.b16 %v2468
      %v2529 = vunpack.c.l.b16 %v2469
      %v2530 = vunpack.c.l.b16 %v2470
      %v2531 = vunpack.c.l.b16 %v2471
      %v2532 = vunpack.c.l.b16 %v2472
      %v2533 = vunpack.c.l.b16 %v2473
      %v2534 = vunpack.c.l.b16 %v2474
      %v2535 = vunpack.c.l.b16 %v2475
      %v2536 = vunpack.c.l.b16 %v2476
      %v2537 = vunpack.c.l.b16 %v2477
      %v2538 = vunpack.c.l.b16 %v2478
      %v2539 = vunpack.c.l.b16 %v2479
      %v2540 = vunpack.c.l.b16 %v2480
      %v2541 = vpack.c.b16 %v2526, %v2525
      %v2542 = vpack.c.b16 %v2528, %v2527
      %v2543 = vpack.c.b16 %v2530, %v2529
      %v2544 = vpack.c.b16 %v2532, %v2531
      %v2545 = vpack.c.b16 %v2534, %v2533
      %v2546 = vpack.c.b16 %v2536, %v2535
      %v2547 = vpack.c.b16 %v2538, %v2537
      %v2548 = vpack.c.b16 %v2540, %v2539
      %2557 = vmatprep.subr.bf16.mxu0 0
      %2558 = vmatpush1.bf16.msra.mxu0 %v2548
      %2559 = vmatprep.subr.bf16.mxu0 0
      %2560 = vmatpush1.bf16.msra.mxu0 %v2547
      %2561 = vmatprep.subr.bf16.mxu0 0
      %2562 = vmatpush1.bf16.msra.mxu0 %v2546
      %2563 = vmatprep.subr.bf16.mxu0 0
      %2564 = vmatpush1.bf16.msra.mxu0 %v2545
      %2565 = vmatprep.subr.bf16.mxu0 0
      %2566 = vmatpush1.bf16.msra.mxu0 %v2544
      %2567 = vmatprep.subr.bf16.mxu0 0
      %2568 = vmatpush1.bf16.msra.mxu0 %v2543
      %2569 = vmatprep.subr.bf16.mxu0 0
      %2570 = vmatpush1.bf16.msra.mxu0 %v2542
      %2571 = vmatprep.subr.bf16.mxu0 0
      %2572 = vmatpush1.bf16.msra.mxu0 %v2541
      %2573 = vmatprep.subr.bf16.mxu0 0
      %2574 = vmatpush2.bf16.msra.mxu0 0
      %2575 = vmatprep.subr.bf16.mxu0 0
      %2576 = vmatpush2.bf16.msra.mxu0 0
      %2577 = vmatprep.subr.bf16.mxu0 0
      %2578 = vmatpush2.bf16.msra.mxu0 0
      %2579 = vmatprep.subr.bf16.mxu0 0
      %2580 = vmatpush2.bf16.msra.mxu0 0
      %2581 = vmatprep.subr.bf16.mxu0 0
      %2582 = vmatpush2.bf16.msra.mxu0 0
      %2583 = vmatprep.subr.bf16.mxu0 0
      %2584 = vmatpush2.bf16.msra.mxu0 0
      %2585 = vmatprep.subr.bf16.mxu0 0
      %2586 = vmatpush2.bf16.msra.mxu0 0
      %2587 = vmatprep.subr.bf16.mxu0 0
      %2588 = vmatpush2.bf16.msra.mxu0 0
      %2589 = vmatprep.mubr.bf16.mxu0 0
      %2590 = vmatmul.mubr.bf16.gmra.mxu0 %v2499
      %v2591 = vpop.f32.mrf.mxu0
      %v2592 = vadd.f32 0.0, %v2591
      %v2593 = vpop.f32.mrf.mxu0
      %v2594 = vpop.f32.mrf.mxu0
      %v2595 = vadd.f32 0.0, %v2594
      %v2596 = vpop.f32.mrf.mxu0
      %2597 = vmatprep.mubr.bf16.mxu0 0
      %2598 = vmatmul.mubr.bf16.gmra.mxu0 %v2500
      %v2599 = vpop.f32.mrf.mxu0
      %v2600 = vadd.f32 0.0, %v2599
      %v2601 = vpop.f32.mrf.mxu0
      %v2602 = vpop.f32.mrf.mxu0
      %v2603 = vadd.f32 0.0, %v2602
      %v2604 = vpop.f32.mrf.mxu0
      %2605 = vmatprep.mubr.bf16.mxu0 0
      %2606 = vmatmul.mubr.bf16.gmra.mxu0 %v2501
      %v2607 = vpop.f32.mrf.mxu0
      %v2608 = vadd.f32 0.0, %v2607
      %v2609 = vpop.f32.mrf.mxu0
      %v2610 = vpop.f32.mrf.mxu0
      %v2611 = vadd.f32 0.0, %v2610
      %v2612 = vpop.f32.mrf.mxu0
      %2613 = vmatprep.mubr.bf16.mxu0 0
      %2614 = vmatmul.mubr.bf16.gmra.mxu0 %v2502
      %v2615 = vpop.f32.mrf.mxu0
      %v2616 = vadd.f32 0.0, %v2615
      %v2617 = vpop.f32.mrf.mxu0
      %v2618 = vpop.f32.mrf.mxu0
      %v2619 = vadd.f32 0.0, %v2618
      %v2620 = vpop.f32.mrf.mxu0
      %2621 = vmatprep.mubr.bf16.mxu0 0
      %2622 = vmatmul.mubr.bf16.gmra.mxu0 %v2503
      %v2623 = vpop.f32.mrf.mxu0
      %v2624 = vadd.f32 0.0, %v2623
      %v2625 = vpop.f32.mrf.mxu0
      %v2626 = vpop.f32.mrf.mxu0
      %v2627 = vpop.f32.mrf.mxu0
      %2628 = vdwg.mxu0
      %v2629 = vld [vmem:[%s9] sm:$0x1]
      %v2631 = vlaneseq
      %v2632 = vshrl.u32 %v2631, 7
      %v2633 = vsub.s32 0, %v2632
      %v2634 = vrot.slane %v2629, %v2633
      %v2636 = vmul.f32 %v2592, %v2634
      %v2637 = vmul.f32 %v2595, %v2634
      %v2638 = vmul.f32 %v2600, %v2634
      %v2639 = vmul.f32 %v2603, %v2634
      %v2640 = vmul.f32 %v2608, %v2634
      %v2641 = vmul.f32 %v2611, %v2634
      %v2642 = vmul.f32 %v2616, %v2634
      %v2643 = vmul.f32 %v2619, %v2634
      %v2644 = vmul.f32 %v2624, %v2634
      %v2645 = vld [vmem:[%s10] sm:$0x1]
      %v2647 = vlaneseq
      %v2648 = vshrl.u32 %v2647, 7
      %v2649 = vsub.s32 0, %v2648
      %v2650 = vrot.slane %v2645, %v2649
      %v2652 = vadd.f32 %v2636, %v2650
      %v2653 = vadd.f32 %v2637, %v2650
      %v2654 = vadd.f32 %v2638, %v2650
      %v2655 = vadd.f32 %v2639, %v2650
      %v2656 = vadd.f32 %v2640, %v2650
      %v2657 = vadd.f32 %v2641, %v2650
      %v2658 = vadd.f32 %v2642, %v2650
      %v2659 = vadd.f32 %v2643, %v2650
      %v2660 = vadd.f32 %v2644, %v2650
      %v2661 = vadd.f32 %v2447, %v2652
      %v2662 = vadd.f32 %v2448, %v2653
      %v2663 = vadd.f32 %v2449, %v2654
      %v2664 = vadd.f32 %v2450, %v2655
      %v2665 = vadd.f32 %v2451, %v2656
      %v2666 = vadd.f32 %v2452, %v2657
      %v2667 = vadd.f32 %v2453, %v2658
      %v2668 = vadd.f32 %v2454, %v2659
      %v2669 = vadd.f32 %v2455, %v2660
      %v2670 = vmax.f32 %v2661, 0.0
      %v2671 = vmax.f32 %v2662, 0.0
      %v2672 = vmax.f32 %v2663, 0.0
      %v2673 = vmax.f32 %v2664, 0.0
      %v2674 = vmax.f32 %v2665, 0.0
      %v2675 = vmax.f32 %v2666, 0.0
      %v2676 = vmax.f32 %v2667, 0.0
      %v2677 = vmax.f32 %v2668, 0.0
      %v2678 = vmax.f32 %v2669, 0.0
      %v2679 = vpack.c.bf16 %v2671, %v2670
      %v2680 = vpack.c.bf16 %v2673, %v2672
      %v2681 = vpack.c.bf16 %v2675, %v2674
      %v2682 = vpack.c.bf16 %v2677, %v2676
      %v2683 = vpack.c.bf16 %v2678, %v2678
      %v2689 = vunpack.c.l.b16 %v2679
      %v2690 = vunpack.c.h.b16 %v2679
      %v2691 = vunpack.c.l.b16 %v2680
      %v2692 = vunpack.c.h.b16 %v2680
      %v2693 = vunpack.c.l.b16 %v2681
      %v2694 = vunpack.c.h.b16 %v2681
      %v2695 = vunpack.c.l.b16 %v2682
      %v2696 = vunpack.c.h.b16 %v2682
      %v2697 = vunpack.c.l.b16 %v2683
      %v2698 = vpack.c.b16 %v2689, %v2689
      %v2699 = vpack.c.b16 %v2690, %v2690
      %v2700 = vpack.c.b16 %v2691, %v2691
      %v2701 = vpack.c.b16 %v2692, %v2692
      %v2702 = vpack.c.b16 %v2693, %v2693
      %v2703 = vpack.c.b16 %v2694, %v2694
      %v2704 = vpack.c.b16 %v2695, %v2695
      %v2705 = vpack.c.b16 %v2696, %v2696
      %v2706 = vpack.c.b16 %v2697, %v2697
      %2716 = vst [vmem:[%s460] sm:$0xf] %v2698
      %2717 = vst [vmem:[%s460 + $0x4] sm:$0xf] %v2699
      %2718 = vst [vmem:[%s460 + $0x8] sm:$0xf] %v2700
      %2719 = vst [vmem:[%s460 + $0xc] sm:$0xf] %v2701
      %2720 = vst [vmem:[%s460 + $0x10] sm:$0xf] %v2702
      %2721 = vst [vmem:[%s460 + $0x14] sm:$0xf] %v2703
      %2722 = vst [vmem:[%s460 + $0x18] sm:$0xf] %v2704
      %2723 = vst [vmem:[%s460 + $0x1c] sm:$0xf] %v2705
      %2724 = vst [vmem:[%s460 + $0x20] sm:$0xf] %v2706
      %s2725 = smul.u32 9, %s27
      %p2726 = scmp.lt.s32.totalorder %s26, 1
      %s2727 = scalar_select %p2726, %s26, 1
      %p2728 = scmp.lt.s32.totalorder %s2725, 8
      %s2729 = scalar_select %p2728, %s2725, 8
      %s2730 = smul.addr %s2727, 9
      %s2731 = sadd.s32 %s2729, %s2730
      %s2732 = smul.addr %s2731, 4
      %s2733 = scalar_lea.vmem %s11, %s2732
      // Predicated region
      $region65: #{bottleneck_forward.3} parent=63 // pred_check
        %p2734 = pneg %p299
      $region66: #{bottleneck_forward.3} parent=63 // pred_check_branch
        %2736 = sbr.rel (%p2734) target = $region68
      $region67: #{bottleneck_forward.3} parent=63 // pred_region
        %s2737 = smul.u32 9, %s27
      $region68: #{bottleneck_forward.3} parent=63 // pred_fallthru
        _
    $region64: #{bottleneck_forward.3} parent=5 // pred_fallthru
      _
    %p2738 = scmp.le.s32.totalorder 2, %s17
    // Predicated region
    $region69: #{bottleneck_forward.3} parent=5 // pred_check
      %p2739 = pneg %p2738
    $region70: #{bottleneck_forward.3} parent=5 // pred_check_branch
      %2741 = sbr.rel (%p2739) target = $region72
    $region71: #{bottleneck_forward.3} parent=5 // pred_region
      %s2742 = ssub.s32 %s17, 2
      // Predicated region
      $region73: #{bottleneck_forward.3} parent=71 // pred_check
        %p2743 = pneg %p305
      $region74: #{bottleneck_forward.3} parent=71 // pred_check_branch
        %2745 = sbr.rel (%p2743) target = $region76
      $region75: #{bottleneck_forward.3} parent=71 // pred_region
        %s2746 = smul.u32 9, %s29
        %p2747 = scmp.lt.s32.totalorder %s28, 1
        %s2748 = scalar_select %p2747, %s28, 1
        %p2749 = scmp.lt.s32.totalorder %s2746, 8
        %s2750 = scalar_select %p2749, %s2746, 8
        %s2751 = smul.addr %s2748, 9
        %s2752 = sadd.s32 %s2750, %s2751
        %s2753 = smul.addr %s2752, 4
        %s2754 = scalar_lea.vmem %s11, %s2753
      $region76: #{bottleneck_forward.3} parent=71 // pred_fallthru
        _
    $region72: #{bottleneck_forward.3} parent=5 // pred_fallthru
      _
  $region6: #{bottleneck_forward.3} parent=0 // loop_footer
    %s21 = sadd.s32 1, %s17
  $region7: #{bottleneck_forward.3} parent=0 // loop_footer_branch
    %16 = sbr.rel target = $region3
  $region8: #{bottleneck_forward.3} parent=0 // loop_exit
    _

</llo_original>
